<compile_context>
chip_gen: v6e
topology: v6e:2x2x1
jax: 0.10.0
libtpu: 0.0.40
codegen_flags: <defaults>
</compile_context>

<pallas_src>
import functools

import jax
import jax.numpy as jnp
from jax import lax
from jax.experimental import pallas as pl
from jax.experimental.pallas import tpu as pltpu


def _vf_g_prime_kernel(z_ref, win_ref, bin_ref, sup_ref, wpf_ref, e_ref,
                       wout_ref, bout_ref, o_ref, xg_scr, slab_scr, *,
                       num_nodes, batch_block, cheb_k, embed_dim):
    """One block of `batch_block` batch elements (R = batch_block*N rows).

    z_ref   : (R, Hc)               state rows, batch-major (b, n)
    win_ref : (Hc, Hhh)             linear_in weight (x @ W layout)
    bin_ref : (1, Hhh)              linear_in bias (f32)
    sup_ref : ((K-1)*N, N)          stacked Chebyshev supports (identity dropped)
    wpf_ref : (D*K*Hhh + D, Hhh)    weights_pool flattened + bias_pool appended
    e_ref   : (N, D)                node embeddings (f32)
    wout_ref: (Hhh, Hc*Cin)         linear_out weight
    bout_ref: (1, Hc*Cin)           linear_out bias (f32)
    o_ref   : (R, Hc*Cin)           tanh output, reshaped (B, N, Hc, Cin) outside
    xg_scr  : (R, K*Hhh)  f32       Chebyshev features scratch
    slab_scr: (R, D*K*Hhh + D)      e-scaled slab scratch (compute dtype)
    """
    N, D = num_nodes, embed_dim
    Hhh = win_ref.shape[1]
    KHhh = cheb_k * Hhh
    cdt = win_ref.dtype
    prec = (jax.lax.Precision.HIGHEST if cdt == jnp.float32
            else jax.lax.Precision.DEFAULT)

    # ---- (1) linear_in + relu : one MXU matmul over all R rows ----
    h = jnp.dot(z_ref[...], win_ref[...], precision=prec,
                preferred_element_type=jnp.float32)
    h = jnp.maximum(h + bin_ref[...], 0.0)                       # (R, Hhh) f32

    # ---- (2) Chebyshev propagation into the xg scratch (no concatenates) ----
    # supports[0] == I so the k = 0 block is h itself.
    xg_scr[:, pl.ds(0, Hhh)] = h
    sup = sup_ref[...]                                           # ((K-1)*N, N)
    e_cdt = e_ref[...].astype(slab_scr.dtype)                    # (N, D)

    def cheb_body(b, carry):
        off = b * N
        if N % 8 == 0:
            off = pl.multiple_of(off, 8)
        h_b = xg_scr[pl.ds(off, N), pl.ds(0, Hhh)]               # (N, Hhh) f32
        xg_b = jnp.dot(sup, h_b.astype(cdt), precision=prec,
                       preferred_element_type=jnp.float32)       # ((K-1)*N, Hhh)
        for k in range(1, cheb_k):                               # K-1 static (tiny)
            xg_scr[pl.ds(off, N), pl.ds(k * Hhh, Hhh)] = xg_b[(k - 1) * N:k * N, :]
        # In-kernel broadcast of E to this batch's rows: the slab's last D
        # columns hold E, and the appended bias_pool rows of wpf_ref turn them
        # into the node-adaptive bias inside the same matmul as the weights.
        slab_scr[pl.ds(off, N), pl.ds(D * KHhh, D)] = e_cdt
        return carry

    lax.fori_loop(0, batch_block, cheb_body, 0)

    # ---- (3) e-scaled slab: slab[:, d*K*Hhh + j] = E[n(r), d] * xg[r, j] ----
    xg = xg_scr[...]                                             # (R, K*Hhh) f32
    e_rows = slab_scr[:, pl.ds(D * KHhh, D)].astype(jnp.float32)  # (R, D)
    for d in range(D):                                           # D static (small)
        slab_scr[:, pl.ds(d * KHhh, KHhh)] = (
            e_rows[:, d:d + 1] * xg).astype(slab_scr.dtype)

    # ---- node-adaptive GC + bias: ONE (R, D*K*Hhh + D) @ (., Hhh) matmul ----
    zz = jnp.dot(slab_scr[...], wpf_ref[...], precision=prec,
                 preferred_element_type=jnp.float32)             # (R, Hhh) f32

    # ---- (4) linear_out + tanh (lane-dense Hc*Cin-wide output block) ----
    out = jnp.dot(zz.astype(cdt), wout_ref[...], precision=prec,
                  preferred_element_type=jnp.float32)
    o_ref[...] = jnp.tanh(out + bout_ref[...]).astype(o_ref.dtype)


def precompute_vf_g_prime(params, *, cheb_k, compute_dtype=jnp.float32):
    """Parameter-only preprocessing, hoisted out of the per-evaluation hot path."""
    W_in, b_in, E, W_pool, b_pool, W_out, b_out = params
    assert cheb_k >= 2, "AGC Chebyshev order must be >= 2 (as in the PyTorch module)"
    N, D = E.shape
    Hhh = W_pool.shape[-1]
    f32 = jnp.float32

    with jax.default_matmul_precision("float32"):
        sup = jax.nn.softmax(jax.nn.relu(E.astype(f32) @ E.astype(f32).T), axis=1)
        support_set = [jnp.eye(N, dtype=f32), sup]
        for _ in range(2, cheb_k):
            support_set.append(2.0 * sup @ support_set[-1] - support_set[-2])
    # Drop the identity (k = 0) support; it is a no-op handled in the kernel.
    supports_nz = jnp.concatenate(support_set[1:], axis=0)       # ((K-1)*N, N)

    # Flatten weights_pool to (D*K*Hhh, Hhh) and append bias_pool (D, Hhh):
    # a single matmul against the e-scaled slab then yields  W(z) + bias .
    Wpf = jnp.concatenate(
        [W_pool.astype(f32).reshape(D * cheb_k * Hhh, Hhh), b_pool.astype(f32)],
        axis=0)

    return dict(
        W_in=W_in.astype(compute_dtype),
        b_in=b_in.reshape(1, -1).astype(f32),
        E=E.astype(f32),
        supports=supports_nz.astype(compute_dtype),
        Wpf=Wpf.astype(compute_dtype),
        W_out=W_out.astype(compute_dtype),
        b_out=b_out.reshape(1, -1).astype(f32),
        compute_dtype=compute_dtype,
        cheb_k=cheb_k)


def _pick_batch_block(batch, num_nodes, max_rows_per_step, min_grid_steps):
    """Largest divisor of `batch` that fits the row budget and the (8,.) rule."""
    best = None
    for cand in range(1, batch + 1):
        if batch % cand != 0:
            continue
        rows = cand * num_nodes
        n_steps = batch // cand
        if rows > max_rows_per_step:
            continue
        if n_steps > 1 and rows % 8 != 0:
            continue                      # non-full row blocks must be 8-aligned
        if n_steps < min(min_grid_steps, batch):
            continue                      # e.g. keep >= 2 steps for v7x megacore
        best = cand
    if best is None:
        # TODO(synk): pad the row dimension to a multiple of 8 instead of
        # falling back to a single full-extent block.
        best = batch
    return best


def vector_field_g_prime(z, pre, *, max_rows_per_step=2048, min_grid_steps=1):
    """z: (B, N, hidden_channels) -> (B, N, hidden_channels, input_channels)."""
    B, N, Hc = z.shape
    cheb_k = pre["cheb_k"]
    Hhh = pre["W_in"].shape[1]
    HcCin = pre["W_out"].shape[1]
    Cin = HcCin // Hc
    assert Cin * Hc == HcCin
    D = pre["E"].shape[1]
    cdt = pre["compute_dtype"]
    KHhh = cheb_k * Hhh
    assert pre["Wpf"].shape == (D * KHhh + D, Hhh)

    b_blk = _pick_batch_block(B, N, max_rows_per_step, min_grid_steps)
    R = b_blk * N
    n_steps = B // b_blk

    z2 = z.reshape(B * N, Hc).astype(cdt)                         # rows batch-major

    kernel = functools.partial(_vf_g_prime_kernel, num_nodes=N,
                               batch_block=b_blk, cheb_k=cheb_k, embed_dim=D)

    itemsize = jnp.dtype(cdt).itemsize
    weight_bytes = ((Hc * Hhh + (cheb_k - 1) * N * N + (D * KHhh + D) * Hhh
                     + Hhh * HcCin) * itemsize + (Hhh + N * D + HcCin) * 4)
    flops = 2 * B * N * (Hc * Hhh + (cheb_k - 1) * N * Hhh
                         + (D * KHhh + D) * Hhh + Hhh * HcCin)
    cost = pl.CostEstimate(
        flops=int(flops),
        transcendentals=int(B * N * HcCin),
        bytes_accessed=int(B * N * (Hc * itemsize + HcCin * 4) + weight_bytes))

    # VMEM budget: double-buffered z/out blocks + weights + the two scratches.
    vmem_est = (2 * R * Hc * itemsize + 2 * R * HcCin * 4 + 2 * weight_bytes
                + R * KHhh * 4 + R * (D * KHhh + D) * itemsize)
    cp_kwargs = dict(dimension_semantics=("parallel",))
    if vmem_est > 24 * 1024 * 1024:
        # Raise the scoped-VMEM default (32 MiB on v6e) once blocks get big.
        # TODO(synk): derive the cap from pltpu.get_tpu_info() per generation
        # and single-buffer the grid-invariant weight specs on v7x.
        cp_kwargs["vmem_limit_bytes"] = int(min(2 * vmem_est, 96 * 1024 * 1024))

    out_flat = pl.pallas_call(
        kernel,
        out_shape=jax.ShapeDtypeStruct((B * N, HcCin), z.dtype),
        grid_spec=pltpu.PrefetchScalarGridSpec(
            num_scalar_prefetch=0,
            grid=(n_steps,),
            in_specs=[
                pl.BlockSpec((R, Hc), lambda g: (g, 0)),                 # z rows
                pl.BlockSpec((Hc, Hhh), lambda g: (0, 0)),               # W_in
                pl.BlockSpec((1, Hhh), lambda g: (0, 0)),                # b_in
                pl.BlockSpec(((cheb_k - 1) * N, N), lambda g: (0, 0)),   # supports
                pl.BlockSpec((D * KHhh + D, Hhh), lambda g: (0, 0)),     # Wpool+bpool
                pl.BlockSpec((N, D), lambda g: (0, 0)),                  # E
                pl.BlockSpec((Hhh, HcCin), lambda g: (0, 0)),            # W_out
                pl.BlockSpec((1, HcCin), lambda g: (0, 0)),              # b_out
            ],
            out_specs=pl.BlockSpec((R, HcCin), lambda g: (g, 0)),
            scratch_shapes=[pltpu.VMEM((R, KHhh), jnp.float32),
                            pltpu.VMEM((R, D * KHhh + D), cdt)],
        ),
        compiler_params=pltpu.CompilerParams(**cp_kwargs),
        cost_estimate=cost,
    )(z2, pre["W_in"], pre["b_in"], pre["supports"], pre["Wpf"], pre["E"],
      pre["W_out"], pre["b_out"])

    return out_flat.reshape(B, N, Hc, Cin)


def reference(z, params, *, cheb_k):
    """Pure-JAX reference matching the PyTorch forward exactly (full f32)."""
    W_in, b_in, E, W_pool, b_pool, W_out, b_out = params
    B, N, Hc = z.shape
    with jax.default_matmul_precision("float32"):
        h = jax.nn.relu(z @ W_in + b_in)
        sup = jax.nn.softmax(jax.nn.relu(E @ E.T), axis=1)
        support_set = [jnp.eye(N, dtype=z.dtype), sup]
        for _ in range(2, cheb_k):
            support_set.append(2.0 * sup @ support_set[-1] - support_set[-2])
        supports = jnp.stack(support_set, axis=0)
        weights = jnp.einsum('nd,dkio->nkio', E, W_pool)
        bias = E @ b_pool
        x_g = jnp.einsum('knm,bmc->bknc', supports, h)
        x_g = jnp.transpose(x_g, (0, 2, 1, 3))                    # (B, N, K, Hhh)
        hz = jnp.einsum('bnki,nkio->bno', x_g, weights) + bias
        out = (hz @ W_out + b_out).reshape(B, N, Hc, W_out.shape[1] // Hc)
    return jnp.tanh(out)


if __name__ == "__main__":
    # Module hyperparameters (small, consistent with the PyTorch __init__).
    input_channels = 4
    hidden_channels = 32
    hidden_hidden_channels = 32
    num_nodes = 8
    cheb_k = 3
    embed_dim = 8
    batch = 2

    key = jax.random.PRNGKey(0)
    keys = jax.random.split(key, 8)

    # Deterministic synthetic parameters (torch Linear stored as (in, out) here).
    W_in = jax.random.normal(keys[0], (hidden_channels, hidden_hidden_channels),
                             jnp.float32) / jnp.sqrt(hidden_channels)
    b_in = jax.random.normal(keys[1], (hidden_hidden_channels,), jnp.float32) * 0.1
    E = jax.random.normal(keys[2], (num_nodes, embed_dim), jnp.float32)
    W_pool = jax.random.normal(
        keys[3], (embed_dim, cheb_k, hidden_hidden_channels, hidden_hidden_channels),
        jnp.float32) / jnp.sqrt(embed_dim * hidden_hidden_channels)
    b_pool = jax.random.normal(keys[4], (embed_dim, hidden_hidden_channels),
                               jnp.float32) * 0.1
    W_out = jax.random.normal(
        keys[5], (hidden_hidden_channels, input_channels * hidden_channels),
        jnp.float32) / jnp.sqrt(hidden_hidden_channels)
    b_out = jax.random.normal(keys[6], (input_channels * hidden_channels,),
                              jnp.float32) * 0.1
    params = (W_in, b_in, E, W_pool, b_pool, W_out, b_out)

    # Input state z: (batch, num_nodes, hidden_channels)
    z = jax.random.normal(keys[7], (batch, num_nodes, hidden_channels), jnp.float32)

    ref = jax.block_until_ready(reference(z, params, cheb_k=cheb_k))

    # ---- f32 path (default): single batch-folded grid step ----
    pre = precompute_vf_g_prime(params, cheb_k=cheb_k)
    out = jax.block_until_ready(vector_field_g_prime(z, pre))
    assert out.shape == (batch, num_nodes, hidden_channels, input_channels), out.shape
    # Tolerance leaves headroom for MXU f32 pass decomposition differences.
    assert jnp.allclose(out, ref, atol=2e-3, rtol=2e-3), \
        float(jnp.max(jnp.abs(out - ref)))

    # ---- f32 path with >= 2 grid steps (v7x megacore configuration) ----
    out2 = jax.block_until_ready(vector_field_g_prime(z, pre, min_grid_steps=2))
    assert jnp.allclose(out2, ref, atol=2e-3, rtol=2e-3), \
        float(jnp.max(jnp.abs(out2 - ref)))

    # ---- bf16 matmul-operand path (production config on v6e/v7x) ----
    pre_bf16 = precompute_vf_g_prime(params, cheb_k=cheb_k,
                                     compute_dtype=jnp.bfloat16)
    out_bf16 = jax.block_until_ready(vector_field_g_prime(z, pre_bf16))
    assert jnp.allclose(out_bf16, ref, atol=1e-1, rtol=1e-1), \
        float(jnp.max(jnp.abs(out_bf16 - ref)))

    print("KERNEL_OK")
</pallas_src>

<mosaic_0001>
module attributes {stable_mosaic.version = 11 : i64} {
  func.func @_vf_g_prime_kernel(%arg0: i32, %arg1: memref<16x32xf32, #tpu.memory_space<vmem>>, %arg2: memref<32x32xf32, #tpu.memory_space<vmem>>, %arg3: memref<1x32xf32, #tpu.memory_space<vmem>>, %arg4: memref<16x8xf32, #tpu.memory_space<vmem>>, %arg5: memref<776x32xf32, #tpu.memory_space<vmem>>, %arg6: memref<8x8xf32, #tpu.memory_space<vmem>>, %arg7: memref<32x128xf32, #tpu.memory_space<vmem>>, %arg8: memref<1x128xf32, #tpu.memory_space<vmem>>, %arg9: memref<16x128xf32, #tpu.memory_space<vmem>>, %arg10: memref<16x96xf32, #tpu.memory_space<vmem>>, %arg11: memref<16x776xf32, #tpu.memory_space<vmem>>) attributes {dimension_semantics = [#tpu.dimension_semantics<parallel>], iteration_bounds = array<i64: 1>, scalar_prefetch = 0 : i64, scratch_operands = 2 : i64, tpu.core_type = #tpu.core_type<tc>, window_params = [{transform_indices = @transform_0, window_bounds = array<i64: 16, 32>}, {pipeline_mode = #tpu.pipeline_mode<synchronous>, transform_indices = @transform_1, window_bounds = array<i64: 32, 32>}, {pipeline_mode = #tpu.pipeline_mode<synchronous>, transform_indices = @transform_2, window_bounds = array<i64: 1, 32>}, {pipeline_mode = #tpu.pipeline_mode<synchronous>, transform_indices = @transform_3, window_bounds = array<i64: 16, 8>}, {pipeline_mode = #tpu.pipeline_mode<synchronous>, transform_indices = @transform_4, window_bounds = array<i64: 776, 32>}, {pipeline_mode = #tpu.pipeline_mode<synchronous>, transform_indices = @transform_5, window_bounds = array<i64: 8, 8>}, {pipeline_mode = #tpu.pipeline_mode<synchronous>, transform_indices = @transform_6, window_bounds = array<i64: 32, 128>}, {pipeline_mode = #tpu.pipeline_mode<synchronous>, transform_indices = @transform_7, window_bounds = array<i64: 1, 128>}, {transform_indices = @transform_8, window_bounds = array<i64: 16, 128>}]} {
    %c0 = arith.constant 0 : index
    %c0_0 = arith.constant 0 : index
    %0 = vector.load %arg1[%c0, %c0_0] : memref<16x32xf32, #tpu.memory_space<vmem>>, vector<16x32xf32>
    %c0_1 = arith.constant 0 : index
    %c0_2 = arith.constant 0 : index
    %1 = vector.load %arg2[%c0_1, %c0_2] : memref<32x32xf32, #tpu.memory_space<vmem>>, vector<32x32xf32>
    %cst = arith.constant dense<0.000000e+00> : vector<16x32xf32>
    %2 = tpu.matmul %0, %1, %cst {dimension_numbers = #tpu.dot_dimension_numbers<[1], [0], [0], [1], [0, 0, 1, 1], [], []>, precision = #tpu.contract_precision<fp32>} : vector<16x32xf32>, vector<32x32xf32>, vector<16x32xf32> -> vector<16x32xf32>
    %c0_3 = arith.constant 0 : index
    %c0_4 = arith.constant 0 : index
    %3 = vector.load %arg3[%c0_3, %c0_4] : memref<1x32xf32, #tpu.memory_space<vmem>>, vector<1x32xf32>
    %4 = vector.broadcast %3 : vector<1x32xf32> to vector<16x32xf32>
    %5 = arith.addf %2, %4 : vector<16x32xf32>
    %cst_5 = arith.constant 0.000000e+00 : f32
    %6 = vector.broadcast %cst_5 : f32 to vector<16x32xf32>
    %7 = arith.maximumf %5, %6 : vector<16x32xf32>
    %c0_6 = arith.constant 0 : index
    %c0_7 = arith.constant 0 : index
    %8 = vector.load %arg10[%c0_6, %c0_7] : memref<16x96xf32, #tpu.memory_space<vmem>>, vector<16x32xf32>
    tpu.vector_store %arg10[%c0_6, %c0_7], %7 {strides = array<i32>} : memref<16x96xf32, #tpu.memory_space<vmem>>, vector<16x32xf32>,
    %c0_8 = arith.constant 0 : index
    %c0_9 = arith.constant 0 : index
    %9 = vector.load %arg4[%c0_8, %c0_9] : memref<16x8xf32, #tpu.memory_space<vmem>>, vector<16x8xf32>
    %c0_10 = arith.constant 0 : index
    %c0_11 = arith.constant 0 : index
    %10 = vector.load %arg6[%c0_10, %c0_11] : memref<8x8xf32, #tpu.memory_space<vmem>>, vector<8x8xf32>
    %c0_i32 = arith.constant 0 : i32
    %c2_i32 = arith.constant 2 : i32
    %11 = arith.addi %c0_i32, %c2_i32 : i32
    %c1_i32 = arith.constant 1 : i32
    scf.for %arg12 = %c0_i32 to %11 step %c1_i32  : i32 {
      %c8_i32 = arith.constant 8 : i32
      %56 = arith.muli %arg12, %c8_i32 : i32
      %57 = tpu.assume_multiple %56, 8 : i32
      %58 = arith.index_cast %57 : i32 to index
      %c0_37 = arith.constant 0 : index
      %59 = vector.load %arg10[%58, %c0_37] : memref<16x96xf32, #tpu.memory_space<vmem>>, vector<8x32xf32>
      %cst_38 = arith.constant dense<0.000000e+00> : vector<16x32xf32>
      %60 = tpu.matmul %9, %59, %cst_38 {dimension_numbers = #tpu.dot_dimension_numbers<[1], [0], [0], [1], [0, 0, 1, 1], [], []>, precision = #tpu.contract_precision<fp32>} : vector<16x8xf32>, vector<8x32xf32>, vector<16x32xf32> -> vector<16x32xf32>
      %61 = vector.extract_strided_slice %60 {offsets = [0, 0], sizes = [8, 32], strides = [1, 1]} : vector<16x32xf32> to vector<8x32xf32>
      %62 = arith.index_cast %57 : i32 to index
      %c32 = arith.constant 32 : index
      %63 = vector.load %arg10[%62, %c32] : memref<16x96xf32, #tpu.memory_space<vmem>>, vector<8x32xf32>
      tpu.vector_store %arg10[%62, %c32], %61 {strides = array<i32>} : memref<16x96xf32, #tpu.memory_space<vmem>>, vector<8x32xf32>,
      %64 = vector.extract_strided_slice %60 {offsets = [8, 0], sizes = [8, 32], strides = [1, 1]} : vector<16x32xf32> to vector<8x32xf32>
      %65 = arith.index_cast %57 : i32 to index
      %c64 = arith.constant 64 : index
      %66 = vector.load %arg10[%65, %c64] : memref<16x96xf32, #tpu.memory_space<vmem>>, vector<8x32xf32>
      tpu.vector_store %arg10[%65, %c64], %64 {strides = array<i32>} : memref<16x96xf32, #tpu.memory_space<vmem>>, vector<8x32xf32>,
      %67 = arith.index_cast %57 : i32 to index
      %c768_39 = arith.constant 768 : index
      %68 = vector.load %arg11[%67, %c768_39] : memref<16x776xf32, #tpu.memory_space<vmem>>, vector<8x8xf32>
      tpu.vector_store %arg11[%67, %c768_39], %10 {strides = array<i32>} : memref<16x776xf32, #tpu.memory_space<vmem>>, vector<8x8xf32>,
    }
    %c2_i32_12 = arith.constant 2 : i32
    %c0_13 = arith.constant 0 : index
    %c0_14 = arith.constant 0 : index
    %12 = vector.load %arg10[%c0_13, %c0_14] : memref<16x96xf32, #tpu.memory_space<vmem>>, vector<16x96xf32>
    %c0_15 = arith.constant 0 : index
    %c768 = arith.constant 768 : index
    %13 = vector.load %arg11[%c0_15, %c768] : memref<16x776xf32, #tpu.memory_space<vmem>>, vector<16x8xf32>
    %14 = vector.extract_strided_slice %13 {offsets = [0, 0], sizes = [16, 1], strides = [1, 1]} : vector<16x8xf32> to vector<16x1xf32>
    %15 = vector.broadcast %14 : vector<16x1xf32> to vector<16x96xf32>
    %16 = arith.mulf %15, %12 : vector<16x96xf32>
    %c0_16 = arith.constant 0 : index
    %c0_17 = arith.constant 0 : index
    %17 = vector.load %arg11[%c0_16, %c0_17] : memref<16x776xf32, #tpu.memory_space<vmem>>, vector<16x96xf32>
    tpu.vector_store %arg11[%c0_16, %c0_17], %16 {strides = array<i32>} : memref<16x776xf32, #tpu.memory_space<vmem>>, vector<16x96xf32>,
    %18 = vector.extract_strided_slice %13 {offsets = [0, 1], sizes = [16, 1], strides = [1, 1]} : vector<16x8xf32> to vector<16x1xf32>
    %19 = vector.broadcast %18 : vector<16x1xf32> to vector<16x96xf32>
    %20 = arith.mulf %19, %12 : vector<16x96xf32>
    %c0_18 = arith.constant 0 : index
    %c96 = arith.constant 96 : index
    %21 = vector.load %arg11[%c0_18, %c96] : memref<16x776xf32, #tpu.memory_space<vmem>>, vector<16x96xf32>
    tpu.vector_store %arg11[%c0_18, %c96], %20 {strides = array<i32>} : memref<16x776xf32, #tpu.memory_space<vmem>>, vector<16x96xf32>,
    %22 = vector.extract_strided_slice %13 {offsets = [0, 2], sizes = [16, 1], strides = [1, 1]} : vector<16x8xf32> to vector<16x1xf32>
    %23 = vector.broadcast %22 : vector<16x1xf32> to vector<16x96xf32>
    %24 = arith.mulf %23, %12 : vector<16x96xf32>
    %c0_19 = arith.constant 0 : index
    %c192 = arith.constant 192 : index
    %25 = vector.load %arg11[%c0_19, %c192] : memref<16x776xf32, #tpu.memory_space<vmem>>, vector<16x96xf32>
    tpu.vector_store %arg11[%c0_19, %c192], %24 {strides = array<i32>} : memref<16x776xf32, #tpu.memory_space<vmem>>, vector<16x96xf32>,
    %26 = vector.extract_strided_slice %13 {offsets = [0, 3], sizes = [16, 1], strides = [1, 1]} : vector<16x8xf32> to vector<16x1xf32>
    %27 = vector.broadcast %26 : vector<16x1xf32> to vector<16x96xf32>
    %28 = arith.mulf %27, %12 : vector<16x96xf32>
    %c0_20 = arith.constant 0 : index
    %c288 = arith.constant 288 : index
    %29 = vector.load %arg11[%c0_20, %c288] : memref<16x776xf32, #tpu.memory_space<vmem>>, vector<16x96xf32>
    tpu.vector_store %arg11[%c0_20, %c288], %28 {strides = array<i32>} : memref<16x776xf32, #tpu.memory_space<vmem>>, vector<16x96xf32>,
    %30 = vector.extract_strided_slice %13 {offsets = [0, 4], sizes = [16, 1], strides = [1, 1]} : vector<16x8xf32> to vector<16x1xf32>
    %31 = vector.broadcast %30 : vector<16x1xf32> to vector<16x96xf32>
    %32 = arith.mulf %31, %12 : vector<16x96xf32>
    %c0_21 = arith.constant 0 : index
    %c384 = arith.constant 384 : index
    %33 = vector.load %arg11[%c0_21, %c384] : memref<16x776xf32, #tpu.memory_space<vmem>>, vector<16x96xf32>
    tpu.vector_store %arg11[%c0_21, %c384], %32 {strides = array<i32>} : memref<16x776xf32, #tpu.memory_space<vmem>>, vector<16x96xf32>,
    %34 = vector.extract_strided_slice %13 {offsets = [0, 5], sizes = [16, 1], strides = [1, 1]} : vector<16x8xf32> to vector<16x1xf32>
    %35 = vector.broadcast %34 : vector<16x1xf32> to vector<16x96xf32>
    %36 = arith.mulf %35, %12 : vector<16x96xf32>
    %c0_22 = arith.constant 0 : index
    %c480 = arith.constant 480 : index
    %37 = vector.load %arg11[%c0_22, %c480] : memref<16x776xf32, #tpu.memory_space<vmem>>, vector<16x96xf32>
    tpu.vector_store %arg11[%c0_22, %c480], %36 {strides = array<i32>} : memref<16x776xf32, #tpu.memory_space<vmem>>, vector<16x96xf32>,
    %38 = vector.extract_strided_slice %13 {offsets = [0, 6], sizes = [16, 1], strides = [1, 1]} : vector<16x8xf32> to vector<16x1xf32>
    %39 = vector.broadcast %38 : vector<16x1xf32> to vector<16x96xf32>
    %40 = arith.mulf %39, %12 : vector<16x96xf32>
    %c0_23 = arith.constant 0 : index
    %c576 = arith.constant 576 : index
    %41 = vector.load %arg11[%c0_23, %c576] : memref<16x776xf32, #tpu.memory_space<vmem>>, vector<16x96xf32>
    tpu.vector_store %arg11[%c0_23, %c576], %40 {strides = array<i32>} : memref<16x776xf32, #tpu.memory_space<vmem>>, vector<16x96xf32>,
    %42 = vector.extract_strided_slice %13 {offsets = [0, 7], sizes = [16, 1], strides = [1, 1]} : vector<16x8xf32> to vector<16x1xf32>
    %43 = vector.broadcast %42 : vector<16x1xf32> to vector<16x96xf32>
    %44 = arith.mulf %43, %12 : vector<16x96xf32>
    %c0_24 = arith.constant 0 : index
    %c672 = arith.constant 672 : index
    %45 = vector.load %arg11[%c0_24, %c672] : memref<16x776xf32, #tpu.memory_space<vmem>>, vector<16x96xf32>
    tpu.vector_store %arg11[%c0_24, %c672], %44 {strides = array<i32>} : memref<16x776xf32, #tpu.memory_space<vmem>>, vector<16x96xf32>,
    %c0_25 = arith.constant 0 : index
    %c0_26 = arith.constant 0 : index
    %46 = vector.load %arg11[%c0_25, %c0_26] : memref<16x776xf32, #tpu.memory_space<vmem>>, vector<16x776xf32>
    %c0_27 = arith.constant 0 : index
    %c0_28 = arith.constant 0 : index
    %47 = vector.load %arg5[%c0_27, %c0_28] : memref<776x32xf32, #tpu.memory_space<vmem>>, vector<776x32xf32>
    %cst_29 = arith.constant dense<0.000000e+00> : vector<16x32xf32>
    %48 = tpu.matmul %46, %47, %cst_29 {dimension_numbers = #tpu.dot_dimension_numbers<[1], [0], [0], [1], [0, 0, 1, 1], [], []>, precision = #tpu.contract_precision<fp32>} : vector<16x776xf32>, vector<776x32xf32>, vector<16x32xf32> -> vector<16x32xf32>
    %c0_30 = arith.constant 0 : index
    %c0_31 = arith.constant 0 : index
    %49 = vector.load %arg7[%c0_30, %c0_31] : memref<32x128xf32, #tpu.memory_space<vmem>>, vector<32x128xf32>
    %cst_32 = arith.constant dense<0.000000e+00> : vector<16x128xf32>
    %50 = tpu.matmul %48, %49, %cst_32 {dimension_numbers = #tpu.dot_dimension_numbers<[1], [0], [0], [1], [0, 0, 1, 1], [], []>, precision = #tpu.contract_precision<fp32>} : vector<16x32xf32>, vector<32x128xf32>, vector<16x128xf32> -> vector<16x128xf32>
    %c0_33 = arith.constant 0 : index
    %c0_34 = arith.constant 0 : index
    %51 = vector.load %arg8[%c0_33, %c0_34] : memref<1x128xf32, #tpu.memory_space<vmem>>, vector<1x128xf32>
    %52 = vector.broadcast %51 : vector<1x128xf32> to vector<16x128xf32>
    %53 = arith.addf %50, %52 : vector<16x128xf32>
    %54 = math.tanh %53 : vector<16x128xf32>
    %c0_35 = arith.constant 0 : index
    %c0_36 = arith.constant 0 : index
    %55 = vector.load %arg9[%c0_35, %c0_36] : memref<16x128xf32, #tpu.memory_space<vmem>>, vector<16x128xf32>
    tpu.vector_store %arg9[%c0_35, %c0_36], %54 {strides = array<i32>} : memref<16x128xf32, #tpu.memory_space<vmem>>, vector<16x128xf32>,
    return
  }
  func.func @transform_0(%arg0: i32) -> (i32, i32) {
    %c0_i32 = arith.constant 0 : i32
    %c0_i32_0 = arith.constant 0 : i32
    return %arg0, %c0_i32 : i32, i32
  }
  func.func @transform_1(%arg0: i32) -> (i32, i32) {
    %c0_i32 = arith.constant 0 : i32
    %c0_i32_0 = arith.constant 0 : i32
    %c0_i32_1 = arith.constant 0 : i32
    return %c0_i32, %c0_i32_0 : i32, i32
  }
  func.func @transform_2(%arg0: i32) -> (i32, i32) {
    %c0_i32 = arith.constant 0 : i32
    %c0_i32_0 = arith.constant 0 : i32
    %c0_i32_1 = arith.constant 0 : i32
    return %c0_i32, %c0_i32_0 : i32, i32
  }
  func.func @transform_3(%arg0: i32) -> (i32, i32) {
    %c0_i32 = arith.constant 0 : i32
    %c0_i32_0 = arith.constant 0 : i32
    %c0_i32_1 = arith.constant 0 : i32
    return %c0_i32, %c0_i32_0 : i32, i32
  }
  func.func @transform_4(%arg0: i32) -> (i32, i32) {
    %c0_i32 = arith.constant 0 : i32
    %c0_i32_0 = arith.constant 0 : i32
    %c0_i32_1 = arith.constant 0 : i32
    return %c0_i32, %c0_i32_0 : i32, i32
  }
  func.func @transform_5(%arg0: i32) -> (i32, i32) {
    %c0_i32 = arith.constant 0 : i32
    %c0_i32_0 = arith.constant 0 : i32
    %c0_i32_1 = arith.constant 0 : i32
    return %c0_i32, %c0_i32_0 : i32, i32
  }
  func.func @transform_6(%arg0: i32) -> (i32, i32) {
    %c0_i32 = arith.constant 0 : i32
    %c0_i32_0 = arith.constant 0 : i32
    %c0_i32_1 = arith.constant 0 : i32
    return %c0_i32, %c0_i32_0 : i32, i32
  }
  func.func @transform_7(%arg0: i32) -> (i32, i32) {
    %c0_i32 = arith.constant 0 : i32
    %c0_i32_0 = arith.constant 0 : i32
    %c0_i32_1 = arith.constant 0 : i32
    return %c0_i32, %c0_i32_0 : i32, i32
  }
  func.func @transform_8(%arg0: i32) -> (i32, i32) {
    %c0_i32 = arith.constant 0 : i32
    %c0_i32_0 = arith.constant 0 : i32
    return %arg0, %c0_i32 : i32, i32
  }
}

</mosaic_0001>

<llo_original>
// kernel: tpu_custom_call.1
$region0: #{tpu_custom_call.1}
  #allocation0 [shape = 'u32[]', space=smem, size = 0x4, offset = 0x4, fixed_abs, tag = 'smem constant byte address 0x4 - core index']
  #allocation1 [shape = 'u32[144,128]{1,0:T(1,128)}', space=vmem, size = 0x12000, scoped, tag = 'internal scratch']
  #allocation2 [shape = 'f32[16,96]{1,0:T(8,128)}', space=vmem, size = 0x2000, scoped, tag = 'scratch operand']
  #allocation3 [shape = 'f32[16,776]{1,0:T(8,128)}', space=vmem, size = 0xe000, scoped, tag = 'scratch operand']
  %s0 = inlined_call_operand.vmem [shape: f32[16,32], index: 0, kind: input, shape index: {}]
  %s1 = inlined_call_operand.vmem [shape: f32[32,32], index: 1, kind: input, shape index: {}]
  %s2 = inlined_call_operand.vmem [shape: f32[1,32], index: 2, kind: input, shape index: {}]
  %s3 = inlined_call_operand.vmem [shape: f32[16,8], index: 3, kind: input, shape index: {}]
  %s4 = inlined_call_operand.vmem [shape: f32[776,32], index: 4, kind: input, shape index: {}]
  %s5 = inlined_call_operand.vmem [shape: f32[8,8], index: 5, kind: input, shape index: {}]
  %s6 = inlined_call_operand.vmem [shape: f32[32,128], index: 6, kind: input, shape index: {}]
  %s7 = inlined_call_operand.vmem [shape: f32[1,128], index: 7, kind: input, shape index: {}]
  %s8 = inlined_call_operand.hbm [shape: f32[16,128], index: 8, kind: output, shape index: {}]
  %s9 = sld [smem:[#allocation0]]
  $region49: #{tpu_custom_call.1} parent=0
    _
  %s11 = ssub.s32 1, %s9
  %s12 = scalar_select 0, %s11, %s9
  $region1: #{tpu_custom_call.1} parent=0
    #allocation4 [shape = 'u8[8192]{0}', space=vmem, size = 0x2000, scoped, tag = 'output window, operand 0, single buffered']
    #allocation5 [shape = 's32[1]{0}', space=sflag, size = 0x4, scoped, tag = 'scoped memory for tpu_custom_call.1']
    %13 = vsyncpa [#allocation5], 0
    // Predicated region
    $region2: #{tpu_custom_call.1} parent=1 // pred_check
      _
    $region3: #{tpu_custom_call.1} parent=1 // pred_check_branch
      %15 = sbr.rel (0) target = $region5
    $region4: #{tpu_custom_call.1} parent=1 // pred_region
      _
    $region5: #{tpu_custom_call.1} parent=1 // pred_fallthru
      _
    // Predicated region
    $region6: #{tpu_custom_call.1} parent=1 // pred_check
      _
    $region7: #{tpu_custom_call.1} parent=1 // pred_check_branch
      %17 = sbr.rel (0) target = $region9
    $region8: #{tpu_custom_call.1} parent=1 // pred_region
      _
    $region9: #{tpu_custom_call.1} parent=1 // pred_fallthru
      _
    // Predicated region
    $region10: #{tpu_custom_call.1} parent=1 // pred_check
      _
    $region11: #{tpu_custom_call.1} parent=1 // pred_check_branch
      %19 = sbr.rel (0) target = $region13
    $region12: #{tpu_custom_call.1} parent=1 // pred_region
      _
    $region13: #{tpu_custom_call.1} parent=1 // pred_fallthru
      _
    // Predicated region
    $region14: #{tpu_custom_call.1} parent=1 // pred_check
      _
    $region15: #{tpu_custom_call.1} parent=1 // pred_check_branch
      %21 = sbr.rel (0) target = $region17
    $region16: #{tpu_custom_call.1} parent=1 // pred_region
      _
    $region17: #{tpu_custom_call.1} parent=1 // pred_fallthru
      _
    // Predicated region
    $region18: #{tpu_custom_call.1} parent=1 // pred_check
      _
    $region19: #{tpu_custom_call.1} parent=1 // pred_check_branch
      %23 = sbr.rel (0) target = $region21
    $region20: #{tpu_custom_call.1} parent=1 // pred_region
      _
    $region21: #{tpu_custom_call.1} parent=1 // pred_fallthru
      _
    // Predicated region
    $region22: #{tpu_custom_call.1} parent=1 // pred_check
      _
    $region23: #{tpu_custom_call.1} parent=1 // pred_check_branch
      %25 = sbr.rel (0) target = $region25
    $region24: #{tpu_custom_call.1} parent=1 // pred_region
      _
    $region25: #{tpu_custom_call.1} parent=1 // pred_fallthru
      _
    // Predicated region
    $region26: #{tpu_custom_call.1} parent=1 // pred_check
      _
    $region27: #{tpu_custom_call.1} parent=1 // pred_check_branch
      %27 = sbr.rel (0) target = $region29
    $region28: #{tpu_custom_call.1} parent=1 // pred_region
      _
    $region29: #{tpu_custom_call.1} parent=1 // pred_fallthru
      _
    // Predicated region
    $region30: #{tpu_custom_call.1} parent=1 // pred_check
      _
    $region31: #{tpu_custom_call.1} parent=1 // pred_check_branch
      %29 = sbr.rel (0) target = $region33
    $region32: #{tpu_custom_call.1} parent=1 // pred_region
      _
    $region33: #{tpu_custom_call.1} parent=1 // pred_fallthru
      _
    %v30 = vld [vmem:[%s0] sm:$0xff]
    %v31 = vld [vmem:[%s0 + $0x8] sm:$0xff]
    %v32 = vld [vmem:[%s1] sm:$0xff]
    %v33 = vld [vmem:[%s1 + $0x8] sm:$0xff]
    %v34 = vld [vmem:[%s1 + $0x10] sm:$0xff]
    %v35 = vld [vmem:[%s1 + $0x18] sm:$0xff]
    %v36 = vld [vmem:[%s2] sm:$0x1]
    %v38 = vlaneseq
    %v39 = vshrl.u32 %v38, 7
    %v40 = vsub.s32 0, %v39
    %v41 = vrot.slane %v36, %v40
    %vm43 = vcmask 261120
    %v45 = vsel %vm43, %v30, 0
    %v48 = vsel %vm43, %v31, 0
    %50 = vmatprep.subr.mxu0 0.0
    %51 = vmatpush1.msra.mxu0 0.0
    %52 = vmatprep.subr.mxu0 0.0
    %53 = vmatpush1.msra.mxu0 0.0
    %54 = vmatprep.subr.mxu0 0.0
    %55 = vmatpush1.msra.mxu0 0.0
    %56 = vmatprep.subr.mxu0 0.0
    %57 = vmatpush1.msra.mxu0 0.0
    %58 = vmatprep.subr.mxu0 0.0
    %59 = vmatpush1.msra.mxu0 0.0
    %60 = vmatprep.subr.mxu0 0.0
    %61 = vmatpush1.msra.mxu0 0.0
    %62 = vmatprep.subr.mxu0 0.0
    %63 = vmatpush1.msra.mxu0 0.0
    %64 = vmatprep.subr.mxu0 0.0
    %65 = vmatpush1.msra.mxu0 0.0
    %66 = vmatprep.subr.mxu0 0.0
    %67 = vmatpush1.msra.mxu0 0.0
    %68 = vmatprep.subr.mxu0 0.0
    %69 = vmatpush1.msra.mxu0 0.0
    %70 = vmatprep.subr.mxu0 0.0
    %71 = vmatpush1.msra.mxu0 0.0
    %72 = vmatprep.subr.mxu0 0.0
    %73 = vmatpush1.msra.mxu0 0.0
    %74 = vmatprep.subr.mxu0 0.0
    %v75 = vand.u32 %v35, 4294901760
    %76 = vmatpush1.msra.mxu0 %v75
    %77 = vmatprep.subr.mxu0 0.0
    %v78 = vand.u32 %v34, 4294901760
    %79 = vmatpush1.msra.mxu0 %v78
    %80 = vmatprep.subr.mxu0 0.0
    %v81 = vand.u32 %v33, 4294901760
    %82 = vmatpush1.msra.mxu0 %v81
    %83 = vmatprep.subr.mxu0 0.0
    %v84 = vand.u32 %v32, 4294901760
    %85 = vmatpush1.msra.mxu0 %v84
    %86 = vmatprep.subr.mxu0 0.0
    %87 = vmatpush2.msra.mxu0 0.0
    %88 = vmatprep.subr.mxu0 0.0
    %89 = vmatpush2.msra.mxu0 0.0
    %90 = vmatprep.subr.mxu0 0.0
    %91 = vmatpush2.msra.mxu0 0.0
    %92 = vmatprep.subr.mxu0 0.0
    %93 = vmatpush2.msra.mxu0 0.0
    %94 = vmatprep.subr.mxu0 0.0
    %95 = vmatpush2.msra.mxu0 0.0
    %96 = vmatprep.subr.mxu0 0.0
    %97 = vmatpush2.msra.mxu0 0.0
    %98 = vmatprep.subr.mxu0 0.0
    %99 = vmatpush2.msra.mxu0 0.0
    %100 = vmatprep.subr.mxu0 0.0
    %101 = vmatpush2.msra.mxu0 0.0
    %102 = vmatprep.subr.mxu0 0.0
    %103 = vmatpush2.msra.mxu0 0.0
    %104 = vmatprep.subr.mxu0 0.0
    %105 = vmatpush2.msra.mxu0 0.0
    %106 = vmatprep.subr.mxu0 0.0
    %107 = vmatpush2.msra.mxu0 0.0
    %108 = vmatprep.subr.mxu0 0.0
    %109 = vmatpush2.msra.mxu0 0.0
    %110 = vmatprep.subr.mxu0 0.0
    %111 = vmatpush2.msra.mxu0 0.0
    %112 = vmatprep.subr.mxu0 0.0
    %113 = vmatpush2.msra.mxu0 0.0
    %114 = vmatprep.subr.mxu0 0.0
    %115 = vmatpush2.msra.mxu0 0.0
    %116 = vmatprep.subr.mxu0 0.0
    %117 = vmatpush2.msra.mxu0 0.0
    %118 = vmatprep.mubr.f32.mxu0 0.0
    %v119 = vand.u32 %v45, 4294901760
    %v120 = vsub.f32 %v45, %v119
    %v121 = vand.u32 %v120, 4294901760
    %v122 = vsub.f32 %v120, %v121
    %v123 = vand.u32 %v122, 4294901760
    %124 = vmatmul.mubr.f32.gmra.mxu0 %v123
    %v125 = vpop.f32.mrf.mxu0
    %v126 = vadd.f32 %v41, %v125
    %v127 = vpop.f32.mrf.mxu0
    %128 = vmatprep.mubr.f32.mxu0 0.0
    %v129 = vand.u32 %v48, 4294901760
    %v130 = vsub.f32 %v48, %v129
    %v131 = vand.u32 %v130, 4294901760
    %v132 = vsub.f32 %v130, %v131
    %v133 = vand.u32 %v132, 4294901760
    %134 = vmatmul.mubr.f32.gmra.mxu0 %v133
    %v135 = vpop.f32.mrf.mxu0
    %v136 = vadd.f32 %v41, %v135
    %v137 = vpop.f32.mrf.mxu0
    %138 = vdwg.mxu0
    %139 = vmatprep.subr.mxu0 0.0
    %140 = vmatpush1.msra.mxu0 0.0
    %141 = vmatprep.subr.mxu0 0.0
    %142 = vmatpush1.msra.mxu0 0.0
    %143 = vmatprep.subr.mxu0 0.0
    %144 = vmatpush1.msra.mxu0 0.0
    %145 = vmatprep.subr.mxu0 0.0
    %146 = vmatpush1.msra.mxu0 0.0
    %147 = vmatprep.subr.mxu0 0.0
    %148 = vmatpush1.msra.mxu0 0.0
    %149 = vmatprep.subr.mxu0 0.0
    %150 = vmatpush1.msra.mxu0 0.0
    %151 = vmatprep.subr.mxu0 0.0
    %152 = vmatpush1.msra.mxu0 0.0
    %153 = vmatprep.subr.mxu0 0.0
    %154 = vmatpush1.msra.mxu0 0.0
    %155 = vmatprep.subr.mxu0 0.0
    %156 = vmatpush1.msra.mxu0 0.0
    %157 = vmatprep.subr.mxu0 0.0
    %158 = vmatpush1.msra.mxu0 0.0
    %159 = vmatprep.subr.mxu0 0.0
    %160 = vmatpush1.msra.mxu0 0.0
    %161 = vmatprep.subr.mxu0 0.0
    %162 = vmatpush1.msra.mxu0 0.0
    %163 = vmatprep.subr.mxu0 0.0
    %v164 = vand.u32 %v35, 4294901760
    %v165 = vsub.f32 %v35, %v164
    %v166 = vand.u32 %v165, 4294901760
    %v167 = vsub.f32 %v165, %v166
    %v168 = vand.u32 %v167, 4294901760
    %169 = vmatpush1.msra.mxu0 %v168
    %170 = vmatprep.subr.mxu0 0.0
    %v171 = vand.u32 %v34, 4294901760
    %v172 = vsub.f32 %v34, %v171
    %v173 = vand.u32 %v172, 4294901760
    %v174 = vsub.f32 %v172, %v173
    %v175 = vand.u32 %v174, 4294901760
    %176 = vmatpush1.msra.mxu0 %v175
    %177 = vmatprep.subr.mxu0 0.0
    %v178 = vand.u32 %v33, 4294901760
    %v179 = vsub.f32 %v33, %v178
    %v180 = vand.u32 %v179, 4294901760
    %v181 = vsub.f32 %v179, %v180
    %v182 = vand.u32 %v181, 4294901760
    %183 = vmatpush1.msra.mxu0 %v182
    %184 = vmatprep.subr.mxu0 0.0
    %v185 = vand.u32 %v32, 4294901760
    %v186 = vsub.f32 %v32, %v185
    %v187 = vand.u32 %v186, 4294901760
    %v188 = vsub.f32 %v186, %v187
    %v189 = vand.u32 %v188, 4294901760
    %190 = vmatpush1.msra.mxu0 %v189
    %191 = vmatprep.subr.mxu0 0.0
    %192 = vmatpush2.msra.mxu0 0.0
    %193 = vmatprep.subr.mxu0 0.0
    %194 = vmatpush2.msra.mxu0 0.0
    %195 = vmatprep.subr.mxu0 0.0
    %196 = vmatpush2.msra.mxu0 0.0
    %197 = vmatprep.subr.mxu0 0.0
    %198 = vmatpush2.msra.mxu0 0.0
    %199 = vmatprep.subr.mxu0 0.0
    %200 = vmatpush2.msra.mxu0 0.0
    %201 = vmatprep.subr.mxu0 0.0
    %202 = vmatpush2.msra.mxu0 0.0
    %203 = vmatprep.subr.mxu0 0.0
    %204 = vmatpush2.msra.mxu0 0.0
    %205 = vmatprep.subr.mxu0 0.0
    %206 = vmatpush2.msra.mxu0 0.0
    %207 = vmatprep.subr.mxu0 0.0
    %208 = vmatpush2.msra.mxu0 0.0
    %209 = vmatprep.subr.mxu0 0.0
    %210 = vmatpush2.msra.mxu0 0.0
    %211 = vmatprep.subr.mxu0 0.0
    %212 = vmatpush2.msra.mxu0 0.0
    %213 = vmatprep.subr.mxu0 0.0
    %214 = vmatpush2.msra.mxu0 0.0
    %215 = vmatprep.subr.mxu0 0.0
    %216 = vmatpush2.msra.mxu0 0.0
    %217 = vmatprep.subr.mxu0 0.0
    %218 = vmatpush2.msra.mxu0 0.0
    %219 = vmatprep.subr.mxu0 0.0
    %220 = vmatpush2.msra.mxu0 0.0
    %221 = vmatprep.subr.mxu0 0.0
    %222 = vmatpush2.msra.mxu0 0.0
    %223 = vmatprep.mubr.f32.mxu0 0.0
    %v224 = vand.u32 %v45, 4294901760
    %225 = vmatmul.mubr.f32.gmra.mxu0 %v224
    %v226 = vpop.f32.mrf.mxu0
    %v227 = vadd.f32 %v126, %v226
    %v228 = vpop.f32.mrf.mxu0
    %229 = vmatprep.mubr.f32.mxu0 0.0
    %v230 = vand.u32 %v48, 4294901760
    %231 = vmatmul.mubr.f32.gmra.mxu0 %v230
    %v232 = vpop.f32.mrf.mxu0
    %v233 = vadd.f32 %v136, %v232
    %v234 = vpop.f32.mrf.mxu0
    %235 = vdwg.mxu0
    %236 = vmatprep.subr.mxu0 0.0
    %237 = vmatpush1.msra.mxu0 0.0
    %238 = vmatprep.subr.mxu0 0.0
    %239 = vmatpush1.msra.mxu0 0.0
    %240 = vmatprep.subr.mxu0 0.0
    %241 = vmatpush1.msra.mxu0 0.0
    %242 = vmatprep.subr.mxu0 0.0
    %243 = vmatpush1.msra.mxu0 0.0
    %244 = vmatprep.subr.mxu0 0.0
    %245 = vmatpush1.msra.mxu0 0.0
    %246 = vmatprep.subr.mxu0 0.0
    %247 = vmatpush1.msra.mxu0 0.0
    %248 = vmatprep.subr.mxu0 0.0
    %249 = vmatpush1.msra.mxu0 0.0
    %250 = vmatprep.subr.mxu0 0.0
    %251 = vmatpush1.msra.mxu0 0.0
    %252 = vmatprep.subr.mxu0 0.0
    %253 = vmatpush1.msra.mxu0 0.0
    %254 = vmatprep.subr.mxu0 0.0
    %255 = vmatpush1.msra.mxu0 0.0
    %256 = vmatprep.subr.mxu0 0.0
    %257 = vmatpush1.msra.mxu0 0.0
    %258 = vmatprep.subr.mxu0 0.0
    %259 = vmatpush1.msra.mxu0 0.0
    %260 = vmatprep.subr.mxu0 0.0
    %v261 = vand.u32 %v35, 4294901760
    %v262 = vsub.f32 %v35, %v261
    %263 = vmatpush1.msra.mxu0 %v262
    %264 = vmatprep.subr.mxu0 0.0
    %v265 = vand.u32 %v34, 4294901760
    %v266 = vsub.f32 %v34, %v265
    %267 = vmatpush1.msra.mxu0 %v266
    %268 = vmatprep.subr.mxu0 0.0
    %v269 = vand.u32 %v33, 4294901760
    %v270 = vsub.f32 %v33, %v269
    %271 = vmatpush1.msra.mxu0 %v270
    %272 = vmatprep.subr.mxu0 0.0
    %v273 = vand.u32 %v32, 4294901760
    %v274 = vsub.f32 %v32, %v273
    %275 = vmatpush1.msra.mxu0 %v274
    %276 = vmatprep.subr.mxu0 0.0
    %277 = vmatpush2.msra.mxu0 0.0
    %278 = vmatprep.subr.mxu0 0.0
    %279 = vmatpush2.msra.mxu0 0.0
    %280 = vmatprep.subr.mxu0 0.0
    %281 = vmatpush2.msra.mxu0 0.0
    %282 = vmatprep.subr.mxu0 0.0
    %283 = vmatpush2.msra.mxu0 0.0
    %284 = vmatprep.subr.mxu0 0.0
    %285 = vmatpush2.msra.mxu0 0.0
    %286 = vmatprep.subr.mxu0 0.0
    %287 = vmatpush2.msra.mxu0 0.0
    %288 = vmatprep.subr.mxu0 0.0
    %289 = vmatpush2.msra.mxu0 0.0
    %290 = vmatprep.subr.mxu0 0.0
    %291 = vmatpush2.msra.mxu0 0.0
    %292 = vmatprep.subr.mxu0 0.0
    %293 = vmatpush2.msra.mxu0 0.0
    %294 = vmatprep.subr.mxu0 0.0
    %295 = vmatpush2.msra.mxu0 0.0
    %296 = vmatprep.subr.mxu0 0.0
    %297 = vmatpush2.msra.mxu0 0.0
    %298 = vmatprep.subr.mxu0 0.0
    %299 = vmatpush2.msra.mxu0 0.0
    %300 = vmatprep.subr.mxu0 0.0
    %301 = vmatpush2.msra.mxu0 0.0
    %302 = vmatprep.subr.mxu0 0.0
    %303 = vmatpush2.msra.mxu0 0.0
    %304 = vmatprep.subr.mxu0 0.0
    %305 = vmatpush2.msra.mxu0 0.0
    %306 = vmatprep.subr.mxu0 0.0
    %307 = vmatpush2.msra.mxu0 0.0
    %308 = vmatprep.mubr.f32.mxu0 0.0
    %v309 = vand.u32 %v45, 4294901760
    %v310 = vsub.f32 %v45, %v309
    %311 = vmatmul.mubr.f32.gmra.mxu0 %v310
    %v312 = vpop.f32.mrf.mxu0
    %v313 = vadd.f32 %v227, %v312
    %v314 = vpop.f32.mrf.mxu0
    %315 = vmatprep.mubr.f32.mxu0 0.0
    %v316 = vand.u32 %v48, 4294901760
    %v317 = vsub.f32 %v48, %v316
    %318 = vmatmul.mubr.f32.gmra.mxu0 %v317
    %v319 = vpop.f32.mrf.mxu0
    %v320 = vadd.f32 %v233, %v319
    %v321 = vpop.f32.mrf.mxu0
    %322 = vdwg.mxu0
    %323 = vmatprep.subr.mxu0 0.0
    %324 = vmatpush1.msra.mxu0 0.0
    %325 = vmatprep.subr.mxu0 0.0
    %326 = vmatpush1.msra.mxu0 0.0
    %327 = vmatprep.subr.mxu0 0.0
    %328 = vmatpush1.msra.mxu0 0.0
    %329 = vmatprep.subr.mxu0 0.0
    %330 = vmatpush1.msra.mxu0 0.0
    %331 = vmatprep.subr.mxu0 0.0
    %332 = vmatpush1.msra.mxu0 0.0
    %333 = vmatprep.subr.mxu0 0.0
    %334 = vmatpush1.msra.mxu0 0.0
    %335 = vmatprep.subr.mxu0 0.0
    %336 = vmatpush1.msra.mxu0 0.0
    %337 = vmatprep.subr.mxu0 0.0
    %338 = vmatpush1.msra.mxu0 0.0
    %339 = vmatprep.subr.mxu0 0.0
    %340 = vmatpush1.msra.mxu0 0.0
    %341 = vmatprep.subr.mxu0 0.0
    %342 = vmatpush1.msra.mxu0 0.0
    %343 = vmatprep.subr.mxu0 0.0
    %344 = vmatpush1.msra.mxu0 0.0
    %345 = vmatprep.subr.mxu0 0.0
    %346 = vmatpush1.msra.mxu0 0.0
    %347 = vmatprep.subr.mxu0 0.0
    %v348 = vand.u32 %v35, 4294901760
    %349 = vmatpush1.msra.mxu0 %v348
    %350 = vmatprep.subr.mxu0 0.0
    %v351 = vand.u32 %v34, 4294901760
    %352 = vmatpush1.msra.mxu0 %v351
    %353 = vmatprep.subr.mxu0 0.0
    %v354 = vand.u32 %v33, 4294901760
    %355 = vmatpush1.msra.mxu0 %v354
    %356 = vmatprep.subr.mxu0 0.0
    %v357 = vand.u32 %v32, 4294901760
    %358 = vmatpush1.msra.mxu0 %v357
    %359 = vmatprep.subr.mxu0 0.0
    %360 = vmatpush2.msra.mxu0 0.0
    %361 = vmatprep.subr.mxu0 0.0
    %362 = vmatpush2.msra.mxu0 0.0
    %363 = vmatprep.subr.mxu0 0.0
    %364 = vmatpush2.msra.mxu0 0.0
    %365 = vmatprep.subr.mxu0 0.0
    %366 = vmatpush2.msra.mxu0 0.0
    %367 = vmatprep.subr.mxu0 0.0
    %368 = vmatpush2.msra.mxu0 0.0
    %369 = vmatprep.subr.mxu0 0.0
    %370 = vmatpush2.msra.mxu0 0.0
    %371 = vmatprep.subr.mxu0 0.0
    %372 = vmatpush2.msra.mxu0 0.0
    %373 = vmatprep.subr.mxu0 0.0
    %374 = vmatpush2.msra.mxu0 0.0
    %375 = vmatprep.subr.mxu0 0.0
    %376 = vmatpush2.msra.mxu0 0.0
    %377 = vmatprep.subr.mxu0 0.0
    %378 = vmatpush2.msra.mxu0 0.0
    %379 = vmatprep.subr.mxu0 0.0
    %380 = vmatpush2.msra.mxu0 0.0
    %381 = vmatprep.subr.mxu0 0.0
    %382 = vmatpush2.msra.mxu0 0.0
    %383 = vmatprep.subr.mxu0 0.0
    %384 = vmatpush2.msra.mxu0 0.0
    %385 = vmatprep.subr.mxu0 0.0
    %386 = vmatpush2.msra.mxu0 0.0
    %387 = vmatprep.subr.mxu0 0.0
    %388 = vmatpush2.msra.mxu0 0.0
    %389 = vmatprep.subr.mxu0 0.0
    %390 = vmatpush2.msra.mxu0 0.0
    %391 = vmatprep.mubr.f32.mxu0 0.0
    %v392 = vand.u32 %v45, 4294901760
    %v393 = vsub.f32 %v45, %v392
    %v394 = vand.u32 %v393, 4294901760
    %395 = vmatmul.mubr.f32.gmra.mxu0 %v394
    %v396 = vpop.f32.mrf.mxu0
    %v397 = vadd.f32 %v313, %v396
    %v398 = vpop.f32.mrf.mxu0
    %399 = vmatprep.mubr.f32.mxu0 0.0
    %v400 = vand.u32 %v48, 4294901760
    %v401 = vsub.f32 %v48, %v400
    %v402 = vand.u32 %v401, 4294901760
    %403 = vmatmul.mubr.f32.gmra.mxu0 %v402
    %v404 = vpop.f32.mrf.mxu0
    %v405 = vadd.f32 %v320, %v404
    %v406 = vpop.f32.mrf.mxu0
    %407 = vdwg.mxu0
    %408 = vmatprep.subr.mxu0 0.0
    %409 = vmatpush1.msra.mxu0 0.0
    %410 = vmatprep.subr.mxu0 0.0
    %411 = vmatpush1.msra.mxu0 0.0
    %412 = vmatprep.subr.mxu0 0.0
    %413 = vmatpush1.msra.mxu0 0.0
    %414 = vmatprep.subr.mxu0 0.0
    %415 = vmatpush1.msra.mxu0 0.0
    %416 = vmatprep.subr.mxu0 0.0
    %417 = vmatpush1.msra.mxu0 0.0
    %418 = vmatprep.subr.mxu0 0.0
    %419 = vmatpush1.msra.mxu0 0.0
    %420 = vmatprep.subr.mxu0 0.0
    %421 = vmatpush1.msra.mxu0 0.0
    %422 = vmatprep.subr.mxu0 0.0
    %423 = vmatpush1.msra.mxu0 0.0
    %424 = vmatprep.subr.mxu0 0.0
    %425 = vmatpush1.msra.mxu0 0.0
    %426 = vmatprep.subr.mxu0 0.0
    %427 = vmatpush1.msra.mxu0 0.0
    %428 = vmatprep.subr.mxu0 0.0
    %429 = vmatpush1.msra.mxu0 0.0
    %430 = vmatprep.subr.mxu0 0.0
    %431 = vmatpush1.msra.mxu0 0.0
    %432 = vmatprep.subr.mxu0 0.0
    %v433 = vand.u32 %v35, 4294901760
    %v434 = vsub.f32 %v35, %v433
    %v435 = vand.u32 %v434, 4294901760
    %436 = vmatpush1.msra.mxu0 %v435
    %437 = vmatprep.subr.mxu0 0.0
    %v438 = vand.u32 %v34, 4294901760
    %v439 = vsub.f32 %v34, %v438
    %v440 = vand.u32 %v439, 4294901760
    %441 = vmatpush1.msra.mxu0 %v440
    %442 = vmatprep.subr.mxu0 0.0
    %v443 = vand.u32 %v33, 4294901760
    %v444 = vsub.f32 %v33, %v443
    %v445 = vand.u32 %v444, 4294901760
    %446 = vmatpush1.msra.mxu0 %v445
    %447 = vmatprep.subr.mxu0 0.0
    %v448 = vand.u32 %v32, 4294901760
    %v449 = vsub.f32 %v32, %v448
    %v450 = vand.u32 %v449, 4294901760
    %451 = vmatpush1.msra.mxu0 %v450
    %452 = vmatprep.subr.mxu0 0.0
    %453 = vmatpush2.msra.mxu0 0.0
    %454 = vmatprep.subr.mxu0 0.0
    %455 = vmatpush2.msra.mxu0 0.0
    %456 = vmatprep.subr.mxu0 0.0
    %457 = vmatpush2.msra.mxu0 0.0
    %458 = vmatprep.subr.mxu0 0.0
    %459 = vmatpush2.msra.mxu0 0.0
    %460 = vmatprep.subr.mxu0 0.0
    %461 = vmatpush2.msra.mxu0 0.0
    %462 = vmatprep.subr.mxu0 0.0
    %463 = vmatpush2.msra.mxu0 0.0
    %464 = vmatprep.subr.mxu0 0.0
    %465 = vmatpush2.msra.mxu0 0.0
    %466 = vmatprep.subr.mxu0 0.0
    %467 = vmatpush2.msra.mxu0 0.0
    %468 = vmatprep.subr.mxu0 0.0
    %469 = vmatpush2.msra.mxu0 0.0
    %470 = vmatprep.subr.mxu0 0.0
    %471 = vmatpush2.msra.mxu0 0.0
    %472 = vmatprep.subr.mxu0 0.0
    %473 = vmatpush2.msra.mxu0 0.0
    %474 = vmatprep.subr.mxu0 0.0
    %475 = vmatpush2.msra.mxu0 0.0
    %476 = vmatprep.subr.mxu0 0.0
    %477 = vmatpush2.msra.mxu0 0.0
    %478 = vmatprep.subr.mxu0 0.0
    %479 = vmatpush2.msra.mxu0 0.0
    %480 = vmatprep.subr.mxu0 0.0
    %481 = vmatpush2.msra.mxu0 0.0
    %482 = vmatprep.subr.mxu0 0.0
    %483 = vmatpush2.msra.mxu0 0.0
    %484 = vmatprep.mubr.f32.mxu0 0.0
    %v485 = vand.u32 %v45, 4294901760
    %486 = vmatmul.mubr.f32.gmra.mxu0 %v485
    %v487 = vpop.f32.mrf.mxu0
    %v488 = vadd.f32 %v397, %v487
    %v489 = vpop.f32.mrf.mxu0
    %490 = vmatprep.mubr.f32.mxu0 0.0
    %v491 = vand.u32 %v48, 4294901760
    %492 = vmatmul.mubr.f32.gmra.mxu0 %v491
    %v493 = vpop.f32.mrf.mxu0
    %v494 = vadd.f32 %v405, %v493
    %v495 = vpop.f32.mrf.mxu0
    %496 = vdwg.mxu0
    %497 = vmatprep.subr.mxu0 0.0
    %498 = vmatpush1.msra.mxu0 0.0
    %499 = vmatprep.subr.mxu0 0.0
    %500 = vmatpush1.msra.mxu0 0.0
    %501 = vmatprep.subr.mxu0 0.0
    %502 = vmatpush1.msra.mxu0 0.0
    %503 = vmatprep.subr.mxu0 0.0
    %504 = vmatpush1.msra.mxu0 0.0
    %505 = vmatprep.subr.mxu0 0.0
    %506 = vmatpush1.msra.mxu0 0.0
    %507 = vmatprep.subr.mxu0 0.0
    %508 = vmatpush1.msra.mxu0 0.0
    %509 = vmatprep.subr.mxu0 0.0
    %510 = vmatpush1.msra.mxu0 0.0
    %511 = vmatprep.subr.mxu0 0.0
    %512 = vmatpush1.msra.mxu0 0.0
    %513 = vmatprep.subr.mxu0 0.0
    %514 = vmatpush1.msra.mxu0 0.0
    %515 = vmatprep.subr.mxu0 0.0
    %516 = vmatpush1.msra.mxu0 0.0
    %517 = vmatprep.subr.mxu0 0.0
    %518 = vmatpush1.msra.mxu0 0.0
    %519 = vmatprep.subr.mxu0 0.0
    %520 = vmatpush1.msra.mxu0 0.0
    %521 = vmatprep.subr.mxu0 0.0
    %v522 = vand.u32 %v35, 4294901760
    %523 = vmatpush1.msra.mxu0 %v522
    %524 = vmatprep.subr.mxu0 0.0
    %v525 = vand.u32 %v34, 4294901760
    %526 = vmatpush1.msra.mxu0 %v525
    %527 = vmatprep.subr.mxu0 0.0
    %v528 = vand.u32 %v33, 4294901760
    %529 = vmatpush1.msra.mxu0 %v528
    %530 = vmatprep.subr.mxu0 0.0
    %v531 = vand.u32 %v32, 4294901760
    %532 = vmatpush1.msra.mxu0 %v531
    %533 = vmatprep.subr.mxu0 0.0
    %534 = vmatpush2.msra.mxu0 0.0
    %535 = vmatprep.subr.mxu0 0.0
    %536 = vmatpush2.msra.mxu0 0.0
    %537 = vmatprep.subr.mxu0 0.0
    %538 = vmatpush2.msra.mxu0 0.0
    %539 = vmatprep.subr.mxu0 0.0
    %540 = vmatpush2.msra.mxu0 0.0
    %541 = vmatprep.subr.mxu0 0.0
    %542 = vmatpush2.msra.mxu0 0.0
    %543 = vmatprep.subr.mxu0 0.0
    %544 = vmatpush2.msra.mxu0 0.0
    %545 = vmatprep.subr.mxu0 0.0
    %546 = vmatpush2.msra.mxu0 0.0
    %547 = vmatprep.subr.mxu0 0.0
    %548 = vmatpush2.msra.mxu0 0.0
    %549 = vmatprep.subr.mxu0 0.0
    %550 = vmatpush2.msra.mxu0 0.0
    %551 = vmatprep.subr.mxu0 0.0
    %552 = vmatpush2.msra.mxu0 0.0
    %553 = vmatprep.subr.mxu0 0.0
    %554 = vmatpush2.msra.mxu0 0.0
    %555 = vmatprep.subr.mxu0 0.0
    %556 = vmatpush2.msra.mxu0 0.0
    %557 = vmatprep.subr.mxu0 0.0
    %558 = vmatpush2.msra.mxu0 0.0
    %559 = vmatprep.subr.mxu0 0.0
    %560 = vmatpush2.msra.mxu0 0.0
    %561 = vmatprep.subr.mxu0 0.0
    %562 = vmatpush2.msra.mxu0 0.0
    %563 = vmatprep.subr.mxu0 0.0
    %564 = vmatpush2.msra.mxu0 0.0
    %565 = vmatprep.mubr.f32.mxu0 0.0
    %v566 = vand.u32 %v45, 4294901760
    %567 = vmatmul.mubr.f32.gmra.mxu0 %v566
    %v568 = vpop.f32.mrf.mxu0
    %v569 = vadd.f32 %v488, %v568
    %v570 = vpop.f32.mrf.mxu0
    %571 = vmatprep.mubr.f32.mxu0 0.0
    %v572 = vand.u32 %v48, 4294901760
    %573 = vmatmul.mubr.f32.gmra.mxu0 %v572
    %v574 = vpop.f32.mrf.mxu0
    %v575 = vadd.f32 %v494, %v574
    %v576 = vpop.f32.mrf.mxu0
    %577 = vdwg.mxu0
    %v578 = vmax.f32 %v569, 0.0
    %v579 = vmax.f32 %v575, 0.0
    %580 = vst.msk [vmem:[#allocation2] sm:$0xff] %vm43, %v578
    %581 = vst.msk [vmem:[#allocation2 + $0x8] sm:$0xff] %vm43, %v579
    %v582 = vld [vmem:[%s3] sm:$0xff]
    %v583 = vld [vmem:[%s3 + $0x8] sm:$0xff]
    %v584 = vld [vmem:[%s5] sm:$0xff]
    loop: start=0, step=1, limit=2
    $region34: #{tpu_custom_call.1} parent=1 // loop_pre_header
      _
    $region35: #{tpu_custom_call.1} parent=1 // loop_header
      %s586 = sphi 0, %s590
      %p587 = scmp.ge.s32.totalorder %s586, 2
    $region36: #{tpu_custom_call.1} parent=1 // loop_header_branch
      %589 = sbr.rel (%p587) target = $region40
    $region37: #{tpu_custom_call.1} parent=1 // loop_body
      %s591 = smul.u32 %s586, 8
      %s592 = scalar_lea.vmem [#allocation2], %s591
      %v593 = vld [vmem:[%s592] sm:$0xff]
      %vm594 = vcmask 64512
      %v596 = vsel %vm594, %v582, 0
      %v599 = vsel %vm594, %v583, 0
      %601 = vmatprep.subr.mxu0 0.0
      %602 = vmatpush1.msra.mxu0 0.0
      %603 = vmatprep.subr.mxu0 0.0
      %604 = vmatpush1.msra.mxu0 0.0
      %605 = vmatprep.subr.mxu0 0.0
      %606 = vmatpush1.msra.mxu0 0.0
      %607 = vmatprep.subr.mxu0 0.0
      %608 = vmatpush1.msra.mxu0 0.0
      %609 = vmatprep.subr.mxu0 0.0
      %610 = vmatpush1.msra.mxu0 0.0
      %611 = vmatprep.subr.mxu0 0.0
      %612 = vmatpush1.msra.mxu0 0.0
      %613 = vmatprep.subr.mxu0 0.0
      %614 = vmatpush1.msra.mxu0 0.0
      %615 = vmatprep.subr.mxu0 0.0
      %616 = vmatpush1.msra.mxu0 0.0
      %617 = vmatprep.subr.mxu0 0.0
      %618 = vmatpush1.msra.mxu0 0.0
      %619 = vmatprep.subr.mxu0 0.0
      %620 = vmatpush1.msra.mxu0 0.0
      %621 = vmatprep.subr.mxu0 0.0
      %622 = vmatpush1.msra.mxu0 0.0
      %623 = vmatprep.subr.mxu0 0.0
      %624 = vmatpush1.msra.mxu0 0.0
      %625 = vmatprep.subr.mxu0 0.0
      %626 = vmatpush1.msra.mxu0 0.0
      %627 = vmatprep.subr.mxu0 0.0
      %628 = vmatpush1.msra.mxu0 0.0
      %629 = vmatprep.subr.mxu0 0.0
      %630 = vmatpush1.msra.mxu0 0.0
      %631 = vmatprep.subr.mxu0 0.0
      %v632 = vand.u32 %v593, 4294901760
      %633 = vmatpush1.msra.mxu0 %v632
      %634 = vmatprep.subr.mxu0 0.0
      %635 = vmatpush2.msra.mxu0 0.0
      %636 = vmatprep.subr.mxu0 0.0
      %637 = vmatpush2.msra.mxu0 0.0
      %638 = vmatprep.subr.mxu0 0.0
      %639 = vmatpush2.msra.mxu0 0.0
      %640 = vmatprep.subr.mxu0 0.0
      %641 = vmatpush2.msra.mxu0 0.0
      %642 = vmatprep.subr.mxu0 0.0
      %643 = vmatpush2.msra.mxu0 0.0
      %644 = vmatprep.subr.mxu0 0.0
      %645 = vmatpush2.msra.mxu0 0.0
      %646 = vmatprep.subr.mxu0 0.0
      %647 = vmatpush2.msra.mxu0 0.0
      %648 = vmatprep.subr.mxu0 0.0
      %649 = vmatpush2.msra.mxu0 0.0
      %650 = vmatprep.subr.mxu0 0.0
      %651 = vmatpush2.msra.mxu0 0.0
      %652 = vmatprep.subr.mxu0 0.0
      %653 = vmatpush2.msra.mxu0 0.0
      %654 = vmatprep.subr.mxu0 0.0
      %655 = vmatpush2.msra.mxu0 0.0
      %656 = vmatprep.subr.mxu0 0.0
      %657 = vmatpush2.msra.mxu0 0.0
      %658 = vmatprep.subr.mxu0 0.0
      %659 = vmatpush2.msra.mxu0 0.0
      %660 = vmatprep.subr.mxu0 0.0
      %661 = vmatpush2.msra.mxu0 0.0
      %662 = vmatprep.subr.mxu0 0.0
      %663 = vmatpush2.msra.mxu0 0.0
      %664 = vmatprep.subr.mxu0 0.0
      %665 = vmatpush2.msra.mxu0 0.0
      %666 = vmatprep.mubr.f32.mxu0 0.0
      %v667 = vand.u32 %v596, 4294901760
      %v668 = vsub.f32 %v596, %v667
      %v669 = vand.u32 %v668, 4294901760
      %v670 = vsub.f32 %v668, %v669
      %v671 = vand.u32 %v670, 4294901760
      %672 = vmatmul.mubr.f32.gmra.mxu0 %v671
      %v673 = vpop.f32.mrf.mxu0
      %v674 = vadd.f32 0.0, %v673
      %v675 = vpop.f32.mrf.mxu0
      %676 = vmatprep.mubr.f32.mxu0 0.0
      %v677 = vand.u32 %v599, 4294901760
      %v678 = vsub.f32 %v599, %v677
      %v679 = vand.u32 %v678, 4294901760
      %v680 = vsub.f32 %v678, %v679
      %v681 = vand.u32 %v680, 4294901760
      %682 = vmatmul.mubr.f32.gmra.mxu0 %v681
      %v683 = vpop.f32.mrf.mxu0
      %v684 = vadd.f32 0.0, %v683
      %v685 = vpop.f32.mrf.mxu0
      %686 = vdwg.mxu0
      %687 = vmatprep.subr.mxu0 0.0
      %688 = vmatpush1.msra.mxu0 0.0
      %689 = vmatprep.subr.mxu0 0.0
      %690 = vmatpush1.msra.mxu0 0.0
      %691 = vmatprep.subr.mxu0 0.0
      %692 = vmatpush1.msra.mxu0 0.0
      %693 = vmatprep.subr.mxu0 0.0
      %694 = vmatpush1.msra.mxu0 0.0
      %695 = vmatprep.subr.mxu0 0.0
      %696 = vmatpush1.msra.mxu0 0.0
      %697 = vmatprep.subr.mxu0 0.0
      %698 = vmatpush1.msra.mxu0 0.0
      %699 = vmatprep.subr.mxu0 0.0
      %700 = vmatpush1.msra.mxu0 0.0
      %701 = vmatprep.subr.mxu0 0.0
      %702 = vmatpush1.msra.mxu0 0.0
      %703 = vmatprep.subr.mxu0 0.0
      %704 = vmatpush1.msra.mxu0 0.0
      %705 = vmatprep.subr.mxu0 0.0
      %706 = vmatpush1.msra.mxu0 0.0
      %707 = vmatprep.subr.mxu0 0.0
      %708 = vmatpush1.msra.mxu0 0.0
      %709 = vmatprep.subr.mxu0 0.0
      %710 = vmatpush1.msra.mxu0 0.0
      %711 = vmatprep.subr.mxu0 0.0
      %712 = vmatpush1.msra.mxu0 0.0
      %713 = vmatprep.subr.mxu0 0.0
      %714 = vmatpush1.msra.mxu0 0.0
      %715 = vmatprep.subr.mxu0 0.0
      %716 = vmatpush1.msra.mxu0 0.0
      %717 = vmatprep.subr.mxu0 0.0
      %v718 = vand.u32 %v593, 4294901760
      %v719 = vsub.f32 %v593, %v718
      %v720 = vand.u32 %v719, 4294901760
      %v721 = vsub.f32 %v719, %v720
      %v722 = vand.u32 %v721, 4294901760
      %723 = vmatpush1.msra.mxu0 %v722
      %724 = vmatprep.subr.mxu0 0.0
      %725 = vmatpush2.msra.mxu0 0.0
      %726 = vmatprep.subr.mxu0 0.0
      %727 = vmatpush2.msra.mxu0 0.0
      %728 = vmatprep.subr.mxu0 0.0
      %729 = vmatpush2.msra.mxu0 0.0
      %730 = vmatprep.subr.mxu0 0.0
      %731 = vmatpush2.msra.mxu0 0.0
      %732 = vmatprep.subr.mxu0 0.0
      %733 = vmatpush2.msra.mxu0 0.0
      %734 = vmatprep.subr.mxu0 0.0
      %735 = vmatpush2.msra.mxu0 0.0
      %736 = vmatprep.subr.mxu0 0.0
      %737 = vmatpush2.msra.mxu0 0.0
      %738 = vmatprep.subr.mxu0 0.0
      %739 = vmatpush2.msra.mxu0 0.0
      %740 = vmatprep.subr.mxu0 0.0
      %741 = vmatpush2.msra.mxu0 0.0
      %742 = vmatprep.subr.mxu0 0.0
      %743 = vmatpush2.msra.mxu0 0.0
      %744 = vmatprep.subr.mxu0 0.0
      %745 = vmatpush2.msra.mxu0 0.0
      %746 = vmatprep.subr.mxu0 0.0
      %747 = vmatpush2.msra.mxu0 0.0
      %748 = vmatprep.subr.mxu0 0.0
      %749 = vmatpush2.msra.mxu0 0.0
      %750 = vmatprep.subr.mxu0 0.0
      %751 = vmatpush2.msra.mxu0 0.0
      %752 = vmatprep.subr.mxu0 0.0
      %753 = vmatpush2.msra.mxu0 0.0
      %754 = vmatprep.subr.mxu0 0.0
      %755 = vmatpush2.msra.mxu0 0.0
      %756 = vmatprep.mubr.f32.mxu0 0.0
      %v757 = vand.u32 %v596, 4294901760
      %758 = vmatmul.mubr.f32.gmra.mxu0 %v757
      %v759 = vpop.f32.mrf.mxu0
      %v760 = vadd.f32 %v674, %v759
      %v761 = vpop.f32.mrf.mxu0
      %762 = vmatprep.mubr.f32.mxu0 0.0
      %v763 = vand.u32 %v599, 4294901760
      %764 = vmatmul.mubr.f32.gmra.mxu0 %v763
      %v765 = vpop.f32.mrf.mxu0
      %v766 = vadd.f32 %v684, %v765
      %v767 = vpop.f32.mrf.mxu0
      %768 = vdwg.mxu0
      %769 = vmatprep.subr.mxu0 0.0
      %770 = vmatpush1.msra.mxu0 0.0
      %771 = vmatprep.subr.mxu0 0.0
      %772 = vmatpush1.msra.mxu0 0.0
      %773 = vmatprep.subr.mxu0 0.0
      %774 = vmatpush1.msra.mxu0 0.0
      %775 = vmatprep.subr.mxu0 0.0
      %776 = vmatpush1.msra.mxu0 0.0
      %777 = vmatprep.subr.mxu0 0.0
      %778 = vmatpush1.msra.mxu0 0.0
      %779 = vmatprep.subr.mxu0 0.0
      %780 = vmatpush1.msra.mxu0 0.0
      %781 = vmatprep.subr.mxu0 0.0
      %782 = vmatpush1.msra.mxu0 0.0
      %783 = vmatprep.subr.mxu0 0.0
      %784 = vmatpush1.msra.mxu0 0.0
      %785 = vmatprep.subr.mxu0 0.0
      %786 = vmatpush1.msra.mxu0 0.0
      %787 = vmatprep.subr.mxu0 0.0
      %788 = vmatpush1.msra.mxu0 0.0
      %789 = vmatprep.subr.mxu0 0.0
      %790 = vmatpush1.msra.mxu0 0.0
      %791 = vmatprep.subr.mxu0 0.0
      %792 = vmatpush1.msra.mxu0 0.0
      %793 = vmatprep.subr.mxu0 0.0
      %794 = vmatpush1.msra.mxu0 0.0
      %795 = vmatprep.subr.mxu0 0.0
      %796 = vmatpush1.msra.mxu0 0.0
      %797 = vmatprep.subr.mxu0 0.0
      %798 = vmatpush1.msra.mxu0 0.0
      %799 = vmatprep.subr.mxu0 0.0
      %v800 = vand.u32 %v593, 4294901760
      %v801 = vsub.f32 %v593, %v800
      %802 = vmatpush1.msra.mxu0 %v801
      %803 = vmatprep.subr.mxu0 0.0
      %804 = vmatpush2.msra.mxu0 0.0
      %805 = vmatprep.subr.mxu0 0.0
      %806 = vmatpush2.msra.mxu0 0.0
      %807 = vmatprep.subr.mxu0 0.0
      %808 = vmatpush2.msra.mxu0 0.0
      %809 = vmatprep.subr.mxu0 0.0
      %810 = vmatpush2.msra.mxu0 0.0
      %811 = vmatprep.subr.mxu0 0.0
      %812 = vmatpush2.msra.mxu0 0.0
      %813 = vmatprep.subr.mxu0 0.0
      %814 = vmatpush2.msra.mxu0 0.0
      %815 = vmatprep.subr.mxu0 0.0
      %816 = vmatpush2.msra.mxu0 0.0
      %817 = vmatprep.subr.mxu0 0.0
      %818 = vmatpush2.msra.mxu0 0.0
      %819 = vmatprep.subr.mxu0 0.0
      %820 = vmatpush2.msra.mxu0 0.0
      %821 = vmatprep.subr.mxu0 0.0
      %822 = vmatpush2.msra.mxu0 0.0
      %823 = vmatprep.subr.mxu0 0.0
      %824 = vmatpush2.msra.mxu0 0.0
      %825 = vmatprep.subr.mxu0 0.0
      %826 = vmatpush2.msra.mxu0 0.0
      %827 = vmatprep.subr.mxu0 0.0
      %828 = vmatpush2.msra.mxu0 0.0
      %829 = vmatprep.subr.mxu0 0.0
      %830 = vmatpush2.msra.mxu0 0.0
      %831 = vmatprep.subr.mxu0 0.0
      %832 = vmatpush2.msra.mxu0 0.0
      %833 = vmatprep.subr.mxu0 0.0
      %834 = vmatpush2.msra.mxu0 0.0
      %835 = vmatprep.mubr.f32.mxu0 0.0
      %v836 = vand.u32 %v596, 4294901760
      %v837 = vsub.f32 %v596, %v836
      %838 = vmatmul.mubr.f32.gmra.mxu0 %v837
      %v839 = vpop.f32.mrf.mxu0
      %v840 = vadd.f32 %v760, %v839
      %v841 = vpop.f32.mrf.mxu0
      %842 = vmatprep.mubr.f32.mxu0 0.0
      %v843 = vand.u32 %v599, 4294901760
      %v844 = vsub.f32 %v599, %v843
      %845 = vmatmul.mubr.f32.gmra.mxu0 %v844
      %v846 = vpop.f32.mrf.mxu0
      %v847 = vadd.f32 %v766, %v846
      %v848 = vpop.f32.mrf.mxu0
      %849 = vdwg.mxu0
      %850 = vmatprep.subr.mxu0 0.0
      %851 = vmatpush1.msra.mxu0 0.0
      %852 = vmatprep.subr.mxu0 0.0
      %853 = vmatpush1.msra.mxu0 0.0
      %854 = vmatprep.subr.mxu0 0.0
      %855 = vmatpush1.msra.mxu0 0.0
      %856 = vmatprep.subr.mxu0 0.0
      %857 = vmatpush1.msra.mxu0 0.0
      %858 = vmatprep.subr.mxu0 0.0
      %859 = vmatpush1.msra.mxu0 0.0
      %860 = vmatprep.subr.mxu0 0.0
      %861 = vmatpush1.msra.mxu0 0.0
      %862 = vmatprep.subr.mxu0 0.0
      %863 = vmatpush1.msra.mxu0 0.0
      %864 = vmatprep.subr.mxu0 0.0
      %865 = vmatpush1.msra.mxu0 0.0
      %866 = vmatprep.subr.mxu0 0.0
      %867 = vmatpush1.msra.mxu0 0.0
      %868 = vmatprep.subr.mxu0 0.0
      %869 = vmatpush1.msra.mxu0 0.0
      %870 = vmatprep.subr.mxu0 0.0
      %871 = vmatpush1.msra.mxu0 0.0
      %872 = vmatprep.subr.mxu0 0.0
      %873 = vmatpush1.msra.mxu0 0.0
      %874 = vmatprep.subr.mxu0 0.0
      %875 = vmatpush1.msra.mxu0 0.0
      %876 = vmatprep.subr.mxu0 0.0
      %877 = vmatpush1.msra.mxu0 0.0
      %878 = vmatprep.subr.mxu0 0.0
      %879 = vmatpush1.msra.mxu0 0.0
      %880 = vmatprep.subr.mxu0 0.0
      %v881 = vand.u32 %v593, 4294901760
      %882 = vmatpush1.msra.mxu0 %v881
      %883 = vmatprep.subr.mxu0 0.0
      %884 = vmatpush2.msra.mxu0 0.0
      %885 = vmatprep.subr.mxu0 0.0
      %886 = vmatpush2.msra.mxu0 0.0
      %887 = vmatprep.subr.mxu0 0.0
      %888 = vmatpush2.msra.mxu0 0.0
      %889 = vmatprep.subr.mxu0 0.0
      %890 = vmatpush2.msra.mxu0 0.0
      %891 = vmatprep.subr.mxu0 0.0
      %892 = vmatpush2.msra.mxu0 0.0
      %893 = vmatprep.subr.mxu0 0.0
      %894 = vmatpush2.msra.mxu0 0.0
      %895 = vmatprep.subr.mxu0 0.0
      %896 = vmatpush2.msra.mxu0 0.0
      %897 = vmatprep.subr.mxu0 0.0
      %898 = vmatpush2.msra.mxu0 0.0
      %899 = vmatprep.subr.mxu0 0.0
      %900 = vmatpush2.msra.mxu0 0.0
      %901 = vmatprep.subr.mxu0 0.0
      %902 = vmatpush2.msra.mxu0 0.0
      %903 = vmatprep.subr.mxu0 0.0
      %904 = vmatpush2.msra.mxu0 0.0
      %905 = vmatprep.subr.mxu0 0.0
      %906 = vmatpush2.msra.mxu0 0.0
      %907 = vmatprep.subr.mxu0 0.0
      %908 = vmatpush2.msra.mxu0 0.0
      %909 = vmatprep.subr.mxu0 0.0
      %910 = vmatpush2.msra.mxu0 0.0
      %911 = vmatprep.subr.mxu0 0.0
      %912 = vmatpush2.msra.mxu0 0.0
      %913 = vmatprep.subr.mxu0 0.0
      %914 = vmatpush2.msra.mxu0 0.0
      %915 = vmatprep.mubr.f32.mxu0 0.0
      %v916 = vand.u32 %v596, 4294901760
      %v917 = vsub.f32 %v596, %v916
      %v918 = vand.u32 %v917, 4294901760
      %919 = vmatmul.mubr.f32.gmra.mxu0 %v918
      %v920 = vpop.f32.mrf.mxu0
      %v921 = vadd.f32 %v840, %v920
      %v922 = vpop.f32.mrf.mxu0
      %923 = vmatprep.mubr.f32.mxu0 0.0
      %v924 = vand.u32 %v599, 4294901760
      %v925 = vsub.f32 %v599, %v924
      %v926 = vand.u32 %v925, 4294901760
      %927 = vmatmul.mubr.f32.gmra.mxu0 %v926
      %v928 = vpop.f32.mrf.mxu0
      %v929 = vadd.f32 %v847, %v928
      %v930 = vpop.f32.mrf.mxu0
      %931 = vdwg.mxu0
      %932 = vmatprep.subr.mxu0 0.0
      %933 = vmatpush1.msra.mxu0 0.0
      %934 = vmatprep.subr.mxu0 0.0
      %935 = vmatpush1.msra.mxu0 0.0
      %936 = vmatprep.subr.mxu0 0.0
      %937 = vmatpush1.msra.mxu0 0.0
      %938 = vmatprep.subr.mxu0 0.0
      %939 = vmatpush1.msra.mxu0 0.0
      %940 = vmatprep.subr.mxu0 0.0
      %941 = vmatpush1.msra.mxu0 0.0
      %942 = vmatprep.subr.mxu0 0.0
      %943 = vmatpush1.msra.mxu0 0.0
      %944 = vmatprep.subr.mxu0 0.0
      %945 = vmatpush1.msra.mxu0 0.0
      %946 = vmatprep.subr.mxu0 0.0
      %947 = vmatpush1.msra.mxu0 0.0
      %948 = vmatprep.subr.mxu0 0.0
      %949 = vmatpush1.msra.mxu0 0.0
      %950 = vmatprep.subr.mxu0 0.0
      %951 = vmatpush1.msra.mxu0 0.0
      %952 = vmatprep.subr.mxu0 0.0
      %953 = vmatpush1.msra.mxu0 0.0
      %954 = vmatprep.subr.mxu0 0.0
      %955 = vmatpush1.msra.mxu0 0.0
      %956 = vmatprep.subr.mxu0 0.0
      %957 = vmatpush1.msra.mxu0 0.0
      %958 = vmatprep.subr.mxu0 0.0
      %959 = vmatpush1.msra.mxu0 0.0
      %960 = vmatprep.subr.mxu0 0.0
      %961 = vmatpush1.msra.mxu0 0.0
      %962 = vmatprep.subr.mxu0 0.0
      %v963 = vand.u32 %v593, 4294901760
      %v964 = vsub.f32 %v593, %v963
      %v965 = vand.u32 %v964, 4294901760
      %966 = vmatpush1.msra.mxu0 %v965
      %967 = vmatprep.subr.mxu0 0.0
      %968 = vmatpush2.msra.mxu0 0.0
      %969 = vmatprep.subr.mxu0 0.0
      %970 = vmatpush2.msra.mxu0 0.0
      %971 = vmatprep.subr.mxu0 0.0
      %972 = vmatpush2.msra.mxu0 0.0
      %973 = vmatprep.subr.mxu0 0.0
      %974 = vmatpush2.msra.mxu0 0.0
      %975 = vmatprep.subr.mxu0 0.0
      %976 = vmatpush2.msra.mxu0 0.0
      %977 = vmatprep.subr.mxu0 0.0
      %978 = vmatpush2.msra.mxu0 0.0
      %979 = vmatprep.subr.mxu0 0.0
      %980 = vmatpush2.msra.mxu0 0.0
      %981 = vmatprep.subr.mxu0 0.0
      %982 = vmatpush2.msra.mxu0 0.0
      %983 = vmatprep.subr.mxu0 0.0
      %984 = vmatpush2.msra.mxu0 0.0
      %985 = vmatprep.subr.mxu0 0.0
      %986 = vmatpush2.msra.mxu0 0.0
      %987 = vmatprep.subr.mxu0 0.0
      %988 = vmatpush2.msra.mxu0 0.0
      %989 = vmatprep.subr.mxu0 0.0
      %990 = vmatpush2.msra.mxu0 0.0
      %991 = vmatprep.subr.mxu0 0.0
      %992 = vmatpush2.msra.mxu0 0.0
      %993 = vmatprep.subr.mxu0 0.0
      %994 = vmatpush2.msra.mxu0 0.0
      %995 = vmatprep.subr.mxu0 0.0
      %996 = vmatpush2.msra.mxu0 0.0
      %997 = vmatprep.subr.mxu0 0.0
      %998 = vmatpush2.msra.mxu0 0.0
      %999 = vmatprep.mubr.f32.mxu0 0.0
      %v1000 = vand.u32 %v596, 4294901760
      %1001 = vmatmul.mubr.f32.gmra.mxu0 %v1000
      %v1002 = vpop.f32.mrf.mxu0
      %v1003 = vadd.f32 %v921, %v1002
      %v1004 = vpop.f32.mrf.mxu0
      %1005 = vmatprep.mubr.f32.mxu0 0.0
      %v1006 = vand.u32 %v599, 4294901760
      %1007 = vmatmul.mubr.f32.gmra.mxu0 %v1006
      %v1008 = vpop.f32.mrf.mxu0
      %v1009 = vadd.f32 %v929, %v1008
      %v1010 = vpop.f32.mrf.mxu0
      %1011 = vdwg.mxu0
      %1012 = vmatprep.subr.mxu0 0.0
      %1013 = vmatpush1.msra.mxu0 0.0
      %1014 = vmatprep.subr.mxu0 0.0
      %1015 = vmatpush1.msra.mxu0 0.0
      %1016 = vmatprep.subr.mxu0 0.0
      %1017 = vmatpush1.msra.mxu0 0.0
      %1018 = vmatprep.subr.mxu0 0.0
      %1019 = vmatpush1.msra.mxu0 0.0
      %1020 = vmatprep.subr.mxu0 0.0
      %1021 = vmatpush1.msra.mxu0 0.0
      %1022 = vmatprep.subr.mxu0 0.0
      %1023 = vmatpush1.msra.mxu0 0.0
      %1024 = vmatprep.subr.mxu0 0.0
      %1025 = vmatpush1.msra.mxu0 0.0
      %1026 = vmatprep.subr.mxu0 0.0
      %1027 = vmatpush1.msra.mxu0 0.0
      %1028 = vmatprep.subr.mxu0 0.0
      %1029 = vmatpush1.msra.mxu0 0.0
      %1030 = vmatprep.subr.mxu0 0.0
      %1031 = vmatpush1.msra.mxu0 0.0
      %1032 = vmatprep.subr.mxu0 0.0
      %1033 = vmatpush1.msra.mxu0 0.0
      %1034 = vmatprep.subr.mxu0 0.0
      %1035 = vmatpush1.msra.mxu0 0.0
      %1036 = vmatprep.subr.mxu0 0.0
      %1037 = vmatpush1.msra.mxu0 0.0
      %1038 = vmatprep.subr.mxu0 0.0
      %1039 = vmatpush1.msra.mxu0 0.0
      %1040 = vmatprep.subr.mxu0 0.0
      %1041 = vmatpush1.msra.mxu0 0.0
      %1042 = vmatprep.subr.mxu0 0.0
      %v1043 = vand.u32 %v593, 4294901760
      %1044 = vmatpush1.msra.mxu0 %v1043
      %1045 = vmatprep.subr.mxu0 0.0
      %1046 = vmatpush2.msra.mxu0 0.0
      %1047 = vmatprep.subr.mxu0 0.0
      %1048 = vmatpush2.msra.mxu0 0.0
      %1049 = vmatprep.subr.mxu0 0.0
      %1050 = vmatpush2.msra.mxu0 0.0
      %1051 = vmatprep.subr.mxu0 0.0
      %1052 = vmatpush2.msra.mxu0 0.0
      %1053 = vmatprep.subr.mxu0 0.0
      %1054 = vmatpush2.msra.mxu0 0.0
      %1055 = vmatprep.subr.mxu0 0.0
      %1056 = vmatpush2.msra.mxu0 0.0
      %1057 = vmatprep.subr.mxu0 0.0
      %1058 = vmatpush2.msra.mxu0 0.0
      %1059 = vmatprep.subr.mxu0 0.0
      %1060 = vmatpush2.msra.mxu0 0.0
      %1061 = vmatprep.subr.mxu0 0.0
      %1062 = vmatpush2.msra.mxu0 0.0
      %1063 = vmatprep.subr.mxu0 0.0
      %1064 = vmatpush2.msra.mxu0 0.0
      %1065 = vmatprep.subr.mxu0 0.0
      %1066 = vmatpush2.msra.mxu0 0.0
      %1067 = vmatprep.subr.mxu0 0.0
      %1068 = vmatpush2.msra.mxu0 0.0
      %1069 = vmatprep.subr.mxu0 0.0
      %1070 = vmatpush2.msra.mxu0 0.0
      %1071 = vmatprep.subr.mxu0 0.0
      %1072 = vmatpush2.msra.mxu0 0.0
      %1073 = vmatprep.subr.mxu0 0.0
      %1074 = vmatpush2.msra.mxu0 0.0
      %1075 = vmatprep.subr.mxu0 0.0
      %1076 = vmatpush2.msra.mxu0 0.0
      %1077 = vmatprep.mubr.f32.mxu0 0.0
      %v1078 = vand.u32 %v596, 4294901760
      %1079 = vmatmul.mubr.f32.gmra.mxu0 %v1078
      %v1080 = vpop.f32.mrf.mxu0
      %v1081 = vadd.f32 %v1003, %v1080
      %v1082 = vpop.f32.mrf.mxu0
      %1083 = vmatprep.mubr.f32.mxu0 0.0
      %v1084 = vand.u32 %v599, 4294901760
      %1085 = vmatmul.mubr.f32.gmra.mxu0 %v1084
      %v1086 = vpop.f32.mrf.mxu0
      %v1087 = vadd.f32 %v1009, %v1086
      %v1088 = vpop.f32.mrf.mxu0
      %1089 = vdwg.mxu0
      %1091 = vrot.lane.b32.xlu0 %v1081, 32
      %v1092 = vpop.permute.xlu0 %1091
      %vm1094 = vcmask 523520
      %1095 = vst.msk [vmem:[%s592] sm:$0xff] %vm1094, %v1092
      %1097 = vrot.lane.b32.xlu0 %v1087, 64
      %v1098 = vpop.permute.xlu0 %1097
      %vm1100 = vcmask 785920
      %1101 = vst.msk [vmem:[%s592] sm:$0xff] %vm1100, %v1098
      %s1102 = sshra.s32 %s591, 3
      %s1103 = sand.u32 %s591, 7
      %s1104 = smul.u32 %s1102, 7
      %s1105 = smul.addr %s1104, 8
      %s1106 = scalar_lea.vmem [#allocation3], %s1105
      %1107 = vst.msk [vmem:[%s1106 + $0x30] sm:$0xff] %vm594, %v584
    $region38: #{tpu_custom_call.1} parent=1 // loop_footer
      %s590 = sadd.s32 1, %s586
    $region39: #{tpu_custom_call.1} parent=1 // loop_footer_branch
      %585 = sbr.rel target = $region35
    $region40: #{tpu_custom_call.1} parent=1 // loop_exit
      _
    %v1108 = vld [vmem:[#allocation2] sm:$0xff]
    %v1109 = vld [vmem:[#allocation2 + $0x8] sm:$0xff]
    %v1110 = vld [vmem:[#allocation3 + $0x30] sm:$0xff]
    %v1111 = vld [vmem:[#allocation3 + $0x68] sm:$0xff]
    %1113 = vset.pattern.permute.xlu0 0
    %1114 = vperm.xlu0 %1113, %v1110
    %v1115 = vpop.permute.xlu0 %1114
    %1118 = vset.pattern.permute.xlu0 0
    %1119 = vperm.xlu0 %1118, %v1111
    %v1120 = vpop.permute.xlu0 %1119
    %v1122 = vmul.f32 %v1115, %v1108
    %v1123 = vmul.f32 %v1120, %v1109
    %vm1124 = vcmask 785408
    %1125 = vst.msk [vmem:[#allocation3] sm:$0xff] %vm1124, %v1122
    %1126 = vst.msk [vmem:[#allocation3 + $0x38] sm:$0xff] %vm1124, %v1123
    %1127 = vset.pattern.permute.xlu0 1
    %1128 = vperm.xlu0 %1127, %v1110
    %v1129 = vpop.permute.xlu0 %1128
    %1131 = vset.pattern.permute.xlu0 1
    %1132 = vperm.xlu0 %1131, %v1111
    %v1133 = vpop.permute.xlu0 %1132
    %v1135 = vmul.f32 %v1129, %v1108
    %v1136 = vmul.f32 %v1133, %v1109
    %1139 = vrot.lane.b32.xlu0 %v1135, 96
    %v1140 = vpop.permute.xlu0 %1139
    %1141 = vrot.lane.b32.xlu0 %v1136, 96
    %v1142 = vpop.permute.xlu0 %1141
    %vm1145 = vcmask 1048320
    %1146 = vst.msk [vmem:[#allocation3] sm:$0xff] %vm1145, %v1140
    %vm1147 = vcmask 523264
    %1148 = vst.msk [vmem:[#allocation3 + $0x8] sm:$0xff] %vm1147, %v1140
    %1149 = vst.msk [vmem:[#allocation3 + $0x38] sm:$0xff] %vm1145, %v1142
    %1150 = vst.msk [vmem:[#allocation3 + $0x40] sm:$0xff] %vm1147, %v1142
    %1151 = vset.pattern.permute.xlu0 2
    %1152 = vperm.xlu0 %1151, %v1110
    %v1153 = vpop.permute.xlu0 %1152
    %1155 = vset.pattern.permute.xlu0 2
    %1156 = vperm.xlu0 %1155, %v1111
    %v1157 = vpop.permute.xlu0 %1156
    %v1159 = vmul.f32 %v1153, %v1108
    %v1160 = vmul.f32 %v1157, %v1109
    %1163 = vrot.lane.b32.xlu0 %v1159, 64
    %v1164 = vpop.permute.xlu0 %1163
    %1165 = vrot.lane.b32.xlu0 %v1160, 64
    %v1166 = vpop.permute.xlu0 %1165
    %vm1169 = vcmask 1048064
    %1170 = vst.msk [vmem:[#allocation3 + $0x8] sm:$0xff] %vm1169, %v1164
    %1171 = vst.msk [vmem:[#allocation3 + $0x10] sm:$0xff] %vm43, %v1164
    %1172 = vst.msk [vmem:[#allocation3 + $0x40] sm:$0xff] %vm1169, %v1166
    %1173 = vst.msk [vmem:[#allocation3 + $0x48] sm:$0xff] %vm43, %v1166
    %1174 = vset.pattern.permute.xlu0 3
    %1175 = vperm.xlu0 %1174, %v1110
    %v1176 = vpop.permute.xlu0 %1175
    %1178 = vset.pattern.permute.xlu0 3
    %1179 = vperm.xlu0 %1178, %v1111
    %v1180 = vpop.permute.xlu0 %1179
    %v1182 = vmul.f32 %v1176, %v1108
    %v1183 = vmul.f32 %v1180, %v1109
    %1186 = vrot.lane.b32.xlu0 %v1182, 32
    %v1187 = vpop.permute.xlu0 %1186
    %1188 = vrot.lane.b32.xlu0 %v1183, 32
    %v1189 = vpop.permute.xlu0 %1188
    %vm1192 = vcmask 1047808
    %1193 = vst.msk [vmem:[#allocation3 + $0x10] sm:$0xff] %vm1192, %v1187
    %1194 = vst.msk [vmem:[#allocation3 + $0x48] sm:$0xff] %vm1192, %v1189
    %1195 = vset.pattern.permute.xlu0 4
    %1196 = vperm.xlu0 %1195, %v1110
    %v1197 = vpop.permute.xlu0 %1196
    %1199 = vset.pattern.permute.xlu0 4
    %1200 = vperm.xlu0 %1199, %v1111
    %v1201 = vpop.permute.xlu0 %1200
    %v1203 = vmul.f32 %v1197, %v1108
    %v1204 = vmul.f32 %v1201, %v1109
    %1205 = vst.msk [vmem:[#allocation3 + $0x18] sm:$0xff] %vm1124, %v1203
    %1206 = vst.msk [vmem:[#allocation3 + $0x50] sm:$0xff] %vm1124, %v1204
    %1207 = vset.pattern.permute.xlu0 5
    %1208 = vperm.xlu0 %1207, %v1110
    %v1209 = vpop.permute.xlu0 %1208
    %1211 = vset.pattern.permute.xlu0 5
    %1212 = vperm.xlu0 %1211, %v1111
    %v1213 = vpop.permute.xlu0 %1212
    %v1215 = vmul.f32 %v1209, %v1108
    %v1216 = vmul.f32 %v1213, %v1109
    %1219 = vrot.lane.b32.xlu0 %v1215, 96
    %v1220 = vpop.permute.xlu0 %1219
    %1221 = vrot.lane.b32.xlu0 %v1216, 96
    %v1222 = vpop.permute.xlu0 %1221
    %1225 = vst.msk [vmem:[#allocation3 + $0x18] sm:$0xff] %vm1145, %v1220
    %1226 = vst.msk [vmem:[#allocation3 + $0x20] sm:$0xff] %vm1147, %v1220
    %1227 = vst.msk [vmem:[#allocation3 + $0x50] sm:$0xff] %vm1145, %v1222
    %1228 = vst.msk [vmem:[#allocation3 + $0x58] sm:$0xff] %vm1147, %v1222
    %1229 = vset.pattern.permute.xlu0 6
    %1230 = vperm.xlu0 %1229, %v1110
    %v1231 = vpop.permute.xlu0 %1230
    %1233 = vset.pattern.permute.xlu0 6
    %1234 = vperm.xlu0 %1233, %v1111
    %v1235 = vpop.permute.xlu0 %1234
    %v1237 = vmul.f32 %v1231, %v1108
    %v1238 = vmul.f32 %v1235, %v1109
    %1241 = vrot.lane.b32.xlu0 %v1237, 64
    %v1242 = vpop.permute.xlu0 %1241
    %1243 = vrot.lane.b32.xlu0 %v1238, 64
    %v1244 = vpop.permute.xlu0 %1243
    %1247 = vst.msk [vmem:[#allocation3 + $0x20] sm:$0xff] %vm1169, %v1242
    %1248 = vst.msk [vmem:[#allocation3 + $0x28] sm:$0xff] %vm43, %v1242
    %1249 = vst.msk [vmem:[#allocation3 + $0x58] sm:$0xff] %vm1169, %v1244
    %1250 = vst.msk [vmem:[#allocation3 + $0x60] sm:$0xff] %vm43, %v1244
    %1251 = vset.pattern.permute.xlu0 7
    %1252 = vperm.xlu0 %1251, %v1110
    %v1253 = vpop.permute.xlu0 %1252
    %1255 = vset.pattern.permute.xlu0 7
    %1256 = vperm.xlu0 %1255, %v1111
    %v1257 = vpop.permute.xlu0 %1256
    %v1259 = vmul.f32 %v1253, %v1108
    %v1260 = vmul.f32 %v1257, %v1109
    %1263 = vrot.lane.b32.xlu0 %v1259, 32
    %v1264 = vpop.permute.xlu0 %1263
    %1265 = vrot.lane.b32.xlu0 %v1260, 32
    %v1266 = vpop.permute.xlu0 %1265
    %1269 = vst.msk [vmem:[#allocation3 + $0x28] sm:$0xff] %vm1192, %v1264
    %1270 = vst.msk [vmem:[#allocation3 + $0x60] sm:$0xff] %vm1192, %v1266
    %v1271 = vld [vmem:[#allocation3] sm:$0xff]
    %v1272 = vld [vmem:[#allocation3 + $0x8] sm:$0xff]
    %v1273 = vld [vmem:[#allocation3 + $0x10] sm:$0xff]
    %v1274 = vld [vmem:[#allocation3 + $0x18] sm:$0xff]
    %v1275 = vld [vmem:[#allocation3 + $0x20] sm:$0xff]
    %v1276 = vld [vmem:[#allocation3 + $0x28] sm:$0xff]
    %v1277 = vld [vmem:[#allocation3 + $0x30] sm:$0xff]
    %v1278 = vld [vmem:[#allocation3 + $0x38] sm:$0xff]
    %v1279 = vld [vmem:[#allocation3 + $0x40] sm:$0xff]
    %v1280 = vld [vmem:[#allocation3 + $0x48] sm:$0xff]
    %v1281 = vld [vmem:[#allocation3 + $0x50] sm:$0xff]
    %v1282 = vld [vmem:[#allocation3 + $0x58] sm:$0xff]
    %v1283 = vld [vmem:[#allocation3 + $0x60] sm:$0xff]
    %v1284 = vld [vmem:[#allocation3 + $0x68] sm:$0xff]
    %v1285 = vld [vmem:[%s4] sm:$0xff]
    %v1286 = vld [vmem:[%s4 + $0x8] sm:$0xff]
    %v1287 = vld [vmem:[%s4 + $0x10] sm:$0xff]
    %v1288 = vld [vmem:[%s4 + $0x18] sm:$0xff]
    %v1289 = vld [vmem:[%s4 + $0x20] sm:$0xff]
    %v1290 = vld [vmem:[%s4 + $0x28] sm:$0xff]
    %v1291 = vld [vmem:[%s4 + $0x30] sm:$0xff]
    %v1292 = vld [vmem:[%s4 + $0x38] sm:$0xff]
    %v1293 = vld [vmem:[%s4 + $0x40] sm:$0xff]
    %v1294 = vld [vmem:[%s4 + $0x48] sm:$0xff]
    %v1295 = vld [vmem:[%s4 + $0x50] sm:$0xff]
    %v1296 = vld [vmem:[%s4 + $0x58] sm:$0xff]
    %v1297 = vld [vmem:[%s4 + $0x60] sm:$0xff]
    %v1298 = vld [vmem:[%s4 + $0x68] sm:$0xff]
    %v1299 = vld [vmem:[%s4 + $0x70] sm:$0xff]
    %v1300 = vld [vmem:[%s4 + $0x78] sm:$0xff]
    %v1301 = vld [vmem:[%s4 + $0x80] sm:$0xff]
    %v1302 = vld [vmem:[%s4 + $0x88] sm:$0xff]
    %v1303 = vld [vmem:[%s4 + $0x90] sm:$0xff]
    %v1304 = vld [vmem:[%s4 + $0x98] sm:$0xff]
    %v1305 = vld [vmem:[%s4 + $0xa0] sm:$0xff]
    %v1306 = vld [vmem:[%s4 + $0xa8] sm:$0xff]
    %v1307 = vld [vmem:[%s4 + $0xb0] sm:$0xff]
    %v1308 = vld [vmem:[%s4 + $0xb8] sm:$0xff]
    %v1309 = vld [vmem:[%s4 + $0xc0] sm:$0xff]
    %v1310 = vld [vmem:[%s4 + $0xc8] sm:$0xff]
    %v1311 = vld [vmem:[%s4 + $0xd0] sm:$0xff]
    %v1312 = vld [vmem:[%s4 + $0xd8] sm:$0xff]
    %v1313 = vld [vmem:[%s4 + $0xe0] sm:$0xff]
    %v1314 = vld [vmem:[%s4 + $0xe8] sm:$0xff]
    %v1315 = vld [vmem:[%s4 + $0xf0] sm:$0xff]
    %v1316 = vld [vmem:[%s4 + $0xf8] sm:$0xff]
    %v1317 = vld [vmem:[%s4 + $0x100] sm:$0xff]
    %v1318 = vld [vmem:[%s4 + $0x108] sm:$0xff]
    %v1319 = vld [vmem:[%s4 + $0x110] sm:$0xff]
    %v1320 = vld [vmem:[%s4 + $0x118] sm:$0xff]
    %v1321 = vld [vmem:[%s4 + $0x120] sm:$0xff]
    %v1322 = vld [vmem:[%s4 + $0x128] sm:$0xff]
    %v1323 = vld [vmem:[%s4 + $0x130] sm:$0xff]
    %v1324 = vld [vmem:[%s4 + $0x138] sm:$0xff]
    %v1325 = vld [vmem:[%s4 + $0x140] sm:$0xff]
    %v1326 = vld [vmem:[%s4 + $0x148] sm:$0xff]
    %v1327 = vld [vmem:[%s4 + $0x150] sm:$0xff]
    %v1328 = vld [vmem:[%s4 + $0x158] sm:$0xff]
    %v1329 = vld [vmem:[%s4 + $0x160] sm:$0xff]
    %v1330 = vld [vmem:[%s4 + $0x168] sm:$0xff]
    %v1331 = vld [vmem:[%s4 + $0x170] sm:$0xff]
    %v1332 = vld [vmem:[%s4 + $0x178] sm:$0xff]
    %v1333 = vld [vmem:[%s4 + $0x180] sm:$0xff]
    %v1334 = vld [vmem:[%s4 + $0x188] sm:$0xff]
    %v1335 = vld [vmem:[%s4 + $0x190] sm:$0xff]
    %v1336 = vld [vmem:[%s4 + $0x198] sm:$0xff]
    %v1337 = vld [vmem:[%s4 + $0x1a0] sm:$0xff]
    %v1338 = vld [vmem:[%s4 + $0x1a8] sm:$0xff]
    %v1339 = vld [vmem:[%s4 + $0x1b0] sm:$0xff]
    %v1340 = vld [vmem:[%s4 + $0x1b8] sm:$0xff]
    %v1341 = vld [vmem:[%s4 + $0x1c0] sm:$0xff]
    %v1342 = vld [vmem:[%s4 + $0x1c8] sm:$0xff]
    %v1343 = vld [vmem:[%s4 + $0x1d0] sm:$0xff]
    %v1344 = vld [vmem:[%s4 + $0x1d8] sm:$0xff]
    %v1345 = vld [vmem:[%s4 + $0x1e0] sm:$0xff]
    %v1346 = vld [vmem:[%s4 + $0x1e8] sm:$0xff]
    %v1347 = vld [vmem:[%s4 + $0x1f0] sm:$0xff]
    %v1348 = vld [vmem:[%s4 + $0x1f8] sm:$0xff]
    %v1349 = vld [vmem:[%s4 + $0x200] sm:$0xff]
    %v1350 = vld [vmem:[%s4 + $0x208] sm:$0xff]
    %v1351 = vld [vmem:[%s4 + $0x210] sm:$0xff]
    %v1352 = vld [vmem:[%s4 + $0x218] sm:$0xff]
    %v1353 = vld [vmem:[%s4 + $0x220] sm:$0xff]
    %v1354 = vld [vmem:[%s4 + $0x228] sm:$0xff]
    %v1355 = vld [vmem:[%s4 + $0x230] sm:$0xff]
    %v1356 = vld [vmem:[%s4 + $0x238] sm:$0xff]
    %v1357 = vld [vmem:[%s4 + $0x240] sm:$0xff]
    %v1358 = vld [vmem:[%s4 + $0x248] sm:$0xff]
    %v1359 = vld [vmem:[%s4 + $0x250] sm:$0xff]
    %v1360 = vld [vmem:[%s4 + $0x258] sm:$0xff]
    %v1361 = vld [vmem:[%s4 + $0x260] sm:$0xff]
    %v1362 = vld [vmem:[%s4 + $0x268] sm:$0xff]
    %v1363 = vld [vmem:[%s4 + $0x270] sm:$0xff]
    %v1364 = vld [vmem:[%s4 + $0x278] sm:$0xff]
    %v1365 = vld [vmem:[%s4 + $0x280] sm:$0xff]
    %v1366 = vld [vmem:[%s4 + $0x288] sm:$0xff]
    %v1367 = vld [vmem:[%s4 + $0x290] sm:$0xff]
    %v1368 = vld [vmem:[%s4 + $0x298] sm:$0xff]
    %v1369 = vld [vmem:[%s4 + $0x2a0] sm:$0xff]
    %v1370 = vld [vmem:[%s4 + $0x2a8] sm:$0xff]
    %v1371 = vld [vmem:[%s4 + $0x2b0] sm:$0xff]
    %v1372 = vld [vmem:[%s4 + $0x2b8] sm:$0xff]
    %v1373 = vld [vmem:[%s4 + $0x2c0] sm:$0xff]
    %v1374 = vld [vmem:[%s4 + $0x2c8] sm:$0xff]
    %v1375 = vld [vmem:[%s4 + $0x2d0] sm:$0xff]
    %v1376 = vld [vmem:[%s4 + $0x2d8] sm:$0xff]
    %v1377 = vld [vmem:[%s4 + $0x2e0] sm:$0xff]
    %v1378 = vld [vmem:[%s4 + $0x2e8] sm:$0xff]
    %v1379 = vld [vmem:[%s4 + $0x2f0] sm:$0xff]
    %v1380 = vld [vmem:[%s4 + $0x2f8] sm:$0xff]
    %v1381 = vld [vmem:[%s4 + $0x300] sm:$0xff]
    %vm1382 = vcmask 64512
    %v1384 = vsel %vm1382, %v1277, 0
    %v1387 = vsel %vm1382, %v1284, 0
    %1389 = vmatprep.subr.mxu0 0.0
    %v1390 = vand.u32 %v1300, 4294901760
    %1391 = vmatpush1.msra.mxu0 %v1390
    %1392 = vmatprep.subr.mxu0 0.0
    %v1393 = vand.u32 %v1299, 4294901760
    %1394 = vmatpush1.msra.mxu0 %v1393
    %1395 = vmatprep.subr.mxu0 0.0
    %v1396 = vand.u32 %v1298, 4294901760
    %1397 = vmatpush1.msra.mxu0 %v1396
    %1398 = vmatprep.subr.mxu0 0.0
    %v1399 = vand.u32 %v1297, 4294901760
    %1400 = vmatpush1.msra.mxu0 %v1399
    %1401 = vmatprep.subr.mxu0 0.0
    %v1402 = vand.u32 %v1296, 4294901760
    %1403 = vmatpush1.msra.mxu0 %v1402
    %1404 = vmatprep.subr.mxu0 0.0
    %v1405 = vand.u32 %v1295, 4294901760
    %1406 = vmatpush1.msra.mxu0 %v1405
    %1407 = vmatprep.subr.mxu0 0.0
    %v1408 = vand.u32 %v1294, 4294901760
    %1409 = vmatpush1.msra.mxu0 %v1408
    %1410 = vmatprep.subr.mxu0 0.0
    %v1411 = vand.u32 %v1293, 4294901760
    %1412 = vmatpush1.msra.mxu0 %v1411
    %1413 = vmatprep.subr.mxu0 0.0
    %v1414 = vand.u32 %v1292, 4294901760
    %1415 = vmatpush1.msra.mxu0 %v1414
    %1416 = vmatprep.subr.mxu0 0.0
    %v1417 = vand.u32 %v1291, 4294901760
    %1418 = vmatpush1.msra.mxu0 %v1417
    %1419 = vmatprep.subr.mxu0 0.0
    %v1420 = vand.u32 %v1290, 4294901760
    %1421 = vmatpush1.msra.mxu0 %v1420
    %1422 = vmatprep.subr.mxu0 0.0
    %v1423 = vand.u32 %v1289, 4294901760
    %1424 = vmatpush1.msra.mxu0 %v1423
    %1425 = vmatprep.subr.mxu0 0.0
    %v1426 = vand.u32 %v1288, 4294901760
    %1427 = vmatpush1.msra.mxu0 %v1426
    %1428 = vmatprep.subr.mxu0 0.0
    %v1429 = vand.u32 %v1287, 4294901760
    %1430 = vmatpush1.msra.mxu0 %v1429
    %1431 = vmatprep.subr.mxu0 0.0
    %v1432 = vand.u32 %v1286, 4294901760
    %1433 = vmatpush1.msra.mxu0 %v1432
    %1434 = vmatprep.subr.mxu0 0.0
    %v1435 = vand.u32 %v1285, 4294901760
    %1436 = vmatpush1.msra.mxu0 %v1435
    %1437 = vmatprep.subr.mxu0 0.0
    %v1438 = vand.u32 %v1316, 4294901760
    %1439 = vmatpush2.msra.mxu0 %v1438
    %1440 = vmatprep.subr.mxu0 0.0
    %v1441 = vand.u32 %v1315, 4294901760
    %1442 = vmatpush2.msra.mxu0 %v1441
    %1443 = vmatprep.subr.mxu0 0.0
    %v1444 = vand.u32 %v1314, 4294901760
    %1445 = vmatpush2.msra.mxu0 %v1444
    %1446 = vmatprep.subr.mxu0 0.0
    %v1447 = vand.u32 %v1313, 4294901760
    %1448 = vmatpush2.msra.mxu0 %v1447
    %1449 = vmatprep.subr.mxu0 0.0
    %v1450 = vand.u32 %v1312, 4294901760
    %1451 = vmatpush2.msra.mxu0 %v1450
    %1452 = vmatprep.subr.mxu0 0.0
    %v1453 = vand.u32 %v1311, 4294901760
    %1454 = vmatpush2.msra.mxu0 %v1453
    %1455 = vmatprep.subr.mxu0 0.0
    %v1456 = vand.u32 %v1310, 4294901760
    %1457 = vmatpush2.msra.mxu0 %v1456
    %1458 = vmatprep.subr.mxu0 0.0
    %v1459 = vand.u32 %v1309, 4294901760
    %1460 = vmatpush2.msra.mxu0 %v1459
    %1461 = vmatprep.subr.mxu0 0.0
    %v1462 = vand.u32 %v1308, 4294901760
    %1463 = vmatpush2.msra.mxu0 %v1462
    %1464 = vmatprep.subr.mxu0 0.0
    %v1465 = vand.u32 %v1307, 4294901760
    %1466 = vmatpush2.msra.mxu0 %v1465
    %1467 = vmatprep.subr.mxu0 0.0
    %v1468 = vand.u32 %v1306, 4294901760
    %1469 = vmatpush2.msra.mxu0 %v1468
    %1470 = vmatprep.subr.mxu0 0.0
    %v1471 = vand.u32 %v1305, 4294901760
    %1472 = vmatpush2.msra.mxu0 %v1471
    %1473 = vmatprep.subr.mxu0 0.0
    %v1474 = vand.u32 %v1304, 4294901760
    %1475 = vmatpush2.msra.mxu0 %v1474
    %1476 = vmatprep.subr.mxu0 0.0
    %v1477 = vand.u32 %v1303, 4294901760
    %1478 = vmatpush2.msra.mxu0 %v1477
    %1479 = vmatprep.subr.mxu0 0.0
    %v1480 = vand.u32 %v1302, 4294901760
    %1481 = vmatpush2.msra.mxu0 %v1480
    %1482 = vmatprep.subr.mxu0 0.0
    %v1483 = vand.u32 %v1301, 4294901760
    %1484 = vmatpush2.msra.mxu0 %v1483
    %v1485 = vand.u32 %v1272, 4294901760
    %v1486 = vsub.f32 %v1272, %v1485
    %v1487 = vand.u32 %v1486, 4294901760
    %v1488 = vsub.f32 %v1486, %v1487
    %v1489 = vand.u32 %v1488, 4294901760
    %1490 = vmatprep.mubr.f32.mxu0 %v1489
    %v1491 = vand.u32 %v1271, 4294901760
    %v1492 = vsub.f32 %v1271, %v1491
    %v1493 = vand.u32 %v1492, 4294901760
    %v1494 = vsub.f32 %v1492, %v1493
    %v1495 = vand.u32 %v1494, 4294901760
    %1496 = vmatmul.mubr.f32.gmra.mxu0 %v1495
    %v1497 = vpop.f32.mrf.mxu0
    %v1498 = vadd.f32 0.0, %v1497
    %v1499 = vpop.f32.mrf.mxu0
    %v1500 = vand.u32 %v1279, 4294901760
    %v1501 = vsub.f32 %v1279, %v1500
    %v1502 = vand.u32 %v1501, 4294901760
    %v1503 = vsub.f32 %v1501, %v1502
    %v1504 = vand.u32 %v1503, 4294901760
    %1505 = vmatprep.mubr.f32.mxu0 %v1504
    %v1506 = vand.u32 %v1278, 4294901760
    %v1507 = vsub.f32 %v1278, %v1506
    %v1508 = vand.u32 %v1507, 4294901760
    %v1509 = vsub.f32 %v1507, %v1508
    %v1510 = vand.u32 %v1509, 4294901760
    %1511 = vmatmul.mubr.f32.gmra.mxu0 %v1510
    %v1512 = vpop.f32.mrf.mxu0
    %v1513 = vadd.f32 0.0, %v1512
    %v1514 = vpop.f32.mrf.mxu0
    %1515 = vdwg.mxu0
    %1516 = vmatprep.subr.mxu0 0.0
    %v1517 = vand.u32 %v1300, 4294901760
    %v1518 = vsub.f32 %v1300, %v1517
    %v1519 = vand.u32 %v1518, 4294901760
    %v1520 = vsub.f32 %v1518, %v1519
    %v1521 = vand.u32 %v1520, 4294901760
    %1522 = vmatpush1.msra.mxu0 %v1521
    %1523 = vmatprep.subr.mxu0 0.0
    %v1524 = vand.u32 %v1299, 4294901760
    %v1525 = vsub.f32 %v1299, %v1524
    %v1526 = vand.u32 %v1525, 4294901760
    %v1527 = vsub.f32 %v1525, %v1526
    %v1528 = vand.u32 %v1527, 4294901760
    %1529 = vmatpush1.msra.mxu0 %v1528
    %1530 = vmatprep.subr.mxu0 0.0
    %v1531 = vand.u32 %v1298, 4294901760
    %v1532 = vsub.f32 %v1298, %v1531
    %v1533 = vand.u32 %v1532, 4294901760
    %v1534 = vsub.f32 %v1532, %v1533
    %v1535 = vand.u32 %v1534, 4294901760
    %1536 = vmatpush1.msra.mxu0 %v1535
    %1537 = vmatprep.subr.mxu0 0.0
    %v1538 = vand.u32 %v1297, 4294901760
    %v1539 = vsub.f32 %v1297, %v1538
    %v1540 = vand.u32 %v1539, 4294901760
    %v1541 = vsub.f32 %v1539, %v1540
    %v1542 = vand.u32 %v1541, 4294901760
    %1543 = vmatpush1.msra.mxu0 %v1542
    %1544 = vmatprep.subr.mxu0 0.0
    %v1545 = vand.u32 %v1296, 4294901760
    %v1546 = vsub.f32 %v1296, %v1545
    %v1547 = vand.u32 %v1546, 4294901760
    %v1548 = vsub.f32 %v1546, %v1547
    %v1549 = vand.u32 %v1548, 4294901760
    %1550 = vmatpush1.msra.mxu0 %v1549
    %1551 = vmatprep.subr.mxu0 0.0
    %v1552 = vand.u32 %v1295, 4294901760
    %v1553 = vsub.f32 %v1295, %v1552
    %v1554 = vand.u32 %v1553, 4294901760
    %v1555 = vsub.f32 %v1553, %v1554
    %v1556 = vand.u32 %v1555, 4294901760
    %1557 = vmatpush1.msra.mxu0 %v1556
    %1558 = vmatprep.subr.mxu0 0.0
    %v1559 = vand.u32 %v1294, 4294901760
    %v1560 = vsub.f32 %v1294, %v1559
    %v1561 = vand.u32 %v1560, 4294901760
    %v1562 = vsub.f32 %v1560, %v1561
    %v1563 = vand.u32 %v1562, 4294901760
    %1564 = vmatpush1.msra.mxu0 %v1563
    %1565 = vmatprep.subr.mxu0 0.0
    %v1566 = vand.u32 %v1293, 4294901760
    %v1567 = vsub.f32 %v1293, %v1566
    %v1568 = vand.u32 %v1567, 4294901760
    %v1569 = vsub.f32 %v1567, %v1568
    %v1570 = vand.u32 %v1569, 4294901760
    %1571 = vmatpush1.msra.mxu0 %v1570
    %1572 = vmatprep.subr.mxu0 0.0
    %v1573 = vand.u32 %v1292, 4294901760
    %v1574 = vsub.f32 %v1292, %v1573
    %v1575 = vand.u32 %v1574, 4294901760
    %v1576 = vsub.f32 %v1574, %v1575
    %v1577 = vand.u32 %v1576, 4294901760
    %1578 = vmatpush1.msra.mxu0 %v1577
    %1579 = vmatprep.subr.mxu0 0.0
    %v1580 = vand.u32 %v1291, 4294901760
    %v1581 = vsub.f32 %v1291, %v1580
    %v1582 = vand.u32 %v1581, 4294901760
    %v1583 = vsub.f32 %v1581, %v1582
    %v1584 = vand.u32 %v1583, 4294901760
    %1585 = vmatpush1.msra.mxu0 %v1584
    %1586 = vmatprep.subr.mxu0 0.0
    %v1587 = vand.u32 %v1290, 4294901760
    %v1588 = vsub.f32 %v1290, %v1587
    %v1589 = vand.u32 %v1588, 4294901760
    %v1590 = vsub.f32 %v1588, %v1589
    %v1591 = vand.u32 %v1590, 4294901760
    %1592 = vmatpush1.msra.mxu0 %v1591
    %1593 = vmatprep.subr.mxu0 0.0
    %v1594 = vand.u32 %v1289, 4294901760
    %v1595 = vsub.f32 %v1289, %v1594
    %v1596 = vand.u32 %v1595, 4294901760
    %v1597 = vsub.f32 %v1595, %v1596
    %v1598 = vand.u32 %v1597, 4294901760
    %1599 = vmatpush1.msra.mxu0 %v1598
    %1600 = vmatprep.subr.mxu0 0.0
    %v1601 = vand.u32 %v1288, 4294901760
    %v1602 = vsub.f32 %v1288, %v1601
    %v1603 = vand.u32 %v1602, 4294901760
    %v1604 = vsub.f32 %v1602, %v1603
    %v1605 = vand.u32 %v1604, 4294901760
    %1606 = vmatpush1.msra.mxu0 %v1605
    %1607 = vmatprep.subr.mxu0 0.0
    %v1608 = vand.u32 %v1287, 4294901760
    %v1609 = vsub.f32 %v1287, %v1608
    %v1610 = vand.u32 %v1609, 4294901760
    %v1611 = vsub.f32 %v1609, %v1610
    %v1612 = vand.u32 %v1611, 4294901760
    %1613 = vmatpush1.msra.mxu0 %v1612
    %1614 = vmatprep.subr.mxu0 0.0
    %v1615 = vand.u32 %v1286, 4294901760
    %v1616 = vsub.f32 %v1286, %v1615
    %v1617 = vand.u32 %v1616, 4294901760
    %v1618 = vsub.f32 %v1616, %v1617
    %v1619 = vand.u32 %v1618, 4294901760
    %1620 = vmatpush1.msra.mxu0 %v1619
    %1621 = vmatprep.subr.mxu0 0.0
    %v1622 = vand.u32 %v1285, 4294901760
    %v1623 = vsub.f32 %v1285, %v1622
    %v1624 = vand.u32 %v1623, 4294901760
    %v1625 = vsub.f32 %v1623, %v1624
    %v1626 = vand.u32 %v1625, 4294901760
    %1627 = vmatpush1.msra.mxu0 %v1626
    %1628 = vmatprep.subr.mxu0 0.0
    %v1629 = vand.u32 %v1316, 4294901760
    %v1630 = vsub.f32 %v1316, %v1629
    %v1631 = vand.u32 %v1630, 4294901760
    %v1632 = vsub.f32 %v1630, %v1631
    %v1633 = vand.u32 %v1632, 4294901760
    %1634 = vmatpush2.msra.mxu0 %v1633
    %1635 = vmatprep.subr.mxu0 0.0
    %v1636 = vand.u32 %v1315, 4294901760
    %v1637 = vsub.f32 %v1315, %v1636
    %v1638 = vand.u32 %v1637, 4294901760
    %v1639 = vsub.f32 %v1637, %v1638
    %v1640 = vand.u32 %v1639, 4294901760
    %1641 = vmatpush2.msra.mxu0 %v1640
    %1642 = vmatprep.subr.mxu0 0.0
    %v1643 = vand.u32 %v1314, 4294901760
    %v1644 = vsub.f32 %v1314, %v1643
    %v1645 = vand.u32 %v1644, 4294901760
    %v1646 = vsub.f32 %v1644, %v1645
    %v1647 = vand.u32 %v1646, 4294901760
    %1648 = vmatpush2.msra.mxu0 %v1647
    %1649 = vmatprep.subr.mxu0 0.0
    %v1650 = vand.u32 %v1313, 4294901760
    %v1651 = vsub.f32 %v1313, %v1650
    %v1652 = vand.u32 %v1651, 4294901760
    %v1653 = vsub.f32 %v1651, %v1652
    %v1654 = vand.u32 %v1653, 4294901760
    %1655 = vmatpush2.msra.mxu0 %v1654
    %1656 = vmatprep.subr.mxu0 0.0
    %v1657 = vand.u32 %v1312, 4294901760
    %v1658 = vsub.f32 %v1312, %v1657
    %v1659 = vand.u32 %v1658, 4294901760
    %v1660 = vsub.f32 %v1658, %v1659
    %v1661 = vand.u32 %v1660, 4294901760
    %1662 = vmatpush2.msra.mxu0 %v1661
    %1663 = vmatprep.subr.mxu0 0.0
    %v1664 = vand.u32 %v1311, 4294901760
    %v1665 = vsub.f32 %v1311, %v1664
    %v1666 = vand.u32 %v1665, 4294901760
    %v1667 = vsub.f32 %v1665, %v1666
    %v1668 = vand.u32 %v1667, 4294901760
    %1669 = vmatpush2.msra.mxu0 %v1668
    %1670 = vmatprep.subr.mxu0 0.0
    %v1671 = vand.u32 %v1310, 4294901760
    %v1672 = vsub.f32 %v1310, %v1671
    %v1673 = vand.u32 %v1672, 4294901760
    %v1674 = vsub.f32 %v1672, %v1673
    %v1675 = vand.u32 %v1674, 4294901760
    %1676 = vmatpush2.msra.mxu0 %v1675
    %1677 = vmatprep.subr.mxu0 0.0
    %v1678 = vand.u32 %v1309, 4294901760
    %v1679 = vsub.f32 %v1309, %v1678
    %v1680 = vand.u32 %v1679, 4294901760
    %v1681 = vsub.f32 %v1679, %v1680
    %v1682 = vand.u32 %v1681, 4294901760
    %1683 = vmatpush2.msra.mxu0 %v1682
    %1684 = vmatprep.subr.mxu0 0.0
    %v1685 = vand.u32 %v1308, 4294901760
    %v1686 = vsub.f32 %v1308, %v1685
    %v1687 = vand.u32 %v1686, 4294901760
    %v1688 = vsub.f32 %v1686, %v1687
    %v1689 = vand.u32 %v1688, 4294901760
    %1690 = vmatpush2.msra.mxu0 %v1689
    %1691 = vmatprep.subr.mxu0 0.0
    %v1692 = vand.u32 %v1307, 4294901760
    %v1693 = vsub.f32 %v1307, %v1692
    %v1694 = vand.u32 %v1693, 4294901760
    %v1695 = vsub.f32 %v1693, %v1694
    %v1696 = vand.u32 %v1695, 4294901760
    %1697 = vmatpush2.msra.mxu0 %v1696
    %1698 = vmatprep.subr.mxu0 0.0
    %v1699 = vand.u32 %v1306, 4294901760
    %v1700 = vsub.f32 %v1306, %v1699
    %v1701 = vand.u32 %v1700, 4294901760
    %v1702 = vsub.f32 %v1700, %v1701
    %v1703 = vand.u32 %v1702, 4294901760
    %1704 = vmatpush2.msra.mxu0 %v1703
    %1705 = vmatprep.subr.mxu0 0.0
    %v1706 = vand.u32 %v1305, 4294901760
    %v1707 = vsub.f32 %v1305, %v1706
    %v1708 = vand.u32 %v1707, 4294901760
    %v1709 = vsub.f32 %v1707, %v1708
    %v1710 = vand.u32 %v1709, 4294901760
    %1711 = vmatpush2.msra.mxu0 %v1710
    %1712 = vmatprep.subr.mxu0 0.0
    %v1713 = vand.u32 %v1304, 4294901760
    %v1714 = vsub.f32 %v1304, %v1713
    %v1715 = vand.u32 %v1714, 4294901760
    %v1716 = vsub.f32 %v1714, %v1715
    %v1717 = vand.u32 %v1716, 4294901760
    %1718 = vmatpush2.msra.mxu0 %v1717
    %1719 = vmatprep.subr.mxu0 0.0
    %v1720 = vand.u32 %v1303, 4294901760
    %v1721 = vsub.f32 %v1303, %v1720
    %v1722 = vand.u32 %v1721, 4294901760
    %v1723 = vsub.f32 %v1721, %v1722
    %v1724 = vand.u32 %v1723, 4294901760
    %1725 = vmatpush2.msra.mxu0 %v1724
    %1726 = vmatprep.subr.mxu0 0.0
    %v1727 = vand.u32 %v1302, 4294901760
    %v1728 = vsub.f32 %v1302, %v1727
    %v1729 = vand.u32 %v1728, 4294901760
    %v1730 = vsub.f32 %v1728, %v1729
    %v1731 = vand.u32 %v1730, 4294901760
    %1732 = vmatpush2.msra.mxu0 %v1731
    %1733 = vmatprep.subr.mxu0 0.0
    %v1734 = vand.u32 %v1301, 4294901760
    %v1735 = vsub.f32 %v1301, %v1734
    %v1736 = vand.u32 %v1735, 4294901760
    %v1737 = vsub.f32 %v1735, %v1736
    %v1738 = vand.u32 %v1737, 4294901760
    %1739 = vmatpush2.msra.mxu0 %v1738
    %v1740 = vand.u32 %v1272, 4294901760
    %1741 = vmatprep.mubr.f32.mxu0 %v1740
    %v1742 = vand.u32 %v1271, 4294901760
    %1743 = vmatmul.mubr.f32.gmra.mxu0 %v1742
    %v1744 = vpop.f32.mrf.mxu0
    %v1745 = vadd.f32 %v1498, %v1744
    %v1746 = vpop.f32.mrf.mxu0
    %v1747 = vand.u32 %v1279, 4294901760
    %1748 = vmatprep.mubr.f32.mxu0 %v1747
    %v1749 = vand.u32 %v1278, 4294901760
    %1750 = vmatmul.mubr.f32.gmra.mxu0 %v1749
    %v1751 = vpop.f32.mrf.mxu0
    %v1752 = vadd.f32 %v1513, %v1751
    %v1753 = vpop.f32.mrf.mxu0
    %1754 = vdwg.mxu0
    %1755 = vmatprep.subr.mxu0 0.0
    %v1756 = vand.u32 %v1300, 4294901760
    %v1757 = vsub.f32 %v1300, %v1756
    %1758 = vmatpush1.msra.mxu0 %v1757
    %1759 = vmatprep.subr.mxu0 0.0
    %v1760 = vand.u32 %v1299, 4294901760
    %v1761 = vsub.f32 %v1299, %v1760
    %1762 = vmatpush1.msra.mxu0 %v1761
    %1763 = vmatprep.subr.mxu0 0.0
    %v1764 = vand.u32 %v1298, 4294901760
    %v1765 = vsub.f32 %v1298, %v1764
    %1766 = vmatpush1.msra.mxu0 %v1765
    %1767 = vmatprep.subr.mxu0 0.0
    %v1768 = vand.u32 %v1297, 4294901760
    %v1769 = vsub.f32 %v1297, %v1768
    %1770 = vmatpush1.msra.mxu0 %v1769
    %1771 = vmatprep.subr.mxu0 0.0
    %v1772 = vand.u32 %v1296, 4294901760
    %v1773 = vsub.f32 %v1296, %v1772
    %1774 = vmatpush1.msra.mxu0 %v1773
    %1775 = vmatprep.subr.mxu0 0.0
    %v1776 = vand.u32 %v1295, 4294901760
    %v1777 = vsub.f32 %v1295, %v1776
    %1778 = vmatpush1.msra.mxu0 %v1777
    %1779 = vmatprep.subr.mxu0 0.0
    %v1780 = vand.u32 %v1294, 4294901760
    %v1781 = vsub.f32 %v1294, %v1780
    %1782 = vmatpush1.msra.mxu0 %v1781
    %1783 = vmatprep.subr.mxu0 0.0
    %v1784 = vand.u32 %v1293, 4294901760
    %v1785 = vsub.f32 %v1293, %v1784
    %1786 = vmatpush1.msra.mxu0 %v1785
    %1787 = vmatprep.subr.mxu0 0.0
    %v1788 = vand.u32 %v1292, 4294901760
    %v1789 = vsub.f32 %v1292, %v1788
    %1790 = vmatpush1.msra.mxu0 %v1789
    %1791 = vmatprep.subr.mxu0 0.0
    %v1792 = vand.u32 %v1291, 4294901760
    %v1793 = vsub.f32 %v1291, %v1792
    %1794 = vmatpush1.msra.mxu0 %v1793
    %1795 = vmatprep.subr.mxu0 0.0
    %v1796 = vand.u32 %v1290, 4294901760
    %v1797 = vsub.f32 %v1290, %v1796
    %1798 = vmatpush1.msra.mxu0 %v1797
    %1799 = vmatprep.subr.mxu0 0.0
    %v1800 = vand.u32 %v1289, 4294901760
    %v1801 = vsub.f32 %v1289, %v1800
    %1802 = vmatpush1.msra.mxu0 %v1801
    %1803 = vmatprep.subr.mxu0 0.0
    %v1804 = vand.u32 %v1288, 4294901760
    %v1805 = vsub.f32 %v1288, %v1804
    %1806 = vmatpush1.msra.mxu0 %v1805
    %1807 = vmatprep.subr.mxu0 0.0
    %v1808 = vand.u32 %v1287, 4294901760
    %v1809 = vsub.f32 %v1287, %v1808
    %1810 = vmatpush1.msra.mxu0 %v1809
    %1811 = vmatprep.subr.mxu0 0.0
    %v1812 = vand.u32 %v1286, 4294901760
    %v1813 = vsub.f32 %v1286, %v1812
    %1814 = vmatpush1.msra.mxu0 %v1813
    %1815 = vmatprep.subr.mxu0 0.0
    %v1816 = vand.u32 %v1285, 4294901760
    %v1817 = vsub.f32 %v1285, %v1816
    %1818 = vmatpush1.msra.mxu0 %v1817
    %1819 = vmatprep.subr.mxu0 0.0
    %v1820 = vand.u32 %v1316, 4294901760
    %v1821 = vsub.f32 %v1316, %v1820
    %1822 = vmatpush2.msra.mxu0 %v1821
    %1823 = vmatprep.subr.mxu0 0.0
    %v1824 = vand.u32 %v1315, 4294901760
    %v1825 = vsub.f32 %v1315, %v1824
    %1826 = vmatpush2.msra.mxu0 %v1825
    %1827 = vmatprep.subr.mxu0 0.0
    %v1828 = vand.u32 %v1314, 4294901760
    %v1829 = vsub.f32 %v1314, %v1828
    %1830 = vmatpush2.msra.mxu0 %v1829
    %1831 = vmatprep.subr.mxu0 0.0
    %v1832 = vand.u32 %v1313, 4294901760
    %v1833 = vsub.f32 %v1313, %v1832
    %1834 = vmatpush2.msra.mxu0 %v1833
    %1835 = vmatprep.subr.mxu0 0.0
    %v1836 = vand.u32 %v1312, 4294901760
    %v1837 = vsub.f32 %v1312, %v1836
    %1838 = vmatpush2.msra.mxu0 %v1837
    %1839 = vmatprep.subr.mxu0 0.0
    %v1840 = vand.u32 %v1311, 4294901760
    %v1841 = vsub.f32 %v1311, %v1840
    %1842 = vmatpush2.msra.mxu0 %v1841
    %1843 = vmatprep.subr.mxu0 0.0
    %v1844 = vand.u32 %v1310, 4294901760
    %v1845 = vsub.f32 %v1310, %v1844
    %1846 = vmatpush2.msra.mxu0 %v1845
    %1847 = vmatprep.subr.mxu0 0.0
    %v1848 = vand.u32 %v1309, 4294901760
    %v1849 = vsub.f32 %v1309, %v1848
    %1850 = vmatpush2.msra.mxu0 %v1849
    %1851 = vmatprep.subr.mxu0 0.0
    %v1852 = vand.u32 %v1308, 4294901760
    %v1853 = vsub.f32 %v1308, %v1852
    %1854 = vmatpush2.msra.mxu0 %v1853
    %1855 = vmatprep.subr.mxu0 0.0
    %v1856 = vand.u32 %v1307, 4294901760
    %v1857 = vsub.f32 %v1307, %v1856
    %1858 = vmatpush2.msra.mxu0 %v1857
    %1859 = vmatprep.subr.mxu0 0.0
    %v1860 = vand.u32 %v1306, 4294901760
    %v1861 = vsub.f32 %v1306, %v1860
    %1862 = vmatpush2.msra.mxu0 %v1861
    %1863 = vmatprep.subr.mxu0 0.0
    %v1864 = vand.u32 %v1305, 4294901760
    %v1865 = vsub.f32 %v1305, %v1864
    %1866 = vmatpush2.msra.mxu0 %v1865
    %1867 = vmatprep.subr.mxu0 0.0
    %v1868 = vand.u32 %v1304, 4294901760
    %v1869 = vsub.f32 %v1304, %v1868
    %1870 = vmatpush2.msra.mxu0 %v1869
    %1871 = vmatprep.subr.mxu0 0.0
    %v1872 = vand.u32 %v1303, 4294901760
    %v1873 = vsub.f32 %v1303, %v1872
    %1874 = vmatpush2.msra.mxu0 %v1873
    %1875 = vmatprep.subr.mxu0 0.0
    %v1876 = vand.u32 %v1302, 4294901760
    %v1877 = vsub.f32 %v1302, %v1876
    %1878 = vmatpush2.msra.mxu0 %v1877
    %1879 = vmatprep.subr.mxu0 0.0
    %v1880 = vand.u32 %v1301, 4294901760
    %v1881 = vsub.f32 %v1301, %v1880
    %1882 = vmatpush2.msra.mxu0 %v1881
    %v1883 = vand.u32 %v1272, 4294901760
    %v1884 = vsub.f32 %v1272, %v1883
    %1885 = vmatprep.mubr.f32.mxu0 %v1884
    %v1886 = vand.u32 %v1271, 4294901760
    %v1887 = vsub.f32 %v1271, %v1886
    %1888 = vmatmul.mubr.f32.gmra.mxu0 %v1887
    %v1889 = vpop.f32.mrf.mxu0
    %v1890 = vadd.f32 %v1745, %v1889
    %v1891 = vpop.f32.mrf.mxu0
    %v1892 = vand.u32 %v1279, 4294901760
    %v1893 = vsub.f32 %v1279, %v1892
    %1894 = vmatprep.mubr.f32.mxu0 %v1893
    %v1895 = vand.u32 %v1278, 4294901760
    %v1896 = vsub.f32 %v1278, %v1895
    %1897 = vmatmul.mubr.f32.gmra.mxu0 %v1896
    %v1898 = vpop.f32.mrf.mxu0
    %v1899 = vadd.f32 %v1752, %v1898
    %v1900 = vpop.f32.mrf.mxu0
    %1901 = vdwg.mxu0
    %1902 = vmatprep.subr.mxu0 0.0
    %v1903 = vand.u32 %v1300, 4294901760
    %1904 = vmatpush1.msra.mxu0 %v1903
    %1905 = vmatprep.subr.mxu0 0.0
    %v1906 = vand.u32 %v1299, 4294901760
    %1907 = vmatpush1.msra.mxu0 %v1906
    %1908 = vmatprep.subr.mxu0 0.0
    %v1909 = vand.u32 %v1298, 4294901760
    %1910 = vmatpush1.msra.mxu0 %v1909
    %1911 = vmatprep.subr.mxu0 0.0
    %v1912 = vand.u32 %v1297, 4294901760
    %1913 = vmatpush1.msra.mxu0 %v1912
    %1914 = vmatprep.subr.mxu0 0.0
    %v1915 = vand.u32 %v1296, 4294901760
    %1916 = vmatpush1.msra.mxu0 %v1915
    %1917 = vmatprep.subr.mxu0 0.0
    %v1918 = vand.u32 %v1295, 4294901760
    %1919 = vmatpush1.msra.mxu0 %v1918
    %1920 = vmatprep.subr.mxu0 0.0
    %v1921 = vand.u32 %v1294, 4294901760
    %1922 = vmatpush1.msra.mxu0 %v1921
    %1923 = vmatprep.subr.mxu0 0.0
    %v1924 = vand.u32 %v1293, 4294901760
    %1925 = vmatpush1.msra.mxu0 %v1924
    %1926 = vmatprep.subr.mxu0 0.0
    %v1927 = vand.u32 %v1292, 4294901760
    %1928 = vmatpush1.msra.mxu0 %v1927
    %1929 = vmatprep.subr.mxu0 0.0
    %v1930 = vand.u32 %v1291, 4294901760
    %1931 = vmatpush1.msra.mxu0 %v1930
    %1932 = vmatprep.subr.mxu0 0.0
    %v1933 = vand.u32 %v1290, 4294901760
    %1934 = vmatpush1.msra.mxu0 %v1933
    %1935 = vmatprep.subr.mxu0 0.0
    %v1936 = vand.u32 %v1289, 4294901760
    %1937 = vmatpush1.msra.mxu0 %v1936
    %1938 = vmatprep.subr.mxu0 0.0
    %v1939 = vand.u32 %v1288, 4294901760
    %1940 = vmatpush1.msra.mxu0 %v1939
    %1941 = vmatprep.subr.mxu0 0.0
    %v1942 = vand.u32 %v1287, 4294901760
    %1943 = vmatpush1.msra.mxu0 %v1942
    %1944 = vmatprep.subr.mxu0 0.0
    %v1945 = vand.u32 %v1286, 4294901760
    %1946 = vmatpush1.msra.mxu0 %v1945
    %1947 = vmatprep.subr.mxu0 0.0
    %v1948 = vand.u32 %v1285, 4294901760
    %1949 = vmatpush1.msra.mxu0 %v1948
    %1950 = vmatprep.subr.mxu0 0.0
    %v1951 = vand.u32 %v1316, 4294901760
    %1952 = vmatpush2.msra.mxu0 %v1951
    %1953 = vmatprep.subr.mxu0 0.0
    %v1954 = vand.u32 %v1315, 4294901760
    %1955 = vmatpush2.msra.mxu0 %v1954
    %1956 = vmatprep.subr.mxu0 0.0
    %v1957 = vand.u32 %v1314, 4294901760
    %1958 = vmatpush2.msra.mxu0 %v1957
    %1959 = vmatprep.subr.mxu0 0.0
    %v1960 = vand.u32 %v1313, 4294901760
    %1961 = vmatpush2.msra.mxu0 %v1960
    %1962 = vmatprep.subr.mxu0 0.0
    %v1963 = vand.u32 %v1312, 4294901760
    %1964 = vmatpush2.msra.mxu0 %v1963
    %1965 = vmatprep.subr.mxu0 0.0
    %v1966 = vand.u32 %v1311, 4294901760
    %1967 = vmatpush2.msra.mxu0 %v1966
    %1968 = vmatprep.subr.mxu0 0.0
    %v1969 = vand.u32 %v1310, 4294901760
    %1970 = vmatpush2.msra.mxu0 %v1969
    %1971 = vmatprep.subr.mxu0 0.0
    %v1972 = vand.u32 %v1309, 4294901760
    %1973 = vmatpush2.msra.mxu0 %v1972
    %1974 = vmatprep.subr.mxu0 0.0
    %v1975 = vand.u32 %v1308, 4294901760
    %1976 = vmatpush2.msra.mxu0 %v1975
    %1977 = vmatprep.subr.mxu0 0.0
    %v1978 = vand.u32 %v1307, 4294901760
    %1979 = vmatpush2.msra.mxu0 %v1978
    %1980 = vmatprep.subr.mxu0 0.0
    %v1981 = vand.u32 %v1306, 4294901760
    %1982 = vmatpush2.msra.mxu0 %v1981
    %1983 = vmatprep.subr.mxu0 0.0
    %v1984 = vand.u32 %v1305, 4294901760
    %1985 = vmatpush2.msra.mxu0 %v1984
    %1986 = vmatprep.subr.mxu0 0.0
    %v1987 = vand.u32 %v1304, 4294901760
    %1988 = vmatpush2.msra.mxu0 %v1987
    %1989 = vmatprep.subr.mxu0 0.0
    %v1990 = vand.u32 %v1303, 4294901760
    %1991 = vmatpush2.msra.mxu0 %v1990
    %1992 = vmatprep.subr.mxu0 0.0
    %v1993 = vand.u32 %v1302, 4294901760
    %1994 = vmatpush2.msra.mxu0 %v1993
    %1995 = vmatprep.subr.mxu0 0.0
    %v1996 = vand.u32 %v1301, 4294901760
    %1997 = vmatpush2.msra.mxu0 %v1996
    %v1998 = vand.u32 %v1272, 4294901760
    %v1999 = vsub.f32 %v1272, %v1998
    %v2000 = vand.u32 %v1999, 4294901760
    %2001 = vmatprep.mubr.f32.mxu0 %v2000
    %v2002 = vand.u32 %v1271, 4294901760
    %v2003 = vsub.f32 %v1271, %v2002
    %v2004 = vand.u32 %v2003, 4294901760
    %2005 = vmatmul.mubr.f32.gmra.mxu0 %v2004
    %v2006 = vpop.f32.mrf.mxu0
    %v2007 = vadd.f32 %v1890, %v2006
    %v2008 = vpop.f32.mrf.mxu0
    %v2009 = vand.u32 %v1279, 4294901760
    %v2010 = vsub.f32 %v1279, %v2009
    %v2011 = vand.u32 %v2010, 4294901760
    %2012 = vmatprep.mubr.f32.mxu0 %v2011
    %v2013 = vand.u32 %v1278, 4294901760
    %v2014 = vsub.f32 %v1278, %v2013
    %v2015 = vand.u32 %v2014, 4294901760
    %2016 = vmatmul.mubr.f32.gmra.mxu0 %v2015
    %v2017 = vpop.f32.mrf.mxu0
    %v2018 = vadd.f32 %v1899, %v2017
    %v2019 = vpop.f32.mrf.mxu0
    %2020 = vdwg.mxu0
    %2021 = vmatprep.subr.mxu0 0.0
    %v2022 = vand.u32 %v1300, 4294901760
    %v2023 = vsub.f32 %v1300, %v2022
    %v2024 = vand.u32 %v2023, 4294901760
    %2025 = vmatpush1.msra.mxu0 %v2024
    %2026 = vmatprep.subr.mxu0 0.0
    %v2027 = vand.u32 %v1299, 4294901760
    %v2028 = vsub.f32 %v1299, %v2027
    %v2029 = vand.u32 %v2028, 4294901760
    %2030 = vmatpush1.msra.mxu0 %v2029
    %2031 = vmatprep.subr.mxu0 0.0
    %v2032 = vand.u32 %v1298, 4294901760
    %v2033 = vsub.f32 %v1298, %v2032
    %v2034 = vand.u32 %v2033, 4294901760
    %2035 = vmatpush1.msra.mxu0 %v2034
    %2036 = vmatprep.subr.mxu0 0.0
    %v2037 = vand.u32 %v1297, 4294901760
    %v2038 = vsub.f32 %v1297, %v2037
    %v2039 = vand.u32 %v2038, 4294901760
    %2040 = vmatpush1.msra.mxu0 %v2039
    %2041 = vmatprep.subr.mxu0 0.0
    %v2042 = vand.u32 %v1296, 4294901760
    %v2043 = vsub.f32 %v1296, %v2042
    %v2044 = vand.u32 %v2043, 4294901760
    %2045 = vmatpush1.msra.mxu0 %v2044
    %2046 = vmatprep.subr.mxu0 0.0
    %v2047 = vand.u32 %v1295, 4294901760
    %v2048 = vsub.f32 %v1295, %v2047
    %v2049 = vand.u32 %v2048, 4294901760
    %2050 = vmatpush1.msra.mxu0 %v2049
    %2051 = vmatprep.subr.mxu0 0.0
    %v2052 = vand.u32 %v1294, 4294901760
    %v2053 = vsub.f32 %v1294, %v2052
    %v2054 = vand.u32 %v2053, 4294901760
    %2055 = vmatpush1.msra.mxu0 %v2054
    %2056 = vmatprep.subr.mxu0 0.0
    %v2057 = vand.u32 %v1293, 4294901760
    %v2058 = vsub.f32 %v1293, %v2057
    %v2059 = vand.u32 %v2058, 4294901760
    %2060 = vmatpush1.msra.mxu0 %v2059
    %2061 = vmatprep.subr.mxu0 0.0
    %v2062 = vand.u32 %v1292, 4294901760
    %v2063 = vsub.f32 %v1292, %v2062
    %v2064 = vand.u32 %v2063, 4294901760
    %2065 = vmatpush1.msra.mxu0 %v2064
    %2066 = vmatprep.subr.mxu0 0.0
    %v2067 = vand.u32 %v1291, 4294901760
    %v2068 = vsub.f32 %v1291, %v2067
    %v2069 = vand.u32 %v2068, 4294901760
    %2070 = vmatpush1.msra.mxu0 %v2069
    %2071 = vmatprep.subr.mxu0 0.0
    %v2072 = vand.u32 %v1290, 4294901760
    %v2073 = vsub.f32 %v1290, %v2072
    %v2074 = vand.u32 %v2073, 4294901760
    %2075 = vmatpush1.msra.mxu0 %v2074
    %2076 = vmatprep.subr.mxu0 0.0
    %v2077 = vand.u32 %v1289, 4294901760
    %v2078 = vsub.f32 %v1289, %v2077
    %v2079 = vand.u32 %v2078, 4294901760
    %2080 = vmatpush1.msra.mxu0 %v2079
    %2081 = vmatprep.subr.mxu0 0.0
    %v2082 = vand.u32 %v1288, 4294901760
    %v2083 = vsub.f32 %v1288, %v2082
    %v2084 = vand.u32 %v2083, 4294901760
    %2085 = vmatpush1.msra.mxu0 %v2084
    %2086 = vmatprep.subr.mxu0 0.0
    %v2087 = vand.u32 %v1287, 4294901760
    %v2088 = vsub.f32 %v1287, %v2087
    %v2089 = vand.u32 %v2088, 4294901760
    %2090 = vmatpush1.msra.mxu0 %v2089
    %2091 = vmatprep.subr.mxu0 0.0
    %v2092 = vand.u32 %v1286, 4294901760
    %v2093 = vsub.f32 %v1286, %v2092
    %v2094 = vand.u32 %v2093, 4294901760
    %2095 = vmatpush1.msra.mxu0 %v2094
    %2096 = vmatprep.subr.mxu0 0.0
    %v2097 = vand.u32 %v1285, 4294901760
    %v2098 = vsub.f32 %v1285, %v2097
    %v2099 = vand.u32 %v2098, 4294901760
    %2100 = vmatpush1.msra.mxu0 %v2099
    %2101 = vmatprep.subr.mxu0 0.0
    %v2102 = vand.u32 %v1316, 4294901760
    %v2103 = vsub.f32 %v1316, %v2102
    %v2104 = vand.u32 %v2103, 4294901760
    %2105 = vmatpush2.msra.mxu0 %v2104
    %2106 = vmatprep.subr.mxu0 0.0
    %v2107 = vand.u32 %v1315, 4294901760
    %v2108 = vsub.f32 %v1315, %v2107
    %v2109 = vand.u32 %v2108, 4294901760
    %2110 = vmatpush2.msra.mxu0 %v2109
    %2111 = vmatprep.subr.mxu0 0.0
    %v2112 = vand.u32 %v1314, 4294901760
    %v2113 = vsub.f32 %v1314, %v2112
    %v2114 = vand.u32 %v2113, 4294901760
    %2115 = vmatpush2.msra.mxu0 %v2114
    %2116 = vmatprep.subr.mxu0 0.0
    %v2117 = vand.u32 %v1313, 4294901760
    %v2118 = vsub.f32 %v1313, %v2117
    %v2119 = vand.u32 %v2118, 4294901760
    %2120 = vmatpush2.msra.mxu0 %v2119
    %2121 = vmatprep.subr.mxu0 0.0
    %v2122 = vand.u32 %v1312, 4294901760
    %v2123 = vsub.f32 %v1312, %v2122
    %v2124 = vand.u32 %v2123, 4294901760
    %2125 = vmatpush2.msra.mxu0 %v2124
    %2126 = vmatprep.subr.mxu0 0.0
    %v2127 = vand.u32 %v1311, 4294901760
    %v2128 = vsub.f32 %v1311, %v2127
    %v2129 = vand.u32 %v2128, 4294901760
    %2130 = vmatpush2.msra.mxu0 %v2129
    %2131 = vmatprep.subr.mxu0 0.0
    %v2132 = vand.u32 %v1310, 4294901760
    %v2133 = vsub.f32 %v1310, %v2132
    %v2134 = vand.u32 %v2133, 4294901760
    %2135 = vmatpush2.msra.mxu0 %v2134
    %2136 = vmatprep.subr.mxu0 0.0
    %v2137 = vand.u32 %v1309, 4294901760
    %v2138 = vsub.f32 %v1309, %v2137
    %v2139 = vand.u32 %v2138, 4294901760
    %2140 = vmatpush2.msra.mxu0 %v2139
    %2141 = vmatprep.subr.mxu0 0.0
    %v2142 = vand.u32 %v1308, 4294901760
    %v2143 = vsub.f32 %v1308, %v2142
    %v2144 = vand.u32 %v2143, 4294901760
    %2145 = vmatpush2.msra.mxu0 %v2144
    %2146 = vmatprep.subr.mxu0 0.0
    %v2147 = vand.u32 %v1307, 4294901760
    %v2148 = vsub.f32 %v1307, %v2147
    %v2149 = vand.u32 %v2148, 4294901760
    %2150 = vmatpush2.msra.mxu0 %v2149
    %2151 = vmatprep.subr.mxu0 0.0
    %v2152 = vand.u32 %v1306, 4294901760
    %v2153 = vsub.f32 %v1306, %v2152
    %v2154 = vand.u32 %v2153, 4294901760
    %2155 = vmatpush2.msra.mxu0 %v2154
    %2156 = vmatprep.subr.mxu0 0.0
    %v2157 = vand.u32 %v1305, 4294901760
    %v2158 = vsub.f32 %v1305, %v2157
    %v2159 = vand.u32 %v2158, 4294901760
    %2160 = vmatpush2.msra.mxu0 %v2159
    %2161 = vmatprep.subr.mxu0 0.0
    %v2162 = vand.u32 %v1304, 4294901760
    %v2163 = vsub.f32 %v1304, %v2162
    %v2164 = vand.u32 %v2163, 4294901760
    %2165 = vmatpush2.msra.mxu0 %v2164
    %2166 = vmatprep.subr.mxu0 0.0
    %v2167 = vand.u32 %v1303, 4294901760
    %v2168 = vsub.f32 %v1303, %v2167
    %v2169 = vand.u32 %v2168, 4294901760
    %2170 = vmatpush2.msra.mxu0 %v2169
    %2171 = vmatprep.subr.mxu0 0.0
    %v2172 = vand.u32 %v1302, 4294901760
    %v2173 = vsub.f32 %v1302, %v2172
    %v2174 = vand.u32 %v2173, 4294901760
    %2175 = vmatpush2.msra.mxu0 %v2174
    %2176 = vmatprep.subr.mxu0 0.0
    %v2177 = vand.u32 %v1301, 4294901760
    %v2178 = vsub.f32 %v1301, %v2177
    %v2179 = vand.u32 %v2178, 4294901760
    %2180 = vmatpush2.msra.mxu0 %v2179
    %v2181 = vand.u32 %v1272, 4294901760
    %2182 = vmatprep.mubr.f32.mxu0 %v2181
    %v2183 = vand.u32 %v1271, 4294901760
    %2184 = vmatmul.mubr.f32.gmra.mxu0 %v2183
    %v2185 = vpop.f32.mrf.mxu0
    %v2186 = vadd.f32 %v2007, %v2185
    %v2187 = vpop.f32.mrf.mxu0
    %v2188 = vand.u32 %v1279, 4294901760
    %2189 = vmatprep.mubr.f32.mxu0 %v2188
    %v2190 = vand.u32 %v1278, 4294901760
    %2191 = vmatmul.mubr.f32.gmra.mxu0 %v2190
    %v2192 = vpop.f32.mrf.mxu0
    %v2193 = vadd.f32 %v2018, %v2192
    %v2194 = vpop.f32.mrf.mxu0
    %2195 = vdwg.mxu0
    %2196 = vmatprep.subr.mxu0 0.0
    %v2197 = vand.u32 %v1300, 4294901760
    %2198 = vmatpush1.msra.mxu0 %v2197
    %2199 = vmatprep.subr.mxu0 0.0
    %v2200 = vand.u32 %v1299, 4294901760
    %2201 = vmatpush1.msra.mxu0 %v2200
    %2202 = vmatprep.subr.mxu0 0.0
    %v2203 = vand.u32 %v1298, 4294901760
    %2204 = vmatpush1.msra.mxu0 %v2203
    %2205 = vmatprep.subr.mxu0 0.0
    %v2206 = vand.u32 %v1297, 4294901760
    %2207 = vmatpush1.msra.mxu0 %v2206
    %2208 = vmatprep.subr.mxu0 0.0
    %v2209 = vand.u32 %v1296, 4294901760
    %2210 = vmatpush1.msra.mxu0 %v2209
    %2211 = vmatprep.subr.mxu0 0.0
    %v2212 = vand.u32 %v1295, 4294901760
    %2213 = vmatpush1.msra.mxu0 %v2212
    %2214 = vmatprep.subr.mxu0 0.0
    %v2215 = vand.u32 %v1294, 4294901760
    %2216 = vmatpush1.msra.mxu0 %v2215
    %2217 = vmatprep.subr.mxu0 0.0
    %v2218 = vand.u32 %v1293, 4294901760
    %2219 = vmatpush1.msra.mxu0 %v2218
    %2220 = vmatprep.subr.mxu0 0.0
    %v2221 = vand.u32 %v1292, 4294901760
    %2222 = vmatpush1.msra.mxu0 %v2221
    %2223 = vmatprep.subr.mxu0 0.0
    %v2224 = vand.u32 %v1291, 4294901760
    %2225 = vmatpush1.msra.mxu0 %v2224
    %2226 = vmatprep.subr.mxu0 0.0
    %v2227 = vand.u32 %v1290, 4294901760
    %2228 = vmatpush1.msra.mxu0 %v2227
    %2229 = vmatprep.subr.mxu0 0.0
    %v2230 = vand.u32 %v1289, 4294901760
    %2231 = vmatpush1.msra.mxu0 %v2230
    %2232 = vmatprep.subr.mxu0 0.0
    %v2233 = vand.u32 %v1288, 4294901760
    %2234 = vmatpush1.msra.mxu0 %v2233
    %2235 = vmatprep.subr.mxu0 0.0
    %v2236 = vand.u32 %v1287, 4294901760
    %2237 = vmatpush1.msra.mxu0 %v2236
    %2238 = vmatprep.subr.mxu0 0.0
    %v2239 = vand.u32 %v1286, 4294901760
    %2240 = vmatpush1.msra.mxu0 %v2239
    %2241 = vmatprep.subr.mxu0 0.0
    %v2242 = vand.u32 %v1285, 4294901760
    %2243 = vmatpush1.msra.mxu0 %v2242
    %2244 = vmatprep.subr.mxu0 0.0
    %v2245 = vand.u32 %v1316, 4294901760
    %2246 = vmatpush2.msra.mxu0 %v2245
    %2247 = vmatprep.subr.mxu0 0.0
    %v2248 = vand.u32 %v1315, 4294901760
    %2249 = vmatpush2.msra.mxu0 %v2248
    %2250 = vmatprep.subr.mxu0 0.0
    %v2251 = vand.u32 %v1314, 4294901760
    %2252 = vmatpush2.msra.mxu0 %v2251
    %2253 = vmatprep.subr.mxu0 0.0
    %v2254 = vand.u32 %v1313, 4294901760
    %2255 = vmatpush2.msra.mxu0 %v2254
    %2256 = vmatprep.subr.mxu0 0.0
    %v2257 = vand.u32 %v1312, 4294901760
    %2258 = vmatpush2.msra.mxu0 %v2257
    %2259 = vmatprep.subr.mxu0 0.0
    %v2260 = vand.u32 %v1311, 4294901760
    %2261 = vmatpush2.msra.mxu0 %v2260
    %2262 = vmatprep.subr.mxu0 0.0
    %v2263 = vand.u32 %v1310, 4294901760
    %2264 = vmatpush2.msra.mxu0 %v2263
    %2265 = vmatprep.subr.mxu0 0.0
    %v2266 = vand.u32 %v1309, 4294901760
    %2267 = vmatpush2.msra.mxu0 %v2266
    %2268 = vmatprep.subr.mxu0 0.0
    %v2269 = vand.u32 %v1308, 4294901760
    %2270 = vmatpush2.msra.mxu0 %v2269
    %2271 = vmatprep.subr.mxu0 0.0
    %v2272 = vand.u32 %v1307, 4294901760
    %2273 = vmatpush2.msra.mxu0 %v2272
    %2274 = vmatprep.subr.mxu0 0.0
    %v2275 = vand.u32 %v1306, 4294901760
    %2276 = vmatpush2.msra.mxu0 %v2275
    %2277 = vmatprep.subr.mxu0 0.0
    %v2278 = vand.u32 %v1305, 4294901760
    %2279 = vmatpush2.msra.mxu0 %v2278
    %2280 = vmatprep.subr.mxu0 0.0
    %v2281 = vand.u32 %v1304, 4294901760
    %2282 = vmatpush2.msra.mxu0 %v2281
    %2283 = vmatprep.subr.mxu0 0.0
    %v2284 = vand.u32 %v1303, 4294901760
    %2285 = vmatpush2.msra.mxu0 %v2284
    %2286 = vmatprep.subr.mxu0 0.0
    %v2287 = vand.u32 %v1302, 4294901760
    %2288 = vmatpush2.msra.mxu0 %v2287
    %2289 = vmatprep.subr.mxu0 0.0
    %v2290 = vand.u32 %v1301, 4294901760
    %2291 = vmatpush2.msra.mxu0 %v2290
    %v2292 = vand.u32 %v1272, 4294901760
    %2293 = vmatprep.mubr.f32.mxu0 %v2292
    %v2294 = vand.u32 %v1271, 4294901760
    %2295 = vmatmul.mubr.f32.gmra.mxu0 %v2294
    %v2296 = vpop.f32.mrf.mxu0
    %v2297 = vadd.f32 %v2186, %v2296
    %v2298 = vpop.f32.mrf.mxu0
    %v2299 = vand.u32 %v1279, 4294901760
    %2300 = vmatprep.mubr.f32.mxu0 %v2299
    %v2301 = vand.u32 %v1278, 4294901760
    %2302 = vmatmul.mubr.f32.gmra.mxu0 %v2301
    %v2303 = vpop.f32.mrf.mxu0
    %v2304 = vadd.f32 %v2193, %v2303
    %v2305 = vpop.f32.mrf.mxu0
    %2306 = vdwg.mxu0
    %2307 = vmatprep.subr.mxu0 0.0
    %v2308 = vand.u32 %v1332, 4294901760
    %2309 = vmatpush1.msra.mxu0 %v2308
    %2310 = vmatprep.subr.mxu0 0.0
    %v2311 = vand.u32 %v1331, 4294901760
    %2312 = vmatpush1.msra.mxu0 %v2311
    %2313 = vmatprep.subr.mxu0 0.0
    %v2314 = vand.u32 %v1330, 4294901760
    %2315 = vmatpush1.msra.mxu0 %v2314
    %2316 = vmatprep.subr.mxu0 0.0
    %v2317 = vand.u32 %v1329, 4294901760
    %2318 = vmatpush1.msra.mxu0 %v2317
    %2319 = vmatprep.subr.mxu0 0.0
    %v2320 = vand.u32 %v1328, 4294901760
    %2321 = vmatpush1.msra.mxu0 %v2320
    %2322 = vmatprep.subr.mxu0 0.0
    %v2323 = vand.u32 %v1327, 4294901760
    %2324 = vmatpush1.msra.mxu0 %v2323
    %2325 = vmatprep.subr.mxu0 0.0
    %v2326 = vand.u32 %v1326, 4294901760
    %2327 = vmatpush1.msra.mxu0 %v2326
    %2328 = vmatprep.subr.mxu0 0.0
    %v2329 = vand.u32 %v1325, 4294901760
    %2330 = vmatpush1.msra.mxu0 %v2329
    %2331 = vmatprep.subr.mxu0 0.0
    %v2332 = vand.u32 %v1324, 4294901760
    %2333 = vmatpush1.msra.mxu0 %v2332
    %2334 = vmatprep.subr.mxu0 0.0
    %v2335 = vand.u32 %v1323, 4294901760
    %2336 = vmatpush1.msra.mxu0 %v2335
    %2337 = vmatprep.subr.mxu0 0.0
    %v2338 = vand.u32 %v1322, 4294901760
    %2339 = vmatpush1.msra.mxu0 %v2338
    %2340 = vmatprep.subr.mxu0 0.0
    %v2341 = vand.u32 %v1321, 4294901760
    %2342 = vmatpush1.msra.mxu0 %v2341
    %2343 = vmatprep.subr.mxu0 0.0
    %v2344 = vand.u32 %v1320, 4294901760
    %2345 = vmatpush1.msra.mxu0 %v2344
    %2346 = vmatprep.subr.mxu0 0.0
    %v2347 = vand.u32 %v1319, 4294901760
    %2348 = vmatpush1.msra.mxu0 %v2347
    %2349 = vmatprep.subr.mxu0 0.0
    %v2350 = vand.u32 %v1318, 4294901760
    %2351 = vmatpush1.msra.mxu0 %v2350
    %2352 = vmatprep.subr.mxu0 0.0
    %v2353 = vand.u32 %v1317, 4294901760
    %2354 = vmatpush1.msra.mxu0 %v2353
    %2355 = vmatprep.subr.mxu0 0.0
    %v2356 = vand.u32 %v1348, 4294901760
    %2357 = vmatpush2.msra.mxu0 %v2356
    %2358 = vmatprep.subr.mxu0 0.0
    %v2359 = vand.u32 %v1347, 4294901760
    %2360 = vmatpush2.msra.mxu0 %v2359
    %2361 = vmatprep.subr.mxu0 0.0
    %v2362 = vand.u32 %v1346, 4294901760
    %2363 = vmatpush2.msra.mxu0 %v2362
    %2364 = vmatprep.subr.mxu0 0.0
    %v2365 = vand.u32 %v1345, 4294901760
    %2366 = vmatpush2.msra.mxu0 %v2365
    %2367 = vmatprep.subr.mxu0 0.0
    %v2368 = vand.u32 %v1344, 4294901760
    %2369 = vmatpush2.msra.mxu0 %v2368
    %2370 = vmatprep.subr.mxu0 0.0
    %v2371 = vand.u32 %v1343, 4294901760
    %2372 = vmatpush2.msra.mxu0 %v2371
    %2373 = vmatprep.subr.mxu0 0.0
    %v2374 = vand.u32 %v1342, 4294901760
    %2375 = vmatpush2.msra.mxu0 %v2374
    %2376 = vmatprep.subr.mxu0 0.0
    %v2377 = vand.u32 %v1341, 4294901760
    %2378 = vmatpush2.msra.mxu0 %v2377
    %2379 = vmatprep.subr.mxu0 0.0
    %v2380 = vand.u32 %v1340, 4294901760
    %2381 = vmatpush2.msra.mxu0 %v2380
    %2382 = vmatprep.subr.mxu0 0.0
    %v2383 = vand.u32 %v1339, 4294901760
    %2384 = vmatpush2.msra.mxu0 %v2383
    %2385 = vmatprep.subr.mxu0 0.0
    %v2386 = vand.u32 %v1338, 4294901760
    %2387 = vmatpush2.msra.mxu0 %v2386
    %2388 = vmatprep.subr.mxu0 0.0
    %v2389 = vand.u32 %v1337, 4294901760
    %2390 = vmatpush2.msra.mxu0 %v2389
    %2391 = vmatprep.subr.mxu0 0.0
    %v2392 = vand.u32 %v1336, 4294901760
    %2393 = vmatpush2.msra.mxu0 %v2392
    %2394 = vmatprep.subr.mxu0 0.0
    %v2395 = vand.u32 %v1335, 4294901760
    %2396 = vmatpush2.msra.mxu0 %v2395
    %2397 = vmatprep.subr.mxu0 0.0
    %v2398 = vand.u32 %v1334, 4294901760
    %2399 = vmatpush2.msra.mxu0 %v2398
    %2400 = vmatprep.subr.mxu0 0.0
    %v2401 = vand.u32 %v1333, 4294901760
    %2402 = vmatpush2.msra.mxu0 %v2401
    %v2403 = vand.u32 %v1274, 4294901760
    %v2404 = vsub.f32 %v1274, %v2403
    %v2405 = vand.u32 %v2404, 4294901760
    %v2406 = vsub.f32 %v2404, %v2405
    %v2407 = vand.u32 %v2406, 4294901760
    %2408 = vmatprep.mubr.f32.mxu0 %v2407
    %v2409 = vand.u32 %v1273, 4294901760
    %v2410 = vsub.f32 %v1273, %v2409
    %v2411 = vand.u32 %v2410, 4294901760
    %v2412 = vsub.f32 %v2410, %v2411
    %v2413 = vand.u32 %v2412, 4294901760
    %2414 = vmatmul.mubr.f32.gmra.mxu0 %v2413
    %v2415 = vpop.f32.mrf.mxu0
    %v2416 = vadd.f32 %v2297, %v2415
    %v2417 = vpop.f32.mrf.mxu0
    %v2418 = vand.u32 %v1281, 4294901760
    %v2419 = vsub.f32 %v1281, %v2418
    %v2420 = vand.u32 %v2419, 4294901760
    %v2421 = vsub.f32 %v2419, %v2420
    %v2422 = vand.u32 %v2421, 4294901760
    %2423 = vmatprep.mubr.f32.mxu0 %v2422
    %v2424 = vand.u32 %v1280, 4294901760
    %v2425 = vsub.f32 %v1280, %v2424
    %v2426 = vand.u32 %v2425, 4294901760
    %v2427 = vsub.f32 %v2425, %v2426
    %v2428 = vand.u32 %v2427, 4294901760
    %2429 = vmatmul.mubr.f32.gmra.mxu0 %v2428
    %v2430 = vpop.f32.mrf.mxu0
    %v2431 = vadd.f32 %v2304, %v2430
    %v2432 = vpop.f32.mrf.mxu0
    %2433 = vdwg.mxu0
    %2434 = vmatprep.subr.mxu0 0.0
    %v2435 = vand.u32 %v1332, 4294901760
    %v2436 = vsub.f32 %v1332, %v2435
    %v2437 = vand.u32 %v2436, 4294901760
    %v2438 = vsub.f32 %v2436, %v2437
    %v2439 = vand.u32 %v2438, 4294901760
    %2440 = vmatpush1.msra.mxu0 %v2439
    %2441 = vmatprep.subr.mxu0 0.0
    %v2442 = vand.u32 %v1331, 4294901760
    %v2443 = vsub.f32 %v1331, %v2442
    %v2444 = vand.u32 %v2443, 4294901760
    %v2445 = vsub.f32 %v2443, %v2444
    %v2446 = vand.u32 %v2445, 4294901760
    %2447 = vmatpush1.msra.mxu0 %v2446
    %2448 = vmatprep.subr.mxu0 0.0
    %v2449 = vand.u32 %v1330, 4294901760
    %v2450 = vsub.f32 %v1330, %v2449
    %v2451 = vand.u32 %v2450, 4294901760
    %v2452 = vsub.f32 %v2450, %v2451
    %v2453 = vand.u32 %v2452, 4294901760
    %2454 = vmatpush1.msra.mxu0 %v2453
    %2455 = vmatprep.subr.mxu0 0.0
    %v2456 = vand.u32 %v1329, 4294901760
    %v2457 = vsub.f32 %v1329, %v2456
    %v2458 = vand.u32 %v2457, 4294901760
    %v2459 = vsub.f32 %v2457, %v2458
    %v2460 = vand.u32 %v2459, 4294901760
    %2461 = vmatpush1.msra.mxu0 %v2460
    %2462 = vmatprep.subr.mxu0 0.0
    %v2463 = vand.u32 %v1328, 4294901760
    %v2464 = vsub.f32 %v1328, %v2463
    %v2465 = vand.u32 %v2464, 4294901760
    %v2466 = vsub.f32 %v2464, %v2465
    %v2467 = vand.u32 %v2466, 4294901760
    %2468 = vmatpush1.msra.mxu0 %v2467
    %2469 = vmatprep.subr.mxu0 0.0
    %v2470 = vand.u32 %v1327, 4294901760
    %v2471 = vsub.f32 %v1327, %v2470
    %v2472 = vand.u32 %v2471, 4294901760
    %v2473 = vsub.f32 %v2471, %v2472
    %v2474 = vand.u32 %v2473, 4294901760
    %2475 = vmatpush1.msra.mxu0 %v2474
    %2476 = vmatprep.subr.mxu0 0.0
    %v2477 = vand.u32 %v1326, 4294901760
    %v2478 = vsub.f32 %v1326, %v2477
    %v2479 = vand.u32 %v2478, 4294901760
    %v2480 = vsub.f32 %v2478, %v2479
    %v2481 = vand.u32 %v2480, 4294901760
    %2482 = vmatpush1.msra.mxu0 %v2481
    %2483 = vmatprep.subr.mxu0 0.0
    %v2484 = vand.u32 %v1325, 4294901760
    %v2485 = vsub.f32 %v1325, %v2484
    %v2486 = vand.u32 %v2485, 4294901760
    %v2487 = vsub.f32 %v2485, %v2486
    %v2488 = vand.u32 %v2487, 4294901760
    %2489 = vmatpush1.msra.mxu0 %v2488
    %2490 = vmatprep.subr.mxu0 0.0
    %v2491 = vand.u32 %v1324, 4294901760
    %v2492 = vsub.f32 %v1324, %v2491
    %v2493 = vand.u32 %v2492, 4294901760
    %v2494 = vsub.f32 %v2492, %v2493
    %v2495 = vand.u32 %v2494, 4294901760
    %2496 = vmatpush1.msra.mxu0 %v2495
    %2497 = vmatprep.subr.mxu0 0.0
    %v2498 = vand.u32 %v1323, 4294901760
    %v2499 = vsub.f32 %v1323, %v2498
    %v2500 = vand.u32 %v2499, 4294901760
    %v2501 = vsub.f32 %v2499, %v2500
    %v2502 = vand.u32 %v2501, 4294901760
    %2503 = vmatpush1.msra.mxu0 %v2502
    %2504 = vmatprep.subr.mxu0 0.0
    %v2505 = vand.u32 %v1322, 4294901760
    %v2506 = vsub.f32 %v1322, %v2505
    %v2507 = vand.u32 %v2506, 4294901760
    %v2508 = vsub.f32 %v2506, %v2507
    %v2509 = vand.u32 %v2508, 4294901760
    %2510 = vmatpush1.msra.mxu0 %v2509
    %2511 = vmatprep.subr.mxu0 0.0
    %v2512 = vand.u32 %v1321, 4294901760
    %v2513 = vsub.f32 %v1321, %v2512
    %v2514 = vand.u32 %v2513, 4294901760
    %v2515 = vsub.f32 %v2513, %v2514
    %v2516 = vand.u32 %v2515, 4294901760
    %2517 = vmatpush1.msra.mxu0 %v2516
    %2518 = vmatprep.subr.mxu0 0.0
    %v2519 = vand.u32 %v1320, 4294901760
    %v2520 = vsub.f32 %v1320, %v2519
    %v2521 = vand.u32 %v2520, 4294901760
    %v2522 = vsub.f32 %v2520, %v2521
    %v2523 = vand.u32 %v2522, 4294901760
    %2524 = vmatpush1.msra.mxu0 %v2523
    %2525 = vmatprep.subr.mxu0 0.0
    %v2526 = vand.u32 %v1319, 4294901760
    %v2527 = vsub.f32 %v1319, %v2526
    %v2528 = vand.u32 %v2527, 4294901760
    %v2529 = vsub.f32 %v2527, %v2528
    %v2530 = vand.u32 %v2529, 4294901760
    %2531 = vmatpush1.msra.mxu0 %v2530
    %2532 = vmatprep.subr.mxu0 0.0
    %v2533 = vand.u32 %v1318, 4294901760
    %v2534 = vsub.f32 %v1318, %v2533
    %v2535 = vand.u32 %v2534, 4294901760
    %v2536 = vsub.f32 %v2534, %v2535
    %v2537 = vand.u32 %v2536, 4294901760
    %2538 = vmatpush1.msra.mxu0 %v2537
    %2539 = vmatprep.subr.mxu0 0.0
    %v2540 = vand.u32 %v1317, 4294901760
    %v2541 = vsub.f32 %v1317, %v2540
    %v2542 = vand.u32 %v2541, 4294901760
    %v2543 = vsub.f32 %v2541, %v2542
    %v2544 = vand.u32 %v2543, 4294901760
    %2545 = vmatpush1.msra.mxu0 %v2544
    %2546 = vmatprep.subr.mxu0 0.0
    %v2547 = vand.u32 %v1348, 4294901760
    %v2548 = vsub.f32 %v1348, %v2547
    %v2549 = vand.u32 %v2548, 4294901760
    %v2550 = vsub.f32 %v2548, %v2549
    %v2551 = vand.u32 %v2550, 4294901760
    %2552 = vmatpush2.msra.mxu0 %v2551
    %2553 = vmatprep.subr.mxu0 0.0
    %v2554 = vand.u32 %v1347, 4294901760
    %v2555 = vsub.f32 %v1347, %v2554
    %v2556 = vand.u32 %v2555, 4294901760
    %v2557 = vsub.f32 %v2555, %v2556
    %v2558 = vand.u32 %v2557, 4294901760
    %2559 = vmatpush2.msra.mxu0 %v2558
    %2560 = vmatprep.subr.mxu0 0.0
    %v2561 = vand.u32 %v1346, 4294901760
    %v2562 = vsub.f32 %v1346, %v2561
    %v2563 = vand.u32 %v2562, 4294901760
    %v2564 = vsub.f32 %v2562, %v2563
    %v2565 = vand.u32 %v2564, 4294901760
    %2566 = vmatpush2.msra.mxu0 %v2565
    %2567 = vmatprep.subr.mxu0 0.0
    %v2568 = vand.u32 %v1345, 4294901760
    %v2569 = vsub.f32 %v1345, %v2568
    %v2570 = vand.u32 %v2569, 4294901760
    %v2571 = vsub.f32 %v2569, %v2570
    %v2572 = vand.u32 %v2571, 4294901760
    %2573 = vmatpush2.msra.mxu0 %v2572
    %2574 = vmatprep.subr.mxu0 0.0
    %v2575 = vand.u32 %v1344, 4294901760
    %v2576 = vsub.f32 %v1344, %v2575
    %v2577 = vand.u32 %v2576, 4294901760
    %v2578 = vsub.f32 %v2576, %v2577
    %v2579 = vand.u32 %v2578, 4294901760
    %2580 = vmatpush2.msra.mxu0 %v2579
    %2581 = vmatprep.subr.mxu0 0.0
    %v2582 = vand.u32 %v1343, 4294901760
    %v2583 = vsub.f32 %v1343, %v2582
    %v2584 = vand.u32 %v2583, 4294901760
    %v2585 = vsub.f32 %v2583, %v2584
    %v2586 = vand.u32 %v2585, 4294901760
    %2587 = vmatpush2.msra.mxu0 %v2586
    %2588 = vmatprep.subr.mxu0 0.0
    %v2589 = vand.u32 %v1342, 4294901760
    %v2590 = vsub.f32 %v1342, %v2589
    %v2591 = vand.u32 %v2590, 4294901760
    %v2592 = vsub.f32 %v2590, %v2591
    %v2593 = vand.u32 %v2592, 4294901760
    %2594 = vmatpush2.msra.mxu0 %v2593
    %2595 = vmatprep.subr.mxu0 0.0
    %v2596 = vand.u32 %v1341, 4294901760
    %v2597 = vsub.f32 %v1341, %v2596
    %v2598 = vand.u32 %v2597, 4294901760
    %v2599 = vsub.f32 %v2597, %v2598
    %v2600 = vand.u32 %v2599, 4294901760
    %2601 = vmatpush2.msra.mxu0 %v2600
    %2602 = vmatprep.subr.mxu0 0.0
    %v2603 = vand.u32 %v1340, 4294901760
    %v2604 = vsub.f32 %v1340, %v2603
    %v2605 = vand.u32 %v2604, 4294901760
    %v2606 = vsub.f32 %v2604, %v2605
    %v2607 = vand.u32 %v2606, 4294901760
    %2608 = vmatpush2.msra.mxu0 %v2607
    %2609 = vmatprep.subr.mxu0 0.0
    %v2610 = vand.u32 %v1339, 4294901760
    %v2611 = vsub.f32 %v1339, %v2610
    %v2612 = vand.u32 %v2611, 4294901760
    %v2613 = vsub.f32 %v2611, %v2612
    %v2614 = vand.u32 %v2613, 4294901760
    %2615 = vmatpush2.msra.mxu0 %v2614
    %2616 = vmatprep.subr.mxu0 0.0
    %v2617 = vand.u32 %v1338, 4294901760
    %v2618 = vsub.f32 %v1338, %v2617
    %v2619 = vand.u32 %v2618, 4294901760
    %v2620 = vsub.f32 %v2618, %v2619
    %v2621 = vand.u32 %v2620, 4294901760
    %2622 = vmatpush2.msra.mxu0 %v2621
    %2623 = vmatprep.subr.mxu0 0.0
    %v2624 = vand.u32 %v1337, 4294901760
    %v2625 = vsub.f32 %v1337, %v2624
    %v2626 = vand.u32 %v2625, 4294901760
    %v2627 = vsub.f32 %v2625, %v2626
    %v2628 = vand.u32 %v2627, 4294901760
    %2629 = vmatpush2.msra.mxu0 %v2628
    %2630 = vmatprep.subr.mxu0 0.0
    %v2631 = vand.u32 %v1336, 4294901760
    %v2632 = vsub.f32 %v1336, %v2631
    %v2633 = vand.u32 %v2632, 4294901760
    %v2634 = vsub.f32 %v2632, %v2633
    %v2635 = vand.u32 %v2634, 4294901760
    %2636 = vmatpush2.msra.mxu0 %v2635
    %2637 = vmatprep.subr.mxu0 0.0
    %v2638 = vand.u32 %v1335, 4294901760
    %v2639 = vsub.f32 %v1335, %v2638
    %v2640 = vand.u32 %v2639, 4294901760
    %v2641 = vsub.f32 %v2639, %v2640
    %v2642 = vand.u32 %v2641, 4294901760
    %2643 = vmatpush2.msra.mxu0 %v2642
    %2644 = vmatprep.subr.mxu0 0.0
    %v2645 = vand.u32 %v1334, 4294901760
    %v2646 = vsub.f32 %v1334, %v2645
    %v2647 = vand.u32 %v2646, 4294901760
    %v2648 = vsub.f32 %v2646, %v2647
    %v2649 = vand.u32 %v2648, 4294901760
    %2650 = vmatpush2.msra.mxu0 %v2649
    %2651 = vmatprep.subr.mxu0 0.0
    %v2652 = vand.u32 %v1333, 4294901760
    %v2653 = vsub.f32 %v1333, %v2652
    %v2654 = vand.u32 %v2653, 4294901760
    %v2655 = vsub.f32 %v2653, %v2654
    %v2656 = vand.u32 %v2655, 4294901760
    %2657 = vmatpush2.msra.mxu0 %v2656
    %v2658 = vand.u32 %v1274, 4294901760
    %2659 = vmatprep.mubr.f32.mxu0 %v2658
    %v2660 = vand.u32 %v1273, 4294901760
    %2661 = vmatmul.mubr.f32.gmra.mxu0 %v2660
    %v2662 = vpop.f32.mrf.mxu0
    %v2663 = vadd.f32 %v2416, %v2662
    %v2664 = vpop.f32.mrf.mxu0
    %v2665 = vand.u32 %v1281, 4294901760
    %2666 = vmatprep.mubr.f32.mxu0 %v2665
    %v2667 = vand.u32 %v1280, 4294901760
    %2668 = vmatmul.mubr.f32.gmra.mxu0 %v2667
    %v2669 = vpop.f32.mrf.mxu0
    %v2670 = vadd.f32 %v2431, %v2669
    %v2671 = vpop.f32.mrf.mxu0
    %2672 = vdwg.mxu0
    %2673 = vmatprep.subr.mxu0 0.0
    %v2674 = vand.u32 %v1332, 4294901760
    %v2675 = vsub.f32 %v1332, %v2674
    %2676 = vmatpush1.msra.mxu0 %v2675
    %2677 = vmatprep.subr.mxu0 0.0
    %v2678 = vand.u32 %v1331, 4294901760
    %v2679 = vsub.f32 %v1331, %v2678
    %2680 = vmatpush1.msra.mxu0 %v2679
    %2681 = vmatprep.subr.mxu0 0.0
    %v2682 = vand.u32 %v1330, 4294901760
    %v2683 = vsub.f32 %v1330, %v2682
    %2684 = vmatpush1.msra.mxu0 %v2683
    %2685 = vmatprep.subr.mxu0 0.0
    %v2686 = vand.u32 %v1329, 4294901760
    %v2687 = vsub.f32 %v1329, %v2686
    %2688 = vmatpush1.msra.mxu0 %v2687
    %2689 = vmatprep.subr.mxu0 0.0
    %v2690 = vand.u32 %v1328, 4294901760
    %v2691 = vsub.f32 %v1328, %v2690
    %2692 = vmatpush1.msra.mxu0 %v2691
    %2693 = vmatprep.subr.mxu0 0.0
    %v2694 = vand.u32 %v1327, 4294901760
    %v2695 = vsub.f32 %v1327, %v2694
    %2696 = vmatpush1.msra.mxu0 %v2695
    %2697 = vmatprep.subr.mxu0 0.0
    %v2698 = vand.u32 %v1326, 4294901760
    %v2699 = vsub.f32 %v1326, %v2698
    %2700 = vmatpush1.msra.mxu0 %v2699
    %2701 = vmatprep.subr.mxu0 0.0
    %v2702 = vand.u32 %v1325, 4294901760
    %v2703 = vsub.f32 %v1325, %v2702
    %2704 = vmatpush1.msra.mxu0 %v2703
    %2705 = vmatprep.subr.mxu0 0.0
    %v2706 = vand.u32 %v1324, 4294901760
    %v2707 = vsub.f32 %v1324, %v2706
    %2708 = vmatpush1.msra.mxu0 %v2707
    %2709 = vmatprep.subr.mxu0 0.0
    %v2710 = vand.u32 %v1323, 4294901760
    %v2711 = vsub.f32 %v1323, %v2710
    %2712 = vmatpush1.msra.mxu0 %v2711
    %2713 = vmatprep.subr.mxu0 0.0
    %v2714 = vand.u32 %v1322, 4294901760
    %v2715 = vsub.f32 %v1322, %v2714
    %2716 = vmatpush1.msra.mxu0 %v2715
    %2717 = vmatprep.subr.mxu0 0.0
    %v2718 = vand.u32 %v1321, 4294901760
    %v2719 = vsub.f32 %v1321, %v2718
    %2720 = vmatpush1.msra.mxu0 %v2719
    %2721 = vmatprep.subr.mxu0 0.0
    %v2722 = vand.u32 %v1320, 4294901760
    %v2723 = vsub.f32 %v1320, %v2722
    %2724 = vmatpush1.msra.mxu0 %v2723
    %2725 = vmatprep.subr.mxu0 0.0
    %v2726 = vand.u32 %v1319, 4294901760
    %v2727 = vsub.f32 %v1319, %v2726
    %2728 = vmatpush1.msra.mxu0 %v2727
    %2729 = vmatprep.subr.mxu0 0.0
    %v2730 = vand.u32 %v1318, 4294901760
    %v2731 = vsub.f32 %v1318, %v2730
    %2732 = vmatpush1.msra.mxu0 %v2731
    %2733 = vmatprep.subr.mxu0 0.0
    %v2734 = vand.u32 %v1317, 4294901760
    %v2735 = vsub.f32 %v1317, %v2734
    %2736 = vmatpush1.msra.mxu0 %v2735
    %2737 = vmatprep.subr.mxu0 0.0
    %v2738 = vand.u32 %v1348, 4294901760
    %v2739 = vsub.f32 %v1348, %v2738
    %2740 = vmatpush2.msra.mxu0 %v2739
    %2741 = vmatprep.subr.mxu0 0.0
    %v2742 = vand.u32 %v1347, 4294901760
    %v2743 = vsub.f32 %v1347, %v2742
    %2744 = vmatpush2.msra.mxu0 %v2743
    %2745 = vmatprep.subr.mxu0 0.0
    %v2746 = vand.u32 %v1346, 4294901760
    %v2747 = vsub.f32 %v1346, %v2746
    %2748 = vmatpush2.msra.mxu0 %v2747
    %2749 = vmatprep.subr.mxu0 0.0
    %v2750 = vand.u32 %v1345, 4294901760
    %v2751 = vsub.f32 %v1345, %v2750
    %2752 = vmatpush2.msra.mxu0 %v2751
    %2753 = vmatprep.subr.mxu0 0.0
    %v2754 = vand.u32 %v1344, 4294901760
    %v2755 = vsub.f32 %v1344, %v2754
    %2756 = vmatpush2.msra.mxu0 %v2755
    %2757 = vmatprep.subr.mxu0 0.0
    %v2758 = vand.u32 %v1343, 4294901760
    %v2759 = vsub.f32 %v1343, %v2758
    %2760 = vmatpush2.msra.mxu0 %v2759
    %2761 = vmatprep.subr.mxu0 0.0
    %v2762 = vand.u32 %v1342, 4294901760
    %v2763 = vsub.f32 %v1342, %v2762
    %2764 = vmatpush2.msra.mxu0 %v2763
    %2765 = vmatprep.subr.mxu0 0.0
    %v2766 = vand.u32 %v1341, 4294901760
    %v2767 = vsub.f32 %v1341, %v2766
    %2768 = vmatpush2.msra.mxu0 %v2767
    %2769 = vmatprep.subr.mxu0 0.0
    %v2770 = vand.u32 %v1340, 4294901760
    %v2771 = vsub.f32 %v1340, %v2770
    %2772 = vmatpush2.msra.mxu0 %v2771
    %2773 = vmatprep.subr.mxu0 0.0
    %v2774 = vand.u32 %v1339, 4294901760
    %v2775 = vsub.f32 %v1339, %v2774
    %2776 = vmatpush2.msra.mxu0 %v2775
    %2777 = vmatprep.subr.mxu0 0.0
    %v2778 = vand.u32 %v1338, 4294901760
    %v2779 = vsub.f32 %v1338, %v2778
    %2780 = vmatpush2.msra.mxu0 %v2779
    %2781 = vmatprep.subr.mxu0 0.0
    %v2782 = vand.u32 %v1337, 4294901760
    %v2783 = vsub.f32 %v1337, %v2782
    %2784 = vmatpush2.msra.mxu0 %v2783
    %2785 = vmatprep.subr.mxu0 0.0
    %v2786 = vand.u32 %v1336, 4294901760
    %v2787 = vsub.f32 %v1336, %v2786
    %2788 = vmatpush2.msra.mxu0 %v2787
    %2789 = vmatprep.subr.mxu0 0.0
    %v2790 = vand.u32 %v1335, 4294901760
    %v2791 = vsub.f32 %v1335, %v2790
    %2792 = vmatpush2.msra.mxu0 %v2791
    %2793 = vmatprep.subr.mxu0 0.0
    %v2794 = vand.u32 %v1334, 4294901760
    %v2795 = vsub.f32 %v1334, %v2794
    %2796 = vmatpush2.msra.mxu0 %v2795
    %2797 = vmatprep.subr.mxu0 0.0
    %v2798 = vand.u32 %v1333, 4294901760
    %v2799 = vsub.f32 %v1333, %v2798
    %2800 = vmatpush2.msra.mxu0 %v2799
    %v2801 = vand.u32 %v1274, 4294901760
    %v2802 = vsub.f32 %v1274, %v2801
    %2803 = vmatprep.mubr.f32.mxu0 %v2802
    %v2804 = vand.u32 %v1273, 4294901760
    %v2805 = vsub.f32 %v1273, %v2804
    %2806 = vmatmul.mubr.f32.gmra.mxu0 %v2805
    %v2807 = vpop.f32.mrf.mxu0
    %v2808 = vadd.f32 %v2663, %v2807
    %v2809 = vpop.f32.mrf.mxu0
    %v2810 = vand.u32 %v1281, 4294901760
    %v2811 = vsub.f32 %v1281, %v2810
    %2812 = vmatprep.mubr.f32.mxu0 %v2811
    %v2813 = vand.u32 %v1280, 4294901760
    %v2814 = vsub.f32 %v1280, %v2813
    %2815 = vmatmul.mubr.f32.gmra.mxu0 %v2814
    %v2816 = vpop.f32.mrf.mxu0
    %v2817 = vadd.f32 %v2670, %v2816
    %v2818 = vpop.f32.mrf.mxu0
    %2819 = vdwg.mxu0
    %2820 = vmatprep.subr.mxu0 0.0
    %v2821 = vand.u32 %v1332, 4294901760
    %2822 = vmatpush1.msra.mxu0 %v2821
    %2823 = vmatprep.subr.mxu0 0.0
    %v2824 = vand.u32 %v1331, 4294901760
    %2825 = vmatpush1.msra.mxu0 %v2824
    %2826 = vmatprep.subr.mxu0 0.0
    %v2827 = vand.u32 %v1330, 4294901760
    %2828 = vmatpush1.msra.mxu0 %v2827
    %2829 = vmatprep.subr.mxu0 0.0
    %v2830 = vand.u32 %v1329, 4294901760
    %2831 = vmatpush1.msra.mxu0 %v2830
    %2832 = vmatprep.subr.mxu0 0.0
    %v2833 = vand.u32 %v1328, 4294901760
    %2834 = vmatpush1.msra.mxu0 %v2833
    %2835 = vmatprep.subr.mxu0 0.0
    %v2836 = vand.u32 %v1327, 4294901760
    %2837 = vmatpush1.msra.mxu0 %v2836
    %2838 = vmatprep.subr.mxu0 0.0
    %v2839 = vand.u32 %v1326, 4294901760
    %2840 = vmatpush1.msra.mxu0 %v2839
    %2841 = vmatprep.subr.mxu0 0.0
    %v2842 = vand.u32 %v1325, 4294901760
    %2843 = vmatpush1.msra.mxu0 %v2842
    %2844 = vmatprep.subr.mxu0 0.0
    %v2845 = vand.u32 %v1324, 4294901760
    %2846 = vmatpush1.msra.mxu0 %v2845
    %2847 = vmatprep.subr.mxu0 0.0
    %v2848 = vand.u32 %v1323, 4294901760
    %2849 = vmatpush1.msra.mxu0 %v2848
    %2850 = vmatprep.subr.mxu0 0.0
    %v2851 = vand.u32 %v1322, 4294901760
    %2852 = vmatpush1.msra.mxu0 %v2851
    %2853 = vmatprep.subr.mxu0 0.0
    %v2854 = vand.u32 %v1321, 4294901760
    %2855 = vmatpush1.msra.mxu0 %v2854
    %2856 = vmatprep.subr.mxu0 0.0
    %v2857 = vand.u32 %v1320, 4294901760
    %2858 = vmatpush1.msra.mxu0 %v2857
    %2859 = vmatprep.subr.mxu0 0.0
    %v2860 = vand.u32 %v1319, 4294901760
    %2861 = vmatpush1.msra.mxu0 %v2860
    %2862 = vmatprep.subr.mxu0 0.0
    %v2863 = vand.u32 %v1318, 4294901760
    %2864 = vmatpush1.msra.mxu0 %v2863
    %2865 = vmatprep.subr.mxu0 0.0
    %v2866 = vand.u32 %v1317, 4294901760
    %2867 = vmatpush1.msra.mxu0 %v2866
    %2868 = vmatprep.subr.mxu0 0.0
    %v2869 = vand.u32 %v1348, 4294901760
    %2870 = vmatpush2.msra.mxu0 %v2869
    %2871 = vmatprep.subr.mxu0 0.0
    %v2872 = vand.u32 %v1347, 4294901760
    %2873 = vmatpush2.msra.mxu0 %v2872
    %2874 = vmatprep.subr.mxu0 0.0
    %v2875 = vand.u32 %v1346, 4294901760
    %2876 = vmatpush2.msra.mxu0 %v2875
    %2877 = vmatprep.subr.mxu0 0.0
    %v2878 = vand.u32 %v1345, 4294901760
    %2879 = vmatpush2.msra.mxu0 %v2878
    %2880 = vmatprep.subr.mxu0 0.0
    %v2881 = vand.u32 %v1344, 4294901760
    %2882 = vmatpush2.msra.mxu0 %v2881
    %2883 = vmatprep.subr.mxu0 0.0
    %v2884 = vand.u32 %v1343, 4294901760
    %2885 = vmatpush2.msra.mxu0 %v2884
    %2886 = vmatprep.subr.mxu0 0.0
    %v2887 = vand.u32 %v1342, 4294901760
    %2888 = vmatpush2.msra.mxu0 %v2887
    %2889 = vmatprep.subr.mxu0 0.0
    %v2890 = vand.u32 %v1341, 4294901760
    %2891 = vmatpush2.msra.mxu0 %v2890
    %2892 = vmatprep.subr.mxu0 0.0
    %v2893 = vand.u32 %v1340, 4294901760
    %2894 = vmatpush2.msra.mxu0 %v2893
    %2895 = vmatprep.subr.mxu0 0.0
    %v2896 = vand.u32 %v1339, 4294901760
    %2897 = vmatpush2.msra.mxu0 %v2896
    %2898 = vmatprep.subr.mxu0 0.0
    %v2899 = vand.u32 %v1338, 4294901760
    %2900 = vmatpush2.msra.mxu0 %v2899
    %2901 = vmatprep.subr.mxu0 0.0
    %v2902 = vand.u32 %v1337, 4294901760
    %2903 = vmatpush2.msra.mxu0 %v2902
    %2904 = vmatprep.subr.mxu0 0.0
    %v2905 = vand.u32 %v1336, 4294901760
    %2906 = vmatpush2.msra.mxu0 %v2905
    %2907 = vmatprep.subr.mxu0 0.0
    %v2908 = vand.u32 %v1335, 4294901760
    %2909 = vmatpush2.msra.mxu0 %v2908
    %2910 = vmatprep.subr.mxu0 0.0
    %v2911 = vand.u32 %v1334, 4294901760
    %2912 = vmatpush2.msra.mxu0 %v2911
    %2913 = vmatprep.subr.mxu0 0.0
    %v2914 = vand.u32 %v1333, 4294901760
    %2915 = vmatpush2.msra.mxu0 %v2914
    %v2916 = vand.u32 %v1274, 4294901760
    %v2917 = vsub.f32 %v1274, %v2916
    %v2918 = vand.u32 %v2917, 4294901760
    %2919 = vmatprep.mubr.f32.mxu0 %v2918
    %v2920 = vand.u32 %v1273, 4294901760
    %v2921 = vsub.f32 %v1273, %v2920
    %v2922 = vand.u32 %v2921, 4294901760
    %2923 = vmatmul.mubr.f32.gmra.mxu0 %v2922
    %v2924 = vpop.f32.mrf.mxu0
    %v2925 = vadd.f32 %v2808, %v2924
    %v2926 = vpop.f32.mrf.mxu0
    %v2927 = vand.u32 %v1281, 4294901760
    %v2928 = vsub.f32 %v1281, %v2927
    %v2929 = vand.u32 %v2928, 4294901760
    %2930 = vmatprep.mubr.f32.mxu0 %v2929
    %v2931 = vand.u32 %v1280, 4294901760
    %v2932 = vsub.f32 %v1280, %v2931
    %v2933 = vand.u32 %v2932, 4294901760
    %2934 = vmatmul.mubr.f32.gmra.mxu0 %v2933
    %v2935 = vpop.f32.mrf.mxu0
    %v2936 = vadd.f32 %v2817, %v2935
    %v2937 = vpop.f32.mrf.mxu0
    %2938 = vdwg.mxu0
    %2939 = vmatprep.subr.mxu0 0.0
    %v2940 = vand.u32 %v1332, 4294901760
    %v2941 = vsub.f32 %v1332, %v2940
    %v2942 = vand.u32 %v2941, 4294901760
    %2943 = vmatpush1.msra.mxu0 %v2942
    %2944 = vmatprep.subr.mxu0 0.0
    %v2945 = vand.u32 %v1331, 4294901760
    %v2946 = vsub.f32 %v1331, %v2945
    %v2947 = vand.u32 %v2946, 4294901760
    %2948 = vmatpush1.msra.mxu0 %v2947
    %2949 = vmatprep.subr.mxu0 0.0
    %v2950 = vand.u32 %v1330, 4294901760
    %v2951 = vsub.f32 %v1330, %v2950
    %v2952 = vand.u32 %v2951, 4294901760
    %2953 = vmatpush1.msra.mxu0 %v2952
    %2954 = vmatprep.subr.mxu0 0.0
    %v2955 = vand.u32 %v1329, 4294901760
    %v2956 = vsub.f32 %v1329, %v2955
    %v2957 = vand.u32 %v2956, 4294901760
    %2958 = vmatpush1.msra.mxu0 %v2957
    %2959 = vmatprep.subr.mxu0 0.0
    %v2960 = vand.u32 %v1328, 4294901760
    %v2961 = vsub.f32 %v1328, %v2960
    %v2962 = vand.u32 %v2961, 4294901760
    %2963 = vmatpush1.msra.mxu0 %v2962
    %2964 = vmatprep.subr.mxu0 0.0
    %v2965 = vand.u32 %v1327, 4294901760
    %v2966 = vsub.f32 %v1327, %v2965
    %v2967 = vand.u32 %v2966, 4294901760
    %2968 = vmatpush1.msra.mxu0 %v2967
    %2969 = vmatprep.subr.mxu0 0.0
    %v2970 = vand.u32 %v1326, 4294901760
    %v2971 = vsub.f32 %v1326, %v2970
    %v2972 = vand.u32 %v2971, 4294901760
    %2973 = vmatpush1.msra.mxu0 %v2972
    %2974 = vmatprep.subr.mxu0 0.0
    %v2975 = vand.u32 %v1325, 4294901760
    %v2976 = vsub.f32 %v1325, %v2975
    %v2977 = vand.u32 %v2976, 4294901760
    %2978 = vmatpush1.msra.mxu0 %v2977
    %2979 = vmatprep.subr.mxu0 0.0
    %v2980 = vand.u32 %v1324, 4294901760
    %v2981 = vsub.f32 %v1324, %v2980
    %v2982 = vand.u32 %v2981, 4294901760
    %2983 = vmatpush1.msra.mxu0 %v2982
    %2984 = vmatprep.subr.mxu0 0.0
    %v2985 = vand.u32 %v1323, 4294901760
    %v2986 = vsub.f32 %v1323, %v2985
    %v2987 = vand.u32 %v2986, 4294901760
    %2988 = vmatpush1.msra.mxu0 %v2987
    %2989 = vmatprep.subr.mxu0 0.0
    %v2990 = vand.u32 %v1322, 4294901760
    %v2991 = vsub.f32 %v1322, %v2990
    %v2992 = vand.u32 %v2991, 4294901760
    %2993 = vmatpush1.msra.mxu0 %v2992
    %2994 = vmatprep.subr.mxu0 0.0
    %v2995 = vand.u32 %v1321, 4294901760
    %v2996 = vsub.f32 %v1321, %v2995
    %v2997 = vand.u32 %v2996, 4294901760
    %2998 = vmatpush1.msra.mxu0 %v2997
    %2999 = vmatprep.subr.mxu0 0.0
    %v3000 = vand.u32 %v1320, 4294901760
    %v3001 = vsub.f32 %v1320, %v3000
    %v3002 = vand.u32 %v3001, 4294901760
    %3003 = vmatpush1.msra.mxu0 %v3002
    %3004 = vmatprep.subr.mxu0 0.0
    %v3005 = vand.u32 %v1319, 4294901760
    %v3006 = vsub.f32 %v1319, %v3005
    %v3007 = vand.u32 %v3006, 4294901760
    %3008 = vmatpush1.msra.mxu0 %v3007
    %3009 = vmatprep.subr.mxu0 0.0
    %v3010 = vand.u32 %v1318, 4294901760
    %v3011 = vsub.f32 %v1318, %v3010
    %v3012 = vand.u32 %v3011, 4294901760
    %3013 = vmatpush1.msra.mxu0 %v3012
    %3014 = vmatprep.subr.mxu0 0.0
    %v3015 = vand.u32 %v1317, 4294901760
    %v3016 = vsub.f32 %v1317, %v3015
    %v3017 = vand.u32 %v3016, 4294901760
    %3018 = vmatpush1.msra.mxu0 %v3017
    %3019 = vmatprep.subr.mxu0 0.0
    %v3020 = vand.u32 %v1348, 4294901760
    %v3021 = vsub.f32 %v1348, %v3020
    %v3022 = vand.u32 %v3021, 4294901760
    %3023 = vmatpush2.msra.mxu0 %v3022
    %3024 = vmatprep.subr.mxu0 0.0
    %v3025 = vand.u32 %v1347, 4294901760
    %v3026 = vsub.f32 %v1347, %v3025
    %v3027 = vand.u32 %v3026, 4294901760
    %3028 = vmatpush2.msra.mxu0 %v3027
    %3029 = vmatprep.subr.mxu0 0.0
    %v3030 = vand.u32 %v1346, 4294901760
    %v3031 = vsub.f32 %v1346, %v3030
    %v3032 = vand.u32 %v3031, 4294901760
    %3033 = vmatpush2.msra.mxu0 %v3032
    %3034 = vmatprep.subr.mxu0 0.0
    %v3035 = vand.u32 %v1345, 4294901760
    %v3036 = vsub.f32 %v1345, %v3035
    %v3037 = vand.u32 %v3036, 4294901760
    %3038 = vmatpush2.msra.mxu0 %v3037
    %3039 = vmatprep.subr.mxu0 0.0
    %v3040 = vand.u32 %v1344, 4294901760
    %v3041 = vsub.f32 %v1344, %v3040
    %v3042 = vand.u32 %v3041, 4294901760
    %3043 = vmatpush2.msra.mxu0 %v3042
    %3044 = vmatprep.subr.mxu0 0.0
    %v3045 = vand.u32 %v1343, 4294901760
    %v3046 = vsub.f32 %v1343, %v3045
    %v3047 = vand.u32 %v3046, 4294901760
    %3048 = vmatpush2.msra.mxu0 %v3047
    %3049 = vmatprep.subr.mxu0 0.0
    %v3050 = vand.u32 %v1342, 4294901760
    %v3051 = vsub.f32 %v1342, %v3050
    %v3052 = vand.u32 %v3051, 4294901760
    %3053 = vmatpush2.msra.mxu0 %v3052
    %3054 = vmatprep.subr.mxu0 0.0
    %v3055 = vand.u32 %v1341, 4294901760
    %v3056 = vsub.f32 %v1341, %v3055
    %v3057 = vand.u32 %v3056, 4294901760
    %3058 = vmatpush2.msra.mxu0 %v3057
    %3059 = vmatprep.subr.mxu0 0.0
    %v3060 = vand.u32 %v1340, 4294901760
    %v3061 = vsub.f32 %v1340, %v3060
    %v3062 = vand.u32 %v3061, 4294901760
    %3063 = vmatpush2.msra.mxu0 %v3062
    %3064 = vmatprep.subr.mxu0 0.0
    %v3065 = vand.u32 %v1339, 4294901760
    %v3066 = vsub.f32 %v1339, %v3065
    %v3067 = vand.u32 %v3066, 4294901760
    %3068 = vmatpush2.msra.mxu0 %v3067
    %3069 = vmatprep.subr.mxu0 0.0
    %v3070 = vand.u32 %v1338, 4294901760
    %v3071 = vsub.f32 %v1338, %v3070
    %v3072 = vand.u32 %v3071, 4294901760
    %3073 = vmatpush2.msra.mxu0 %v3072
    %3074 = vmatprep.subr.mxu0 0.0
    %v3075 = vand.u32 %v1337, 4294901760
    %v3076 = vsub.f32 %v1337, %v3075
    %v3077 = vand.u32 %v3076, 4294901760
    %3078 = vmatpush2.msra.mxu0 %v3077
    %3079 = vmatprep.subr.mxu0 0.0
    %v3080 = vand.u32 %v1336, 4294901760
    %v3081 = vsub.f32 %v1336, %v3080
    %v3082 = vand.u32 %v3081, 4294901760
    %3083 = vmatpush2.msra.mxu0 %v3082
    %3084 = vmatprep.subr.mxu0 0.0
    %v3085 = vand.u32 %v1335, 4294901760
    %v3086 = vsub.f32 %v1335, %v3085
    %v3087 = vand.u32 %v3086, 4294901760
    %3088 = vmatpush2.msra.mxu0 %v3087
    %3089 = vmatprep.subr.mxu0 0.0
    %v3090 = vand.u32 %v1334, 4294901760
    %v3091 = vsub.f32 %v1334, %v3090
    %v3092 = vand.u32 %v3091, 4294901760
    %3093 = vmatpush2.msra.mxu0 %v3092
    %3094 = vmatprep.subr.mxu0 0.0
    %v3095 = vand.u32 %v1333, 4294901760
    %v3096 = vsub.f32 %v1333, %v3095
    %v3097 = vand.u32 %v3096, 4294901760
    %3098 = vmatpush2.msra.mxu0 %v3097
    %v3099 = vand.u32 %v1274, 4294901760
    %3100 = vmatprep.mubr.f32.mxu0 %v3099
    %v3101 = vand.u32 %v1273, 4294901760
    %3102 = vmatmul.mubr.f32.gmra.mxu0 %v3101
    %v3103 = vpop.f32.mrf.mxu0
    %v3104 = vadd.f32 %v2925, %v3103
    %v3105 = vpop.f32.mrf.mxu0
    %v3106 = vand.u32 %v1281, 4294901760
    %3107 = vmatprep.mubr.f32.mxu0 %v3106
    %v3108 = vand.u32 %v1280, 4294901760
    %3109 = vmatmul.mubr.f32.gmra.mxu0 %v3108
    %v3110 = vpop.f32.mrf.mxu0
    %v3111 = vadd.f32 %v2936, %v3110
    %v3112 = vpop.f32.mrf.mxu0
    %3113 = vdwg.mxu0
    %3114 = vmatprep.subr.mxu0 0.0
    %v3115 = vand.u32 %v1332, 4294901760
    %3116 = vmatpush1.msra.mxu0 %v3115
    %3117 = vmatprep.subr.mxu0 0.0
    %v3118 = vand.u32 %v1331, 4294901760
    %3119 = vmatpush1.msra.mxu0 %v3118
    %3120 = vmatprep.subr.mxu0 0.0
    %v3121 = vand.u32 %v1330, 4294901760
    %3122 = vmatpush1.msra.mxu0 %v3121
    %3123 = vmatprep.subr.mxu0 0.0
    %v3124 = vand.u32 %v1329, 4294901760
    %3125 = vmatpush1.msra.mxu0 %v3124
    %3126 = vmatprep.subr.mxu0 0.0
    %v3127 = vand.u32 %v1328, 4294901760
    %3128 = vmatpush1.msra.mxu0 %v3127
    %3129 = vmatprep.subr.mxu0 0.0
    %v3130 = vand.u32 %v1327, 4294901760
    %3131 = vmatpush1.msra.mxu0 %v3130
    %3132 = vmatprep.subr.mxu0 0.0
    %v3133 = vand.u32 %v1326, 4294901760
    %3134 = vmatpush1.msra.mxu0 %v3133
    %3135 = vmatprep.subr.mxu0 0.0
    %v3136 = vand.u32 %v1325, 4294901760
    %3137 = vmatpush1.msra.mxu0 %v3136
    %3138 = vmatprep.subr.mxu0 0.0
    %v3139 = vand.u32 %v1324, 4294901760
    %3140 = vmatpush1.msra.mxu0 %v3139
    %3141 = vmatprep.subr.mxu0 0.0
    %v3142 = vand.u32 %v1323, 4294901760
    %3143 = vmatpush1.msra.mxu0 %v3142
    %3144 = vmatprep.subr.mxu0 0.0
    %v3145 = vand.u32 %v1322, 4294901760
    %3146 = vmatpush1.msra.mxu0 %v3145
    %3147 = vmatprep.subr.mxu0 0.0
    %v3148 = vand.u32 %v1321, 4294901760
    %3149 = vmatpush1.msra.mxu0 %v3148
    %3150 = vmatprep.subr.mxu0 0.0
    %v3151 = vand.u32 %v1320, 4294901760
    %3152 = vmatpush1.msra.mxu0 %v3151
    %3153 = vmatprep.subr.mxu0 0.0
    %v3154 = vand.u32 %v1319, 4294901760
    %3155 = vmatpush1.msra.mxu0 %v3154
    %3156 = vmatprep.subr.mxu0 0.0
    %v3157 = vand.u32 %v1318, 4294901760
    %3158 = vmatpush1.msra.mxu0 %v3157
    %3159 = vmatprep.subr.mxu0 0.0
    %v3160 = vand.u32 %v1317, 4294901760
    %3161 = vmatpush1.msra.mxu0 %v3160
    %3162 = vmatprep.subr.mxu0 0.0
    %v3163 = vand.u32 %v1348, 4294901760
    %3164 = vmatpush2.msra.mxu0 %v3163
    %3165 = vmatprep.subr.mxu0 0.0
    %v3166 = vand.u32 %v1347, 4294901760
    %3167 = vmatpush2.msra.mxu0 %v3166
    %3168 = vmatprep.subr.mxu0 0.0
    %v3169 = vand.u32 %v1346, 4294901760
    %3170 = vmatpush2.msra.mxu0 %v3169
    %3171 = vmatprep.subr.mxu0 0.0
    %v3172 = vand.u32 %v1345, 4294901760
    %3173 = vmatpush2.msra.mxu0 %v3172
    %3174 = vmatprep.subr.mxu0 0.0
    %v3175 = vand.u32 %v1344, 4294901760
    %3176 = vmatpush2.msra.mxu0 %v3175
    %3177 = vmatprep.subr.mxu0 0.0
    %v3178 = vand.u32 %v1343, 4294901760
    %3179 = vmatpush2.msra.mxu0 %v3178
    %3180 = vmatprep.subr.mxu0 0.0
    %v3181 = vand.u32 %v1342, 4294901760
    %3182 = vmatpush2.msra.mxu0 %v3181
    %3183 = vmatprep.subr.mxu0 0.0
    %v3184 = vand.u32 %v1341, 4294901760
    %3185 = vmatpush2.msra.mxu0 %v3184
    %3186 = vmatprep.subr.mxu0 0.0
    %v3187 = vand.u32 %v1340, 4294901760
    %3188 = vmatpush2.msra.mxu0 %v3187
    %3189 = vmatprep.subr.mxu0 0.0
    %v3190 = vand.u32 %v1339, 4294901760
    %3191 = vmatpush2.msra.mxu0 %v3190
    %3192 = vmatprep.subr.mxu0 0.0
    %v3193 = vand.u32 %v1338, 4294901760
    %3194 = vmatpush2.msra.mxu0 %v3193
    %3195 = vmatprep.subr.mxu0 0.0
    %v3196 = vand.u32 %v1337, 4294901760
    %3197 = vmatpush2.msra.mxu0 %v3196
    %3198 = vmatprep.subr.mxu0 0.0
    %v3199 = vand.u32 %v1336, 4294901760
    %3200 = vmatpush2.msra.mxu0 %v3199
    %3201 = vmatprep.subr.mxu0 0.0
    %v3202 = vand.u32 %v1335, 4294901760
    %3203 = vmatpush2.msra.mxu0 %v3202
    %3204 = vmatprep.subr.mxu0 0.0
    %v3205 = vand.u32 %v1334, 4294901760
    %3206 = vmatpush2.msra.mxu0 %v3205
    %3207 = vmatprep.subr.mxu0 0.0
    %v3208 = vand.u32 %v1333, 4294901760
    %3209 = vmatpush2.msra.mxu0 %v3208
    %v3210 = vand.u32 %v1274, 4294901760
    %3211 = vmatprep.mubr.f32.mxu0 %v3210
    %v3212 = vand.u32 %v1273, 4294901760
    %3213 = vmatmul.mubr.f32.gmra.mxu0 %v3212
    %v3214 = vpop.f32.mrf.mxu0
    %v3215 = vadd.f32 %v3104, %v3214
    %v3216 = vpop.f32.mrf.mxu0
    %v3217 = vand.u32 %v1281, 4294901760
    %3218 = vmatprep.mubr.f32.mxu0 %v3217
    %v3219 = vand.u32 %v1280, 4294901760
    %3220 = vmatmul.mubr.f32.gmra.mxu0 %v3219
    %v3221 = vpop.f32.mrf.mxu0
    %v3222 = vadd.f32 %v3111, %v3221
    %v3223 = vpop.f32.mrf.mxu0
    %3224 = vdwg.mxu0
    %3225 = vmatprep.subr.mxu0 0.0
    %v3226 = vand.u32 %v1364, 4294901760
    %3227 = vmatpush1.msra.mxu0 %v3226
    %3228 = vmatprep.subr.mxu0 0.0
    %v3229 = vand.u32 %v1363, 4294901760
    %3230 = vmatpush1.msra.mxu0 %v3229
    %3231 = vmatprep.subr.mxu0 0.0
    %v3232 = vand.u32 %v1362, 4294901760
    %3233 = vmatpush1.msra.mxu0 %v3232
    %3234 = vmatprep.subr.mxu0 0.0
    %v3235 = vand.u32 %v1361, 4294901760
    %3236 = vmatpush1.msra.mxu0 %v3235
    %3237 = vmatprep.subr.mxu0 0.0
    %v3238 = vand.u32 %v1360, 4294901760
    %3239 = vmatpush1.msra.mxu0 %v3238
    %3240 = vmatprep.subr.mxu0 0.0
    %v3241 = vand.u32 %v1359, 4294901760
    %3242 = vmatpush1.msra.mxu0 %v3241
    %3243 = vmatprep.subr.mxu0 0.0
    %v3244 = vand.u32 %v1358, 4294901760
    %3245 = vmatpush1.msra.mxu0 %v3244
    %3246 = vmatprep.subr.mxu0 0.0
    %v3247 = vand.u32 %v1357, 4294901760
    %3248 = vmatpush1.msra.mxu0 %v3247
    %3249 = vmatprep.subr.mxu0 0.0
    %v3250 = vand.u32 %v1356, 4294901760
    %3251 = vmatpush1.msra.mxu0 %v3250
    %3252 = vmatprep.subr.mxu0 0.0
    %v3253 = vand.u32 %v1355, 4294901760
    %3254 = vmatpush1.msra.mxu0 %v3253
    %3255 = vmatprep.subr.mxu0 0.0
    %v3256 = vand.u32 %v1354, 4294901760
    %3257 = vmatpush1.msra.mxu0 %v3256
    %3258 = vmatprep.subr.mxu0 0.0
    %v3259 = vand.u32 %v1353, 4294901760
    %3260 = vmatpush1.msra.mxu0 %v3259
    %3261 = vmatprep.subr.mxu0 0.0
    %v3262 = vand.u32 %v1352, 4294901760
    %3263 = vmatpush1.msra.mxu0 %v3262
    %3264 = vmatprep.subr.mxu0 0.0
    %v3265 = vand.u32 %v1351, 4294901760
    %3266 = vmatpush1.msra.mxu0 %v3265
    %3267 = vmatprep.subr.mxu0 0.0
    %v3268 = vand.u32 %v1350, 4294901760
    %3269 = vmatpush1.msra.mxu0 %v3268
    %3270 = vmatprep.subr.mxu0 0.0
    %v3271 = vand.u32 %v1349, 4294901760
    %3272 = vmatpush1.msra.mxu0 %v3271
    %3273 = vmatprep.subr.mxu0 0.0
    %v3274 = vand.u32 %v1380, 4294901760
    %3275 = vmatpush2.msra.mxu0 %v3274
    %3276 = vmatprep.subr.mxu0 0.0
    %v3277 = vand.u32 %v1379, 4294901760
    %3278 = vmatpush2.msra.mxu0 %v3277
    %3279 = vmatprep.subr.mxu0 0.0
    %v3280 = vand.u32 %v1378, 4294901760
    %3281 = vmatpush2.msra.mxu0 %v3280
    %3282 = vmatprep.subr.mxu0 0.0
    %v3283 = vand.u32 %v1377, 4294901760
    %3284 = vmatpush2.msra.mxu0 %v3283
    %3285 = vmatprep.subr.mxu0 0.0
    %v3286 = vand.u32 %v1376, 4294901760
    %3287 = vmatpush2.msra.mxu0 %v3286
    %3288 = vmatprep.subr.mxu0 0.0
    %v3289 = vand.u32 %v1375, 4294901760
    %3290 = vmatpush2.msra.mxu0 %v3289
    %3291 = vmatprep.subr.mxu0 0.0
    %v3292 = vand.u32 %v1374, 4294901760
    %3293 = vmatpush2.msra.mxu0 %v3292
    %3294 = vmatprep.subr.mxu0 0.0
    %v3295 = vand.u32 %v1373, 4294901760
    %3296 = vmatpush2.msra.mxu0 %v3295
    %3297 = vmatprep.subr.mxu0 0.0
    %v3298 = vand.u32 %v1372, 4294901760
    %3299 = vmatpush2.msra.mxu0 %v3298
    %3300 = vmatprep.subr.mxu0 0.0
    %v3301 = vand.u32 %v1371, 4294901760
    %3302 = vmatpush2.msra.mxu0 %v3301
    %3303 = vmatprep.subr.mxu0 0.0
    %v3304 = vand.u32 %v1370, 4294901760
    %3305 = vmatpush2.msra.mxu0 %v3304
    %3306 = vmatprep.subr.mxu0 0.0
    %v3307 = vand.u32 %v1369, 4294901760
    %3308 = vmatpush2.msra.mxu0 %v3307
    %3309 = vmatprep.subr.mxu0 0.0
    %v3310 = vand.u32 %v1368, 4294901760
    %3311 = vmatpush2.msra.mxu0 %v3310
    %3312 = vmatprep.subr.mxu0 0.0
    %v3313 = vand.u32 %v1367, 4294901760
    %3314 = vmatpush2.msra.mxu0 %v3313
    %3315 = vmatprep.subr.mxu0 0.0
    %v3316 = vand.u32 %v1366, 4294901760
    %3317 = vmatpush2.msra.mxu0 %v3316
    %3318 = vmatprep.subr.mxu0 0.0
    %v3319 = vand.u32 %v1365, 4294901760
    %3320 = vmatpush2.msra.mxu0 %v3319
    %v3321 = vand.u32 %v1276, 4294901760
    %v3322 = vsub.f32 %v1276, %v3321
    %v3323 = vand.u32 %v3322, 4294901760
    %v3324 = vsub.f32 %v3322, %v3323
    %v3325 = vand.u32 %v3324, 4294901760
    %3326 = vmatprep.mubr.f32.mxu0 %v3325
    %v3327 = vand.u32 %v1275, 4294901760
    %v3328 = vsub.f32 %v1275, %v3327
    %v3329 = vand.u32 %v3328, 4294901760
    %v3330 = vsub.f32 %v3328, %v3329
    %v3331 = vand.u32 %v3330, 4294901760
    %3332 = vmatmul.mubr.f32.gmra.mxu0 %v3331
    %v3333 = vpop.f32.mrf.mxu0
    %v3334 = vadd.f32 %v3215, %v3333
    %v3335 = vpop.f32.mrf.mxu0
    %v3336 = vand.u32 %v1283, 4294901760
    %v3337 = vsub.f32 %v1283, %v3336
    %v3338 = vand.u32 %v3337, 4294901760
    %v3339 = vsub.f32 %v3337, %v3338
    %v3340 = vand.u32 %v3339, 4294901760
    %3341 = vmatprep.mubr.f32.mxu0 %v3340
    %v3342 = vand.u32 %v1282, 4294901760
    %v3343 = vsub.f32 %v1282, %v3342
    %v3344 = vand.u32 %v3343, 4294901760
    %v3345 = vsub.f32 %v3343, %v3344
    %v3346 = vand.u32 %v3345, 4294901760
    %3347 = vmatmul.mubr.f32.gmra.mxu0 %v3346
    %v3348 = vpop.f32.mrf.mxu0
    %v3349 = vadd.f32 %v3222, %v3348
    %v3350 = vpop.f32.mrf.mxu0
    %3351 = vdwg.mxu0
    %3352 = vmatprep.subr.mxu0 0.0
    %v3353 = vand.u32 %v1364, 4294901760
    %v3354 = vsub.f32 %v1364, %v3353
    %v3355 = vand.u32 %v3354, 4294901760
    %v3356 = vsub.f32 %v3354, %v3355
    %v3357 = vand.u32 %v3356, 4294901760
    %3358 = vmatpush1.msra.mxu0 %v3357
    %3359 = vmatprep.subr.mxu0 0.0
    %v3360 = vand.u32 %v1363, 4294901760
    %v3361 = vsub.f32 %v1363, %v3360
    %v3362 = vand.u32 %v3361, 4294901760
    %v3363 = vsub.f32 %v3361, %v3362
    %v3364 = vand.u32 %v3363, 4294901760
    %3365 = vmatpush1.msra.mxu0 %v3364
    %3366 = vmatprep.subr.mxu0 0.0
    %v3367 = vand.u32 %v1362, 4294901760
    %v3368 = vsub.f32 %v1362, %v3367
    %v3369 = vand.u32 %v3368, 4294901760
    %v3370 = vsub.f32 %v3368, %v3369
    %v3371 = vand.u32 %v3370, 4294901760
    %3372 = vmatpush1.msra.mxu0 %v3371
    %3373 = vmatprep.subr.mxu0 0.0
    %v3374 = vand.u32 %v1361, 4294901760
    %v3375 = vsub.f32 %v1361, %v3374
    %v3376 = vand.u32 %v3375, 4294901760
    %v3377 = vsub.f32 %v3375, %v3376
    %v3378 = vand.u32 %v3377, 4294901760
    %3379 = vmatpush1.msra.mxu0 %v3378
    %3380 = vmatprep.subr.mxu0 0.0
    %v3381 = vand.u32 %v1360, 4294901760
    %v3382 = vsub.f32 %v1360, %v3381
    %v3383 = vand.u32 %v3382, 4294901760
    %v3384 = vsub.f32 %v3382, %v3383
    %v3385 = vand.u32 %v3384, 4294901760
    %3386 = vmatpush1.msra.mxu0 %v3385
    %3387 = vmatprep.subr.mxu0 0.0
    %v3388 = vand.u32 %v1359, 4294901760
    %v3389 = vsub.f32 %v1359, %v3388
    %v3390 = vand.u32 %v3389, 4294901760
    %v3391 = vsub.f32 %v3389, %v3390
    %v3392 = vand.u32 %v3391, 4294901760
    %3393 = vmatpush1.msra.mxu0 %v3392
    %3394 = vmatprep.subr.mxu0 0.0
    %v3395 = vand.u32 %v1358, 4294901760
    %v3396 = vsub.f32 %v1358, %v3395
    %v3397 = vand.u32 %v3396, 4294901760
    %v3398 = vsub.f32 %v3396, %v3397
    %v3399 = vand.u32 %v3398, 4294901760
    %3400 = vmatpush1.msra.mxu0 %v3399
    %3401 = vmatprep.subr.mxu0 0.0
    %v3402 = vand.u32 %v1357, 4294901760
    %v3403 = vsub.f32 %v1357, %v3402
    %v3404 = vand.u32 %v3403, 4294901760
    %v3405 = vsub.f32 %v3403, %v3404
    %v3406 = vand.u32 %v3405, 4294901760
    %3407 = vmatpush1.msra.mxu0 %v3406
    %3408 = vmatprep.subr.mxu0 0.0
    %v3409 = vand.u32 %v1356, 4294901760
    %v3410 = vsub.f32 %v1356, %v3409
    %v3411 = vand.u32 %v3410, 4294901760
    %v3412 = vsub.f32 %v3410, %v3411
    %v3413 = vand.u32 %v3412, 4294901760
    %3414 = vmatpush1.msra.mxu0 %v3413
    %3415 = vmatprep.subr.mxu0 0.0
    %v3416 = vand.u32 %v1355, 4294901760
    %v3417 = vsub.f32 %v1355, %v3416
    %v3418 = vand.u32 %v3417, 4294901760
    %v3419 = vsub.f32 %v3417, %v3418
    %v3420 = vand.u32 %v3419, 4294901760
    %3421 = vmatpush1.msra.mxu0 %v3420
    %3422 = vmatprep.subr.mxu0 0.0
    %v3423 = vand.u32 %v1354, 4294901760
    %v3424 = vsub.f32 %v1354, %v3423
    %v3425 = vand.u32 %v3424, 4294901760
    %v3426 = vsub.f32 %v3424, %v3425
    %v3427 = vand.u32 %v3426, 4294901760
    %3428 = vmatpush1.msra.mxu0 %v3427
    %3429 = vmatprep.subr.mxu0 0.0
    %v3430 = vand.u32 %v1353, 4294901760
    %v3431 = vsub.f32 %v1353, %v3430
    %v3432 = vand.u32 %v3431, 4294901760
    %v3433 = vsub.f32 %v3431, %v3432
    %v3434 = vand.u32 %v3433, 4294901760
    %3435 = vmatpush1.msra.mxu0 %v3434
    %3436 = vmatprep.subr.mxu0 0.0
    %v3437 = vand.u32 %v1352, 4294901760
    %v3438 = vsub.f32 %v1352, %v3437
    %v3439 = vand.u32 %v3438, 4294901760
    %v3440 = vsub.f32 %v3438, %v3439
    %v3441 = vand.u32 %v3440, 4294901760
    %3442 = vmatpush1.msra.mxu0 %v3441
    %3443 = vmatprep.subr.mxu0 0.0
    %v3444 = vand.u32 %v1351, 4294901760
    %v3445 = vsub.f32 %v1351, %v3444
    %v3446 = vand.u32 %v3445, 4294901760
    %v3447 = vsub.f32 %v3445, %v3446
    %v3448 = vand.u32 %v3447, 4294901760
    %3449 = vmatpush1.msra.mxu0 %v3448
    %3450 = vmatprep.subr.mxu0 0.0
    %v3451 = vand.u32 %v1350, 4294901760
    %v3452 = vsub.f32 %v1350, %v3451
    %v3453 = vand.u32 %v3452, 4294901760
    %v3454 = vsub.f32 %v3452, %v3453
    %v3455 = vand.u32 %v3454, 4294901760
    %3456 = vmatpush1.msra.mxu0 %v3455
    %3457 = vmatprep.subr.mxu0 0.0
    %v3458 = vand.u32 %v1349, 4294901760
    %v3459 = vsub.f32 %v1349, %v3458
    %v3460 = vand.u32 %v3459, 4294901760
    %v3461 = vsub.f32 %v3459, %v3460
    %v3462 = vand.u32 %v3461, 4294901760
    %3463 = vmatpush1.msra.mxu0 %v3462
    %3464 = vmatprep.subr.mxu0 0.0
    %v3465 = vand.u32 %v1380, 4294901760
    %v3466 = vsub.f32 %v1380, %v3465
    %v3467 = vand.u32 %v3466, 4294901760
    %v3468 = vsub.f32 %v3466, %v3467
    %v3469 = vand.u32 %v3468, 4294901760
    %3470 = vmatpush2.msra.mxu0 %v3469
    %3471 = vmatprep.subr.mxu0 0.0
    %v3472 = vand.u32 %v1379, 4294901760
    %v3473 = vsub.f32 %v1379, %v3472
    %v3474 = vand.u32 %v3473, 4294901760
    %v3475 = vsub.f32 %v3473, %v3474
    %v3476 = vand.u32 %v3475, 4294901760
    %3477 = vmatpush2.msra.mxu0 %v3476
    %3478 = vmatprep.subr.mxu0 0.0
    %v3479 = vand.u32 %v1378, 4294901760
    %v3480 = vsub.f32 %v1378, %v3479
    %v3481 = vand.u32 %v3480, 4294901760
    %v3482 = vsub.f32 %v3480, %v3481
    %v3483 = vand.u32 %v3482, 4294901760
    %3484 = vmatpush2.msra.mxu0 %v3483
    %3485 = vmatprep.subr.mxu0 0.0
    %v3486 = vand.u32 %v1377, 4294901760
    %v3487 = vsub.f32 %v1377, %v3486
    %v3488 = vand.u32 %v3487, 4294901760
    %v3489 = vsub.f32 %v3487, %v3488
    %v3490 = vand.u32 %v3489, 4294901760
    %3491 = vmatpush2.msra.mxu0 %v3490
    %3492 = vmatprep.subr.mxu0 0.0
    %v3493 = vand.u32 %v1376, 4294901760
    %v3494 = vsub.f32 %v1376, %v3493
    %v3495 = vand.u32 %v3494, 4294901760
    %v3496 = vsub.f32 %v3494, %v3495
    %v3497 = vand.u32 %v3496, 4294901760
    %3498 = vmatpush2.msra.mxu0 %v3497
    %3499 = vmatprep.subr.mxu0 0.0
    %v3500 = vand.u32 %v1375, 4294901760
    %v3501 = vsub.f32 %v1375, %v3500
    %v3502 = vand.u32 %v3501, 4294901760
    %v3503 = vsub.f32 %v3501, %v3502
    %v3504 = vand.u32 %v3503, 4294901760
    %3505 = vmatpush2.msra.mxu0 %v3504
    %3506 = vmatprep.subr.mxu0 0.0
    %v3507 = vand.u32 %v1374, 4294901760
    %v3508 = vsub.f32 %v1374, %v3507
    %v3509 = vand.u32 %v3508, 4294901760
    %v3510 = vsub.f32 %v3508, %v3509
    %v3511 = vand.u32 %v3510, 4294901760
    %3512 = vmatpush2.msra.mxu0 %v3511
    %3513 = vmatprep.subr.mxu0 0.0
    %v3514 = vand.u32 %v1373, 4294901760
    %v3515 = vsub.f32 %v1373, %v3514
    %v3516 = vand.u32 %v3515, 4294901760
    %v3517 = vsub.f32 %v3515, %v3516
    %v3518 = vand.u32 %v3517, 4294901760
    %3519 = vmatpush2.msra.mxu0 %v3518
    %3520 = vmatprep.subr.mxu0 0.0
    %v3521 = vand.u32 %v1372, 4294901760
    %v3522 = vsub.f32 %v1372, %v3521
    %v3523 = vand.u32 %v3522, 4294901760
    %v3524 = vsub.f32 %v3522, %v3523
    %v3525 = vand.u32 %v3524, 4294901760
    %3526 = vmatpush2.msra.mxu0 %v3525
    %3527 = vmatprep.subr.mxu0 0.0
    %v3528 = vand.u32 %v1371, 4294901760
    %v3529 = vsub.f32 %v1371, %v3528
    %v3530 = vand.u32 %v3529, 4294901760
    %v3531 = vsub.f32 %v3529, %v3530
    %v3532 = vand.u32 %v3531, 4294901760
    %3533 = vmatpush2.msra.mxu0 %v3532
    %3534 = vmatprep.subr.mxu0 0.0
    %v3535 = vand.u32 %v1370, 4294901760
    %v3536 = vsub.f32 %v1370, %v3535
    %v3537 = vand.u32 %v3536, 4294901760
    %v3538 = vsub.f32 %v3536, %v3537
    %v3539 = vand.u32 %v3538, 4294901760
    %3540 = vmatpush2.msra.mxu0 %v3539
    %3541 = vmatprep.subr.mxu0 0.0
    %v3542 = vand.u32 %v1369, 4294901760
    %v3543 = vsub.f32 %v1369, %v3542
    %v3544 = vand.u32 %v3543, 4294901760
    %v3545 = vsub.f32 %v3543, %v3544
    %v3546 = vand.u32 %v3545, 4294901760
    %3547 = vmatpush2.msra.mxu0 %v3546
    %3548 = vmatprep.subr.mxu0 0.0
    %v3549 = vand.u32 %v1368, 4294901760
    %v3550 = vsub.f32 %v1368, %v3549
    %v3551 = vand.u32 %v3550, 4294901760
    %v3552 = vsub.f32 %v3550, %v3551
    %v3553 = vand.u32 %v3552, 4294901760
    %3554 = vmatpush2.msra.mxu0 %v3553
    %3555 = vmatprep.subr.mxu0 0.0
    %v3556 = vand.u32 %v1367, 4294901760
    %v3557 = vsub.f32 %v1367, %v3556
    %v3558 = vand.u32 %v3557, 4294901760
    %v3559 = vsub.f32 %v3557, %v3558
    %v3560 = vand.u32 %v3559, 4294901760
    %3561 = vmatpush2.msra.mxu0 %v3560
    %3562 = vmatprep.subr.mxu0 0.0
    %v3563 = vand.u32 %v1366, 4294901760
    %v3564 = vsub.f32 %v1366, %v3563
    %v3565 = vand.u32 %v3564, 4294901760
    %v3566 = vsub.f32 %v3564, %v3565
    %v3567 = vand.u32 %v3566, 4294901760
    %3568 = vmatpush2.msra.mxu0 %v3567
    %3569 = vmatprep.subr.mxu0 0.0
    %v3570 = vand.u32 %v1365, 4294901760
    %v3571 = vsub.f32 %v1365, %v3570
    %v3572 = vand.u32 %v3571, 4294901760
    %v3573 = vsub.f32 %v3571, %v3572
    %v3574 = vand.u32 %v3573, 4294901760
    %3575 = vmatpush2.msra.mxu0 %v3574
    %v3576 = vand.u32 %v1276, 4294901760
    %3577 = vmatprep.mubr.f32.mxu0 %v3576
    %v3578 = vand.u32 %v1275, 4294901760
    %3579 = vmatmul.mubr.f32.gmra.mxu0 %v3578
    %v3580 = vpop.f32.mrf.mxu0
    %v3581 = vadd.f32 %v3334, %v3580
    %v3582 = vpop.f32.mrf.mxu0
    %v3583 = vand.u32 %v1283, 4294901760
    %3584 = vmatprep.mubr.f32.mxu0 %v3583
    %v3585 = vand.u32 %v1282, 4294901760
    %3586 = vmatmul.mubr.f32.gmra.mxu0 %v3585
    %v3587 = vpop.f32.mrf.mxu0
    %v3588 = vadd.f32 %v3349, %v3587
    %v3589 = vpop.f32.mrf.mxu0
    %3590 = vdwg.mxu0
    %3591 = vmatprep.subr.mxu0 0.0
    %v3592 = vand.u32 %v1364, 4294901760
    %v3593 = vsub.f32 %v1364, %v3592
    %3594 = vmatpush1.msra.mxu0 %v3593
    %3595 = vmatprep.subr.mxu0 0.0
    %v3596 = vand.u32 %v1363, 4294901760
    %v3597 = vsub.f32 %v1363, %v3596
    %3598 = vmatpush1.msra.mxu0 %v3597
    %3599 = vmatprep.subr.mxu0 0.0
    %v3600 = vand.u32 %v1362, 4294901760
    %v3601 = vsub.f32 %v1362, %v3600
    %3602 = vmatpush1.msra.mxu0 %v3601
    %3603 = vmatprep.subr.mxu0 0.0
    %v3604 = vand.u32 %v1361, 4294901760
    %v3605 = vsub.f32 %v1361, %v3604
    %3606 = vmatpush1.msra.mxu0 %v3605
    %3607 = vmatprep.subr.mxu0 0.0
    %v3608 = vand.u32 %v1360, 4294901760
    %v3609 = vsub.f32 %v1360, %v3608
    %3610 = vmatpush1.msra.mxu0 %v3609
    %3611 = vmatprep.subr.mxu0 0.0
    %v3612 = vand.u32 %v1359, 4294901760
    %v3613 = vsub.f32 %v1359, %v3612
    %3614 = vmatpush1.msra.mxu0 %v3613
    %3615 = vmatprep.subr.mxu0 0.0
    %v3616 = vand.u32 %v1358, 4294901760
    %v3617 = vsub.f32 %v1358, %v3616
    %3618 = vmatpush1.msra.mxu0 %v3617
    %3619 = vmatprep.subr.mxu0 0.0
    %v3620 = vand.u32 %v1357, 4294901760
    %v3621 = vsub.f32 %v1357, %v3620
    %3622 = vmatpush1.msra.mxu0 %v3621
    %3623 = vmatprep.subr.mxu0 0.0
    %v3624 = vand.u32 %v1356, 4294901760
    %v3625 = vsub.f32 %v1356, %v3624
    %3626 = vmatpush1.msra.mxu0 %v3625
    %3627 = vmatprep.subr.mxu0 0.0
    %v3628 = vand.u32 %v1355, 4294901760
    %v3629 = vsub.f32 %v1355, %v3628
    %3630 = vmatpush1.msra.mxu0 %v3629
    %3631 = vmatprep.subr.mxu0 0.0
    %v3632 = vand.u32 %v1354, 4294901760
    %v3633 = vsub.f32 %v1354, %v3632
    %3634 = vmatpush1.msra.mxu0 %v3633
    %3635 = vmatprep.subr.mxu0 0.0
    %v3636 = vand.u32 %v1353, 4294901760
    %v3637 = vsub.f32 %v1353, %v3636
    %3638 = vmatpush1.msra.mxu0 %v3637
    %3639 = vmatprep.subr.mxu0 0.0
    %v3640 = vand.u32 %v1352, 4294901760
    %v3641 = vsub.f32 %v1352, %v3640
    %3642 = vmatpush1.msra.mxu0 %v3641
    %3643 = vmatprep.subr.mxu0 0.0
    %v3644 = vand.u32 %v1351, 4294901760
    %v3645 = vsub.f32 %v1351, %v3644
    %3646 = vmatpush1.msra.mxu0 %v3645
    %3647 = vmatprep.subr.mxu0 0.0
    %v3648 = vand.u32 %v1350, 4294901760
    %v3649 = vsub.f32 %v1350, %v3648
    %3650 = vmatpush1.msra.mxu0 %v3649
    %3651 = vmatprep.subr.mxu0 0.0
    %v3652 = vand.u32 %v1349, 4294901760
    %v3653 = vsub.f32 %v1349, %v3652
    %3654 = vmatpush1.msra.mxu0 %v3653
    %3655 = vmatprep.subr.mxu0 0.0
    %v3656 = vand.u32 %v1380, 4294901760
    %v3657 = vsub.f32 %v1380, %v3656
    %3658 = vmatpush2.msra.mxu0 %v3657
    %3659 = vmatprep.subr.mxu0 0.0
    %v3660 = vand.u32 %v1379, 4294901760
    %v3661 = vsub.f32 %v1379, %v3660
    %3662 = vmatpush2.msra.mxu0 %v3661
    %3663 = vmatprep.subr.mxu0 0.0
    %v3664 = vand.u32 %v1378, 4294901760
    %v3665 = vsub.f32 %v1378, %v3664
    %3666 = vmatpush2.msra.mxu0 %v3665
    %3667 = vmatprep.subr.mxu0 0.0
    %v3668 = vand.u32 %v1377, 4294901760
    %v3669 = vsub.f32 %v1377, %v3668
    %3670 = vmatpush2.msra.mxu0 %v3669
    %3671 = vmatprep.subr.mxu0 0.0
    %v3672 = vand.u32 %v1376, 4294901760
    %v3673 = vsub.f32 %v1376, %v3672
    %3674 = vmatpush2.msra.mxu0 %v3673
    %3675 = vmatprep.subr.mxu0 0.0
    %v3676 = vand.u32 %v1375, 4294901760
    %v3677 = vsub.f32 %v1375, %v3676
    %3678 = vmatpush2.msra.mxu0 %v3677
    %3679 = vmatprep.subr.mxu0 0.0
    %v3680 = vand.u32 %v1374, 4294901760
    %v3681 = vsub.f32 %v1374, %v3680
    %3682 = vmatpush2.msra.mxu0 %v3681
    %3683 = vmatprep.subr.mxu0 0.0
    %v3684 = vand.u32 %v1373, 4294901760
    %v3685 = vsub.f32 %v1373, %v3684
    %3686 = vmatpush2.msra.mxu0 %v3685
    %3687 = vmatprep.subr.mxu0 0.0
    %v3688 = vand.u32 %v1372, 4294901760
    %v3689 = vsub.f32 %v1372, %v3688
    %3690 = vmatpush2.msra.mxu0 %v3689
    %3691 = vmatprep.subr.mxu0 0.0
    %v3692 = vand.u32 %v1371, 4294901760
    %v3693 = vsub.f32 %v1371, %v3692
    %3694 = vmatpush2.msra.mxu0 %v3693
    %3695 = vmatprep.subr.mxu0 0.0
    %v3696 = vand.u32 %v1370, 4294901760
    %v3697 = vsub.f32 %v1370, %v3696
    %3698 = vmatpush2.msra.mxu0 %v3697
    %3699 = vmatprep.subr.mxu0 0.0
    %v3700 = vand.u32 %v1369, 4294901760
    %v3701 = vsub.f32 %v1369, %v3700
    %3702 = vmatpush2.msra.mxu0 %v3701
    %3703 = vmatprep.subr.mxu0 0.0
    %v3704 = vand.u32 %v1368, 4294901760
    %v3705 = vsub.f32 %v1368, %v3704
    %3706 = vmatpush2.msra.mxu0 %v3705
    %3707 = vmatprep.subr.mxu0 0.0
    %v3708 = vand.u32 %v1367, 4294901760
    %v3709 = vsub.f32 %v1367, %v3708
    %3710 = vmatpush2.msra.mxu0 %v3709
    %3711 = vmatprep.subr.mxu0 0.0
    %v3712 = vand.u32 %v1366, 4294901760
    %v3713 = vsub.f32 %v1366, %v3712
    %3714 = vmatpush2.msra.mxu0 %v3713
    %3715 = vmatprep.subr.mxu0 0.0
    %v3716 = vand.u32 %v1365, 4294901760
    %v3717 = vsub.f32 %v1365, %v3716
    %3718 = vmatpush2.msra.mxu0 %v3717
    %v3719 = vand.u32 %v1276, 4294901760
    %v3720 = vsub.f32 %v1276, %v3719
    %3721 = vmatprep.mubr.f32.mxu0 %v3720
    %v3722 = vand.u32 %v1275, 4294901760
    %v3723 = vsub.f32 %v1275, %v3722
    %3724 = vmatmul.mubr.f32.gmra.mxu0 %v3723
    %v3725 = vpop.f32.mrf.mxu0
    %v3726 = vadd.f32 %v3581, %v3725
    %v3727 = vpop.f32.mrf.mxu0
    %v3728 = vand.u32 %v1283, 4294901760
    %v3729 = vsub.f32 %v1283, %v3728
    %3730 = vmatprep.mubr.f32.mxu0 %v3729
    %v3731 = vand.u32 %v1282, 4294901760
    %v3732 = vsub.f32 %v1282, %v3731
    %3733 = vmatmul.mubr.f32.gmra.mxu0 %v3732
    %v3734 = vpop.f32.mrf.mxu0
    %v3735 = vadd.f32 %v3588, %v3734
    %v3736 = vpop.f32.mrf.mxu0
    %3737 = vdwg.mxu0
    %3738 = vmatprep.subr.mxu0 0.0
    %v3739 = vand.u32 %v1364, 4294901760
    %3740 = vmatpush1.msra.mxu0 %v3739
    %3741 = vmatprep.subr.mxu0 0.0
    %v3742 = vand.u32 %v1363, 4294901760
    %3743 = vmatpush1.msra.mxu0 %v3742
    %3744 = vmatprep.subr.mxu0 0.0
    %v3745 = vand.u32 %v1362, 4294901760
    %3746 = vmatpush1.msra.mxu0 %v3745
    %3747 = vmatprep.subr.mxu0 0.0
    %v3748 = vand.u32 %v1361, 4294901760
    %3749 = vmatpush1.msra.mxu0 %v3748
    %3750 = vmatprep.subr.mxu0 0.0
    %v3751 = vand.u32 %v1360, 4294901760
    %3752 = vmatpush1.msra.mxu0 %v3751
    %3753 = vmatprep.subr.mxu0 0.0
    %v3754 = vand.u32 %v1359, 4294901760
    %3755 = vmatpush1.msra.mxu0 %v3754
    %3756 = vmatprep.subr.mxu0 0.0
    %v3757 = vand.u32 %v1358, 4294901760
    %3758 = vmatpush1.msra.mxu0 %v3757
    %3759 = vmatprep.subr.mxu0 0.0
    %v3760 = vand.u32 %v1357, 4294901760
    %3761 = vmatpush1.msra.mxu0 %v3760
    %3762 = vmatprep.subr.mxu0 0.0
    %v3763 = vand.u32 %v1356, 4294901760
    %3764 = vmatpush1.msra.mxu0 %v3763
    %3765 = vmatprep.subr.mxu0 0.0
    %v3766 = vand.u32 %v1355, 4294901760
    %3767 = vmatpush1.msra.mxu0 %v3766
    %3768 = vmatprep.subr.mxu0 0.0
    %v3769 = vand.u32 %v1354, 4294901760
    %3770 = vmatpush1.msra.mxu0 %v3769
    %3771 = vmatprep.subr.mxu0 0.0
    %v3772 = vand.u32 %v1353, 4294901760
    %3773 = vmatpush1.msra.mxu0 %v3772
    %3774 = vmatprep.subr.mxu0 0.0
    %v3775 = vand.u32 %v1352, 4294901760
    %3776 = vmatpush1.msra.mxu0 %v3775
    %3777 = vmatprep.subr.mxu0 0.0
    %v3778 = vand.u32 %v1351, 4294901760
    %3779 = vmatpush1.msra.mxu0 %v3778
    %3780 = vmatprep.subr.mxu0 0.0
    %v3781 = vand.u32 %v1350, 4294901760
    %3782 = vmatpush1.msra.mxu0 %v3781
    %3783 = vmatprep.subr.mxu0 0.0
    %v3784 = vand.u32 %v1349, 4294901760
    %3785 = vmatpush1.msra.mxu0 %v3784
    %3786 = vmatprep.subr.mxu0 0.0
    %v3787 = vand.u32 %v1380, 4294901760
    %3788 = vmatpush2.msra.mxu0 %v3787
    %3789 = vmatprep.subr.mxu0 0.0
    %v3790 = vand.u32 %v1379, 4294901760
    %3791 = vmatpush2.msra.mxu0 %v3790
    %3792 = vmatprep.subr.mxu0 0.0
    %v3793 = vand.u32 %v1378, 4294901760
    %3794 = vmatpush2.msra.mxu0 %v3793
    %3795 = vmatprep.subr.mxu0 0.0
    %v3796 = vand.u32 %v1377, 4294901760
    %3797 = vmatpush2.msra.mxu0 %v3796
    %3798 = vmatprep.subr.mxu0 0.0
    %v3799 = vand.u32 %v1376, 4294901760
    %3800 = vmatpush2.msra.mxu0 %v3799
    %3801 = vmatprep.subr.mxu0 0.0
    %v3802 = vand.u32 %v1375, 4294901760
    %3803 = vmatpush2.msra.mxu0 %v3802
    %3804 = vmatprep.subr.mxu0 0.0
    %v3805 = vand.u32 %v1374, 4294901760
    %3806 = vmatpush2.msra.mxu0 %v3805
    %3807 = vmatprep.subr.mxu0 0.0
    %v3808 = vand.u32 %v1373, 4294901760
    %3809 = vmatpush2.msra.mxu0 %v3808
    %3810 = vmatprep.subr.mxu0 0.0
    %v3811 = vand.u32 %v1372, 4294901760
    %3812 = vmatpush2.msra.mxu0 %v3811
    %3813 = vmatprep.subr.mxu0 0.0
    %v3814 = vand.u32 %v1371, 4294901760
    %3815 = vmatpush2.msra.mxu0 %v3814
    %3816 = vmatprep.subr.mxu0 0.0
    %v3817 = vand.u32 %v1370, 4294901760
    %3818 = vmatpush2.msra.mxu0 %v3817
    %3819 = vmatprep.subr.mxu0 0.0
    %v3820 = vand.u32 %v1369, 4294901760
    %3821 = vmatpush2.msra.mxu0 %v3820
    %3822 = vmatprep.subr.mxu0 0.0
    %v3823 = vand.u32 %v1368, 4294901760
    %3824 = vmatpush2.msra.mxu0 %v3823
    %3825 = vmatprep.subr.mxu0 0.0
    %v3826 = vand.u32 %v1367, 4294901760
    %3827 = vmatpush2.msra.mxu0 %v3826
    %3828 = vmatprep.subr.mxu0 0.0
    %v3829 = vand.u32 %v1366, 4294901760
    %3830 = vmatpush2.msra.mxu0 %v3829
    %3831 = vmatprep.subr.mxu0 0.0
    %v3832 = vand.u32 %v1365, 4294901760
    %3833 = vmatpush2.msra.mxu0 %v3832
    %v3834 = vand.u32 %v1276, 4294901760
    %v3835 = vsub.f32 %v1276, %v3834
    %v3836 = vand.u32 %v3835, 4294901760
    %3837 = vmatprep.mubr.f32.mxu0 %v3836
    %v3838 = vand.u32 %v1275, 4294901760
    %v3839 = vsub.f32 %v1275, %v3838
    %v3840 = vand.u32 %v3839, 4294901760
    %3841 = vmatmul.mubr.f32.gmra.mxu0 %v3840
    %v3842 = vpop.f32.mrf.mxu0
    %v3843 = vadd.f32 %v3726, %v3842
    %v3844 = vpop.f32.mrf.mxu0
    %v3845 = vand.u32 %v1283, 4294901760
    %v3846 = vsub.f32 %v1283, %v3845
    %v3847 = vand.u32 %v3846, 4294901760
    %3848 = vmatprep.mubr.f32.mxu0 %v3847
    %v3849 = vand.u32 %v1282, 4294901760
    %v3850 = vsub.f32 %v1282, %v3849
    %v3851 = vand.u32 %v3850, 4294901760
    %3852 = vmatmul.mubr.f32.gmra.mxu0 %v3851
    %v3853 = vpop.f32.mrf.mxu0
    %v3854 = vadd.f32 %v3735, %v3853
    %v3855 = vpop.f32.mrf.mxu0
    %3856 = vdwg.mxu0
    %3857 = vmatprep.subr.mxu0 0.0
    %v3858 = vand.u32 %v1364, 4294901760
    %v3859 = vsub.f32 %v1364, %v3858
    %v3860 = vand.u32 %v3859, 4294901760
    %3861 = vmatpush1.msra.mxu0 %v3860
    %3862 = vmatprep.subr.mxu0 0.0
    %v3863 = vand.u32 %v1363, 4294901760
    %v3864 = vsub.f32 %v1363, %v3863
    %v3865 = vand.u32 %v3864, 4294901760
    %3866 = vmatpush1.msra.mxu0 %v3865
    %3867 = vmatprep.subr.mxu0 0.0
    %v3868 = vand.u32 %v1362, 4294901760
    %v3869 = vsub.f32 %v1362, %v3868
    %v3870 = vand.u32 %v3869, 4294901760
    %3871 = vmatpush1.msra.mxu0 %v3870
    %3872 = vmatprep.subr.mxu0 0.0
    %v3873 = vand.u32 %v1361, 4294901760
    %v3874 = vsub.f32 %v1361, %v3873
    %v3875 = vand.u32 %v3874, 4294901760
    %3876 = vmatpush1.msra.mxu0 %v3875
    %3877 = vmatprep.subr.mxu0 0.0
    %v3878 = vand.u32 %v1360, 4294901760
    %v3879 = vsub.f32 %v1360, %v3878
    %v3880 = vand.u32 %v3879, 4294901760
    %3881 = vmatpush1.msra.mxu0 %v3880
    %3882 = vmatprep.subr.mxu0 0.0
    %v3883 = vand.u32 %v1359, 4294901760
    %v3884 = vsub.f32 %v1359, %v3883
    %v3885 = vand.u32 %v3884, 4294901760
    %3886 = vmatpush1.msra.mxu0 %v3885
    %3887 = vmatprep.subr.mxu0 0.0
    %v3888 = vand.u32 %v1358, 4294901760
    %v3889 = vsub.f32 %v1358, %v3888
    %v3890 = vand.u32 %v3889, 4294901760
    %3891 = vmatpush1.msra.mxu0 %v3890
    %3892 = vmatprep.subr.mxu0 0.0
    %v3893 = vand.u32 %v1357, 4294901760
    %v3894 = vsub.f32 %v1357, %v3893
    %v3895 = vand.u32 %v3894, 4294901760
    %3896 = vmatpush1.msra.mxu0 %v3895
    %3897 = vmatprep.subr.mxu0 0.0
    %v3898 = vand.u32 %v1356, 4294901760
    %v3899 = vsub.f32 %v1356, %v3898
    %v3900 = vand.u32 %v3899, 4294901760
    %3901 = vmatpush1.msra.mxu0 %v3900
    %3902 = vmatprep.subr.mxu0 0.0
    %v3903 = vand.u32 %v1355, 4294901760
    %v3904 = vsub.f32 %v1355, %v3903
    %v3905 = vand.u32 %v3904, 4294901760
    %3906 = vmatpush1.msra.mxu0 %v3905
    %3907 = vmatprep.subr.mxu0 0.0
    %v3908 = vand.u32 %v1354, 4294901760
    %v3909 = vsub.f32 %v1354, %v3908
    %v3910 = vand.u32 %v3909, 4294901760
    %3911 = vmatpush1.msra.mxu0 %v3910
    %3912 = vmatprep.subr.mxu0 0.0
    %v3913 = vand.u32 %v1353, 4294901760
    %v3914 = vsub.f32 %v1353, %v3913
    %v3915 = vand.u32 %v3914, 4294901760
    %3916 = vmatpush1.msra.mxu0 %v3915
    %3917 = vmatprep.subr.mxu0 0.0
    %v3918 = vand.u32 %v1352, 4294901760
    %v3919 = vsub.f32 %v1352, %v3918
    %v3920 = vand.u32 %v3919, 4294901760
    %3921 = vmatpush1.msra.mxu0 %v3920
    %3922 = vmatprep.subr.mxu0 0.0
    %v3923 = vand.u32 %v1351, 4294901760
    %v3924 = vsub.f32 %v1351, %v3923
    %v3925 = vand.u32 %v3924, 4294901760
    %3926 = vmatpush1.msra.mxu0 %v3925
    %3927 = vmatprep.subr.mxu0 0.0
    %v3928 = vand.u32 %v1350, 4294901760
    %v3929 = vsub.f32 %v1350, %v3928
    %v3930 = vand.u32 %v3929, 4294901760
    %3931 = vmatpush1.msra.mxu0 %v3930
    %3932 = vmatprep.subr.mxu0 0.0
    %v3933 = vand.u32 %v1349, 4294901760
    %v3934 = vsub.f32 %v1349, %v3933
    %v3935 = vand.u32 %v3934, 4294901760
    %3936 = vmatpush1.msra.mxu0 %v3935
    %3937 = vmatprep.subr.mxu0 0.0
    %v3938 = vand.u32 %v1380, 4294901760
    %v3939 = vsub.f32 %v1380, %v3938
    %v3940 = vand.u32 %v3939, 4294901760
    %3941 = vmatpush2.msra.mxu0 %v3940
    %3942 = vmatprep.subr.mxu0 0.0
    %v3943 = vand.u32 %v1379, 4294901760
    %v3944 = vsub.f32 %v1379, %v3943
    %v3945 = vand.u32 %v3944, 4294901760
    %3946 = vmatpush2.msra.mxu0 %v3945
    %3947 = vmatprep.subr.mxu0 0.0
    %v3948 = vand.u32 %v1378, 4294901760
    %v3949 = vsub.f32 %v1378, %v3948
    %v3950 = vand.u32 %v3949, 4294901760
    %3951 = vmatpush2.msra.mxu0 %v3950
    %3952 = vmatprep.subr.mxu0 0.0
    %v3953 = vand.u32 %v1377, 4294901760
    %v3954 = vsub.f32 %v1377, %v3953
    %v3955 = vand.u32 %v3954, 4294901760
    %3956 = vmatpush2.msra.mxu0 %v3955
    %3957 = vmatprep.subr.mxu0 0.0
    %v3958 = vand.u32 %v1376, 4294901760
    %v3959 = vsub.f32 %v1376, %v3958
    %v3960 = vand.u32 %v3959, 4294901760
    %3961 = vmatpush2.msra.mxu0 %v3960
    %3962 = vmatprep.subr.mxu0 0.0
    %v3963 = vand.u32 %v1375, 4294901760
    %v3964 = vsub.f32 %v1375, %v3963
    %v3965 = vand.u32 %v3964, 4294901760
    %3966 = vmatpush2.msra.mxu0 %v3965
    %3967 = vmatprep.subr.mxu0 0.0
    %v3968 = vand.u32 %v1374, 4294901760
    %v3969 = vsub.f32 %v1374, %v3968
    %v3970 = vand.u32 %v3969, 4294901760
    %3971 = vmatpush2.msra.mxu0 %v3970
    %3972 = vmatprep.subr.mxu0 0.0
    %v3973 = vand.u32 %v1373, 4294901760
    %v3974 = vsub.f32 %v1373, %v3973
    %v3975 = vand.u32 %v3974, 4294901760
    %3976 = vmatpush2.msra.mxu0 %v3975
    %3977 = vmatprep.subr.mxu0 0.0
    %v3978 = vand.u32 %v1372, 4294901760
    %v3979 = vsub.f32 %v1372, %v3978
    %v3980 = vand.u32 %v3979, 4294901760
    %3981 = vmatpush2.msra.mxu0 %v3980
    %3982 = vmatprep.subr.mxu0 0.0
    %v3983 = vand.u32 %v1371, 4294901760
    %v3984 = vsub.f32 %v1371, %v3983
    %v3985 = vand.u32 %v3984, 4294901760
    %3986 = vmatpush2.msra.mxu0 %v3985
    %3987 = vmatprep.subr.mxu0 0.0
    %v3988 = vand.u32 %v1370, 4294901760
    %v3989 = vsub.f32 %v1370, %v3988
    %v3990 = vand.u32 %v3989, 4294901760
    %3991 = vmatpush2.msra.mxu0 %v3990
    %3992 = vmatprep.subr.mxu0 0.0
    %v3993 = vand.u32 %v1369, 4294901760
    %v3994 = vsub.f32 %v1369, %v3993
    %v3995 = vand.u32 %v3994, 4294901760
    %3996 = vmatpush2.msra.mxu0 %v3995
    %3997 = vmatprep.subr.mxu0 0.0
    %v3998 = vand.u32 %v1368, 4294901760
    %v3999 = vsub.f32 %v1368, %v3998
    %v4000 = vand.u32 %v3999, 4294901760
    %4001 = vmatpush2.msra.mxu0 %v4000
    %4002 = vmatprep.subr.mxu0 0.0
    %v4003 = vand.u32 %v1367, 4294901760
    %v4004 = vsub.f32 %v1367, %v4003
    %v4005 = vand.u32 %v4004, 4294901760
    %4006 = vmatpush2.msra.mxu0 %v4005
    %4007 = vmatprep.subr.mxu0 0.0
    %v4008 = vand.u32 %v1366, 4294901760
    %v4009 = vsub.f32 %v1366, %v4008
    %v4010 = vand.u32 %v4009, 4294901760
    %4011 = vmatpush2.msra.mxu0 %v4010
    %4012 = vmatprep.subr.mxu0 0.0
    %v4013 = vand.u32 %v1365, 4294901760
    %v4014 = vsub.f32 %v1365, %v4013
    %v4015 = vand.u32 %v4014, 4294901760
    %4016 = vmatpush2.msra.mxu0 %v4015
    %v4017 = vand.u32 %v1276, 4294901760
    %4018 = vmatprep.mubr.f32.mxu0 %v4017
    %v4019 = vand.u32 %v1275, 4294901760
    %4020 = vmatmul.mubr.f32.gmra.mxu0 %v4019
    %v4021 = vpop.f32.mrf.mxu0
    %v4022 = vadd.f32 %v3843, %v4021
    %v4023 = vpop.f32.mrf.mxu0
    %v4024 = vand.u32 %v1283, 4294901760
    %4025 = vmatprep.mubr.f32.mxu0 %v4024
    %v4026 = vand.u32 %v1282, 4294901760
    %4027 = vmatmul.mubr.f32.gmra.mxu0 %v4026
    %v4028 = vpop.f32.mrf.mxu0
    %v4029 = vadd.f32 %v3854, %v4028
    %v4030 = vpop.f32.mrf.mxu0
    %4031 = vdwg.mxu0
    %4032 = vmatprep.subr.mxu0 0.0
    %v4033 = vand.u32 %v1364, 4294901760
    %4034 = vmatpush1.msra.mxu0 %v4033
    %4035 = vmatprep.subr.mxu0 0.0
    %v4036 = vand.u32 %v1363, 4294901760
    %4037 = vmatpush1.msra.mxu0 %v4036
    %4038 = vmatprep.subr.mxu0 0.0
    %v4039 = vand.u32 %v1362, 4294901760
    %4040 = vmatpush1.msra.mxu0 %v4039
    %4041 = vmatprep.subr.mxu0 0.0
    %v4042 = vand.u32 %v1361, 4294901760
    %4043 = vmatpush1.msra.mxu0 %v4042
    %4044 = vmatprep.subr.mxu0 0.0
    %v4045 = vand.u32 %v1360, 4294901760
    %4046 = vmatpush1.msra.mxu0 %v4045
    %4047 = vmatprep.subr.mxu0 0.0
    %v4048 = vand.u32 %v1359, 4294901760
    %4049 = vmatpush1.msra.mxu0 %v4048
    %4050 = vmatprep.subr.mxu0 0.0
    %v4051 = vand.u32 %v1358, 4294901760
    %4052 = vmatpush1.msra.mxu0 %v4051
    %4053 = vmatprep.subr.mxu0 0.0
    %v4054 = vand.u32 %v1357, 4294901760
    %4055 = vmatpush1.msra.mxu0 %v4054
    %4056 = vmatprep.subr.mxu0 0.0
    %v4057 = vand.u32 %v1356, 4294901760
    %4058 = vmatpush1.msra.mxu0 %v4057
    %4059 = vmatprep.subr.mxu0 0.0
    %v4060 = vand.u32 %v1355, 4294901760
    %4061 = vmatpush1.msra.mxu0 %v4060
    %4062 = vmatprep.subr.mxu0 0.0
    %v4063 = vand.u32 %v1354, 4294901760
    %4064 = vmatpush1.msra.mxu0 %v4063
    %4065 = vmatprep.subr.mxu0 0.0
    %v4066 = vand.u32 %v1353, 4294901760
    %4067 = vmatpush1.msra.mxu0 %v4066
    %4068 = vmatprep.subr.mxu0 0.0
    %v4069 = vand.u32 %v1352, 4294901760
    %4070 = vmatpush1.msra.mxu0 %v4069
    %4071 = vmatprep.subr.mxu0 0.0
    %v4072 = vand.u32 %v1351, 4294901760
    %4073 = vmatpush1.msra.mxu0 %v4072
    %4074 = vmatprep.subr.mxu0 0.0
    %v4075 = vand.u32 %v1350, 4294901760
    %4076 = vmatpush1.msra.mxu0 %v4075
    %4077 = vmatprep.subr.mxu0 0.0
    %v4078 = vand.u32 %v1349, 4294901760
    %4079 = vmatpush1.msra.mxu0 %v4078
    %4080 = vmatprep.subr.mxu0 0.0
    %v4081 = vand.u32 %v1380, 4294901760
    %4082 = vmatpush2.msra.mxu0 %v4081
    %4083 = vmatprep.subr.mxu0 0.0
    %v4084 = vand.u32 %v1379, 4294901760
    %4085 = vmatpush2.msra.mxu0 %v4084
    %4086 = vmatprep.subr.mxu0 0.0
    %v4087 = vand.u32 %v1378, 4294901760
    %4088 = vmatpush2.msra.mxu0 %v4087
    %4089 = vmatprep.subr.mxu0 0.0
    %v4090 = vand.u32 %v1377, 4294901760
    %4091 = vmatpush2.msra.mxu0 %v4090
    %4092 = vmatprep.subr.mxu0 0.0
    %v4093 = vand.u32 %v1376, 4294901760
    %4094 = vmatpush2.msra.mxu0 %v4093
    %4095 = vmatprep.subr.mxu0 0.0
    %v4096 = vand.u32 %v1375, 4294901760
    %4097 = vmatpush2.msra.mxu0 %v4096
    %4098 = vmatprep.subr.mxu0 0.0
    %v4099 = vand.u32 %v1374, 4294901760
    %4100 = vmatpush2.msra.mxu0 %v4099
    %4101 = vmatprep.subr.mxu0 0.0
    %v4102 = vand.u32 %v1373, 4294901760
    %4103 = vmatpush2.msra.mxu0 %v4102
    %4104 = vmatprep.subr.mxu0 0.0
    %v4105 = vand.u32 %v1372, 4294901760
    %4106 = vmatpush2.msra.mxu0 %v4105
    %4107 = vmatprep.subr.mxu0 0.0
    %v4108 = vand.u32 %v1371, 4294901760
    %4109 = vmatpush2.msra.mxu0 %v4108
    %4110 = vmatprep.subr.mxu0 0.0
    %v4111 = vand.u32 %v1370, 4294901760
    %4112 = vmatpush2.msra.mxu0 %v4111
    %4113 = vmatprep.subr.mxu0 0.0
    %v4114 = vand.u32 %v1369, 4294901760
    %4115 = vmatpush2.msra.mxu0 %v4114
    %4116 = vmatprep.subr.mxu0 0.0
    %v4117 = vand.u32 %v1368, 4294901760
    %4118 = vmatpush2.msra.mxu0 %v4117
    %4119 = vmatprep.subr.mxu0 0.0
    %v4120 = vand.u32 %v1367, 4294901760
    %4121 = vmatpush2.msra.mxu0 %v4120
    %4122 = vmatprep.subr.mxu0 0.0
    %v4123 = vand.u32 %v1366, 4294901760
    %4124 = vmatpush2.msra.mxu0 %v4123
    %4125 = vmatprep.subr.mxu0 0.0
    %v4126 = vand.u32 %v1365, 4294901760
    %4127 = vmatpush2.msra.mxu0 %v4126
    %v4128 = vand.u32 %v1276, 4294901760
    %4129 = vmatprep.mubr.f32.mxu0 %v4128
    %v4130 = vand.u32 %v1275, 4294901760
    %4131 = vmatmul.mubr.f32.gmra.mxu0 %v4130
    %v4132 = vpop.f32.mrf.mxu0
    %v4133 = vadd.f32 %v4022, %v4132
    %v4134 = vpop.f32.mrf.mxu0
    %v4135 = vand.u32 %v1283, 4294901760
    %4136 = vmatprep.mubr.f32.mxu0 %v4135
    %v4137 = vand.u32 %v1282, 4294901760
    %4138 = vmatmul.mubr.f32.gmra.mxu0 %v4137
    %v4139 = vpop.f32.mrf.mxu0
    %v4140 = vadd.f32 %v4029, %v4139
    %v4141 = vpop.f32.mrf.mxu0
    %4142 = vdwg.mxu0
    %4143 = vmatprep.subr.mxu0 0.0
    %4144 = vmatpush1.msra.mxu0 0.0
    %4145 = vmatprep.subr.mxu0 0.0
    %4146 = vmatpush1.msra.mxu0 0.0
    %4147 = vmatprep.subr.mxu0 0.0
    %4148 = vmatpush1.msra.mxu0 0.0
    %4149 = vmatprep.subr.mxu0 0.0
    %4150 = vmatpush1.msra.mxu0 0.0
    %4151 = vmatprep.subr.mxu0 0.0
    %4152 = vmatpush1.msra.mxu0 0.0
    %4153 = vmatprep.subr.mxu0 0.0
    %4154 = vmatpush1.msra.mxu0 0.0
    %4155 = vmatprep.subr.mxu0 0.0
    %4156 = vmatpush1.msra.mxu0 0.0
    %4157 = vmatprep.subr.mxu0 0.0
    %4158 = vmatpush1.msra.mxu0 0.0
    %4159 = vmatprep.subr.mxu0 0.0
    %4160 = vmatpush1.msra.mxu0 0.0
    %4161 = vmatprep.subr.mxu0 0.0
    %4162 = vmatpush1.msra.mxu0 0.0
    %4163 = vmatprep.subr.mxu0 0.0
    %4164 = vmatpush1.msra.mxu0 0.0
    %4165 = vmatprep.subr.mxu0 0.0
    %4166 = vmatpush1.msra.mxu0 0.0
    %4167 = vmatprep.subr.mxu0 0.0
    %4168 = vmatpush1.msra.mxu0 0.0
    %4169 = vmatprep.subr.mxu0 0.0
    %4170 = vmatpush1.msra.mxu0 0.0
    %4171 = vmatprep.subr.mxu0 0.0
    %4172 = vmatpush1.msra.mxu0 0.0
    %4173 = vmatprep.subr.mxu0 0.0
    %v4174 = vand.u32 %v1381, 4294901760
    %4175 = vmatpush1.msra.mxu0 %v4174
    %4176 = vmatprep.subr.mxu0 0.0
    %4177 = vmatpush2.msra.mxu0 0.0
    %4178 = vmatprep.subr.mxu0 0.0
    %4179 = vmatpush2.msra.mxu0 0.0
    %4180 = vmatprep.subr.mxu0 0.0
    %4181 = vmatpush2.msra.mxu0 0.0
    %4182 = vmatprep.subr.mxu0 0.0
    %4183 = vmatpush2.msra.mxu0 0.0
    %4184 = vmatprep.subr.mxu0 0.0
    %4185 = vmatpush2.msra.mxu0 0.0
    %4186 = vmatprep.subr.mxu0 0.0
    %4187 = vmatpush2.msra.mxu0 0.0
    %4188 = vmatprep.subr.mxu0 0.0
    %4189 = vmatpush2.msra.mxu0 0.0
    %4190 = vmatprep.subr.mxu0 0.0
    %4191 = vmatpush2.msra.mxu0 0.0
    %4192 = vmatprep.subr.mxu0 0.0
    %4193 = vmatpush2.msra.mxu0 0.0
    %4194 = vmatprep.subr.mxu0 0.0
    %4195 = vmatpush2.msra.mxu0 0.0
    %4196 = vmatprep.subr.mxu0 0.0
    %4197 = vmatpush2.msra.mxu0 0.0
    %4198 = vmatprep.subr.mxu0 0.0
    %4199 = vmatpush2.msra.mxu0 0.0
    %4200 = vmatprep.subr.mxu0 0.0
    %4201 = vmatpush2.msra.mxu0 0.0
    %4202 = vmatprep.subr.mxu0 0.0
    %4203 = vmatpush2.msra.mxu0 0.0
    %4204 = vmatprep.subr.mxu0 0.0
    %4205 = vmatpush2.msra.mxu0 0.0
    %4206 = vmatprep.subr.mxu0 0.0
    %4207 = vmatpush2.msra.mxu0 0.0
    %4208 = vmatprep.mubr.f32.mxu0 0.0
    %v4209 = vand.u32 %v1384, 4294901760
    %v4210 = vsub.f32 %v1384, %v4209
    %v4211 = vand.u32 %v4210, 4294901760
    %v4212 = vsub.f32 %v4210, %v4211
    %v4213 = vand.u32 %v4212, 4294901760
    %4214 = vmatmul.mubr.f32.gmra.mxu0 %v4213
    %v4215 = vpop.f32.mrf.mxu0
    %v4216 = vadd.f32 %v4133, %v4215
    %v4217 = vpop.f32.mrf.mxu0
    %4218 = vmatprep.mubr.f32.mxu0 0.0
    %v4219 = vand.u32 %v1387, 4294901760
    %v4220 = vsub.f32 %v1387, %v4219
    %v4221 = vand.u32 %v4220, 4294901760
    %v4222 = vsub.f32 %v4220, %v4221
    %v4223 = vand.u32 %v4222, 4294901760
    %4224 = vmatmul.mubr.f32.gmra.mxu0 %v4223
    %v4225 = vpop.f32.mrf.mxu0
    %v4226 = vadd.f32 %v4140, %v4225
    %v4227 = vpop.f32.mrf.mxu0
    %4228 = vdwg.mxu0
    %4229 = vmatprep.subr.mxu0 0.0
    %4230 = vmatpush1.msra.mxu0 0.0
    %4231 = vmatprep.subr.mxu0 0.0
    %4232 = vmatpush1.msra.mxu0 0.0
    %4233 = vmatprep.subr.mxu0 0.0
    %4234 = vmatpush1.msra.mxu0 0.0
    %4235 = vmatprep.subr.mxu0 0.0
    %4236 = vmatpush1.msra.mxu0 0.0
    %4237 = vmatprep.subr.mxu0 0.0
    %4238 = vmatpush1.msra.mxu0 0.0
    %4239 = vmatprep.subr.mxu0 0.0
    %4240 = vmatpush1.msra.mxu0 0.0
    %4241 = vmatprep.subr.mxu0 0.0
    %4242 = vmatpush1.msra.mxu0 0.0
    %4243 = vmatprep.subr.mxu0 0.0
    %4244 = vmatpush1.msra.mxu0 0.0
    %4245 = vmatprep.subr.mxu0 0.0
    %4246 = vmatpush1.msra.mxu0 0.0
    %4247 = vmatprep.subr.mxu0 0.0
    %4248 = vmatpush1.msra.mxu0 0.0
    %4249 = vmatprep.subr.mxu0 0.0
    %4250 = vmatpush1.msra.mxu0 0.0
    %4251 = vmatprep.subr.mxu0 0.0
    %4252 = vmatpush1.msra.mxu0 0.0
    %4253 = vmatprep.subr.mxu0 0.0
    %4254 = vmatpush1.msra.mxu0 0.0
    %4255 = vmatprep.subr.mxu0 0.0
    %4256 = vmatpush1.msra.mxu0 0.0
    %4257 = vmatprep.subr.mxu0 0.0
    %4258 = vmatpush1.msra.mxu0 0.0
    %4259 = vmatprep.subr.mxu0 0.0
    %v4260 = vand.u32 %v1381, 4294901760
    %v4261 = vsub.f32 %v1381, %v4260
    %v4262 = vand.u32 %v4261, 4294901760
    %v4263 = vsub.f32 %v4261, %v4262
    %v4264 = vand.u32 %v4263, 4294901760
    %4265 = vmatpush1.msra.mxu0 %v4264
    %4266 = vmatprep.subr.mxu0 0.0
    %4267 = vmatpush2.msra.mxu0 0.0
    %4268 = vmatprep.subr.mxu0 0.0
    %4269 = vmatpush2.msra.mxu0 0.0
    %4270 = vmatprep.subr.mxu0 0.0
    %4271 = vmatpush2.msra.mxu0 0.0
    %4272 = vmatprep.subr.mxu0 0.0
    %4273 = vmatpush2.msra.mxu0 0.0
    %4274 = vmatprep.subr.mxu0 0.0
    %4275 = vmatpush2.msra.mxu0 0.0
    %4276 = vmatprep.subr.mxu0 0.0
    %4277 = vmatpush2.msra.mxu0 0.0
    %4278 = vmatprep.subr.mxu0 0.0
    %4279 = vmatpush2.msra.mxu0 0.0
    %4280 = vmatprep.subr.mxu0 0.0
    %4281 = vmatpush2.msra.mxu0 0.0
    %4282 = vmatprep.subr.mxu0 0.0
    %4283 = vmatpush2.msra.mxu0 0.0
    %4284 = vmatprep.subr.mxu0 0.0
    %4285 = vmatpush2.msra.mxu0 0.0
    %4286 = vmatprep.subr.mxu0 0.0
    %4287 = vmatpush2.msra.mxu0 0.0
    %4288 = vmatprep.subr.mxu0 0.0
    %4289 = vmatpush2.msra.mxu0 0.0
    %4290 = vmatprep.subr.mxu0 0.0
    %4291 = vmatpush2.msra.mxu0 0.0
    %4292 = vmatprep.subr.mxu0 0.0
    %4293 = vmatpush2.msra.mxu0 0.0
    %4294 = vmatprep.subr.mxu0 0.0
    %4295 = vmatpush2.msra.mxu0 0.0
    %4296 = vmatprep.subr.mxu0 0.0
    %4297 = vmatpush2.msra.mxu0 0.0
    %4298 = vmatprep.mubr.f32.mxu0 0.0
    %v4299 = vand.u32 %v1384, 4294901760
    %4300 = vmatmul.mubr.f32.gmra.mxu0 %v4299
    %v4301 = vpop.f32.mrf.mxu0
    %v4302 = vadd.f32 %v4216, %v4301
    %v4303 = vpop.f32.mrf.mxu0
    %4304 = vmatprep.mubr.f32.mxu0 0.0
    %v4305 = vand.u32 %v1387, 4294901760
    %4306 = vmatmul.mubr.f32.gmra.mxu0 %v4305
    %v4307 = vpop.f32.mrf.mxu0
    %v4308 = vadd.f32 %v4226, %v4307
    %v4309 = vpop.f32.mrf.mxu0
    %4310 = vdwg.mxu0
    %4311 = vmatprep.subr.mxu0 0.0
    %4312 = vmatpush1.msra.mxu0 0.0
    %4313 = vmatprep.subr.mxu0 0.0
    %4314 = vmatpush1.msra.mxu0 0.0
    %4315 = vmatprep.subr.mxu0 0.0
    %4316 = vmatpush1.msra.mxu0 0.0
    %4317 = vmatprep.subr.mxu0 0.0
    %4318 = vmatpush1.msra.mxu0 0.0
    %4319 = vmatprep.subr.mxu0 0.0
    %4320 = vmatpush1.msra.mxu0 0.0
    %4321 = vmatprep.subr.mxu0 0.0
    %4322 = vmatpush1.msra.mxu0 0.0
    %4323 = vmatprep.subr.mxu0 0.0
    %4324 = vmatpush1.msra.mxu0 0.0
    %4325 = vmatprep.subr.mxu0 0.0
    %4326 = vmatpush1.msra.mxu0 0.0
    %4327 = vmatprep.subr.mxu0 0.0
    %4328 = vmatpush1.msra.mxu0 0.0
    %4329 = vmatprep.subr.mxu0 0.0
    %4330 = vmatpush1.msra.mxu0 0.0
    %4331 = vmatprep.subr.mxu0 0.0
    %4332 = vmatpush1.msra.mxu0 0.0
    %4333 = vmatprep.subr.mxu0 0.0
    %4334 = vmatpush1.msra.mxu0 0.0
    %4335 = vmatprep.subr.mxu0 0.0
    %4336 = vmatpush1.msra.mxu0 0.0
    %4337 = vmatprep.subr.mxu0 0.0
    %4338 = vmatpush1.msra.mxu0 0.0
    %4339 = vmatprep.subr.mxu0 0.0
    %4340 = vmatpush1.msra.mxu0 0.0
    %4341 = vmatprep.subr.mxu0 0.0
    %v4342 = vand.u32 %v1381, 4294901760
    %v4343 = vsub.f32 %v1381, %v4342
    %4344 = vmatpush1.msra.mxu0 %v4343
    %4345 = vmatprep.subr.mxu0 0.0
    %4346 = vmatpush2.msra.mxu0 0.0
    %4347 = vmatprep.subr.mxu0 0.0
    %4348 = vmatpush2.msra.mxu0 0.0
    %4349 = vmatprep.subr.mxu0 0.0
    %4350 = vmatpush2.msra.mxu0 0.0
    %4351 = vmatprep.subr.mxu0 0.0
    %4352 = vmatpush2.msra.mxu0 0.0
    %4353 = vmatprep.subr.mxu0 0.0
    %4354 = vmatpush2.msra.mxu0 0.0
    %4355 = vmatprep.subr.mxu0 0.0
    %4356 = vmatpush2.msra.mxu0 0.0
    %4357 = vmatprep.subr.mxu0 0.0
    %4358 = vmatpush2.msra.mxu0 0.0
    %4359 = vmatprep.subr.mxu0 0.0
    %4360 = vmatpush2.msra.mxu0 0.0
    %4361 = vmatprep.subr.mxu0 0.0
    %4362 = vmatpush2.msra.mxu0 0.0
    %4363 = vmatprep.subr.mxu0 0.0
    %4364 = vmatpush2.msra.mxu0 0.0
    %4365 = vmatprep.subr.mxu0 0.0
    %4366 = vmatpush2.msra.mxu0 0.0
    %4367 = vmatprep.subr.mxu0 0.0
    %4368 = vmatpush2.msra.mxu0 0.0
    %4369 = vmatprep.subr.mxu0 0.0
    %4370 = vmatpush2.msra.mxu0 0.0
    %4371 = vmatprep.subr.mxu0 0.0
    %4372 = vmatpush2.msra.mxu0 0.0
    %4373 = vmatprep.subr.mxu0 0.0
    %4374 = vmatpush2.msra.mxu0 0.0
    %4375 = vmatprep.subr.mxu0 0.0
    %4376 = vmatpush2.msra.mxu0 0.0
    %4377 = vmatprep.mubr.f32.mxu0 0.0
    %v4378 = vand.u32 %v1384, 4294901760
    %v4379 = vsub.f32 %v1384, %v4378
    %4380 = vmatmul.mubr.f32.gmra.mxu0 %v4379
    %v4381 = vpop.f32.mrf.mxu0
    %v4382 = vadd.f32 %v4302, %v4381
    %v4383 = vpop.f32.mrf.mxu0
    %4384 = vmatprep.mubr.f32.mxu0 0.0
    %v4385 = vand.u32 %v1387, 4294901760
    %v4386 = vsub.f32 %v1387, %v4385
    %4387 = vmatmul.mubr.f32.gmra.mxu0 %v4386
    %v4388 = vpop.f32.mrf.mxu0
    %v4389 = vadd.f32 %v4308, %v4388
    %v4390 = vpop.f32.mrf.mxu0
    %4391 = vdwg.mxu0
    %4392 = vmatprep.subr.mxu0 0.0
    %4393 = vmatpush1.msra.mxu0 0.0
    %4394 = vmatprep.subr.mxu0 0.0
    %4395 = vmatpush1.msra.mxu0 0.0
    %4396 = vmatprep.subr.mxu0 0.0
    %4397 = vmatpush1.msra.mxu0 0.0
    %4398 = vmatprep.subr.mxu0 0.0
    %4399 = vmatpush1.msra.mxu0 0.0
    %4400 = vmatprep.subr.mxu0 0.0
    %4401 = vmatpush1.msra.mxu0 0.0
    %4402 = vmatprep.subr.mxu0 0.0
    %4403 = vmatpush1.msra.mxu0 0.0
    %4404 = vmatprep.subr.mxu0 0.0
    %4405 = vmatpush1.msra.mxu0 0.0
    %4406 = vmatprep.subr.mxu0 0.0
    %4407 = vmatpush1.msra.mxu0 0.0
    %4408 = vmatprep.subr.mxu0 0.0
    %4409 = vmatpush1.msra.mxu0 0.0
    %4410 = vmatprep.subr.mxu0 0.0
    %4411 = vmatpush1.msra.mxu0 0.0
    %4412 = vmatprep.subr.mxu0 0.0
    %4413 = vmatpush1.msra.mxu0 0.0
    %4414 = vmatprep.subr.mxu0 0.0
    %4415 = vmatpush1.msra.mxu0 0.0
    %4416 = vmatprep.subr.mxu0 0.0
    %4417 = vmatpush1.msra.mxu0 0.0
    %4418 = vmatprep.subr.mxu0 0.0
    %4419 = vmatpush1.msra.mxu0 0.0
    %4420 = vmatprep.subr.mxu0 0.0
    %4421 = vmatpush1.msra.mxu0 0.0
    %4422 = vmatprep.subr.mxu0 0.0
    %v4423 = vand.u32 %v1381, 4294901760
    %4424 = vmatpush1.msra.mxu0 %v4423
    %4425 = vmatprep.subr.mxu0 0.0
    %4426 = vmatpush2.msra.mxu0 0.0
    %4427 = vmatprep.subr.mxu0 0.0
    %4428 = vmatpush2.msra.mxu0 0.0
    %4429 = vmatprep.subr.mxu0 0.0
    %4430 = vmatpush2.msra.mxu0 0.0
    %4431 = vmatprep.subr.mxu0 0.0
    %4432 = vmatpush2.msra.mxu0 0.0
    %4433 = vmatprep.subr.mxu0 0.0
    %4434 = vmatpush2.msra.mxu0 0.0
    %4435 = vmatprep.subr.mxu0 0.0
    %4436 = vmatpush2.msra.mxu0 0.0
    %4437 = vmatprep.subr.mxu0 0.0
    %4438 = vmatpush2.msra.mxu0 0.0
    %4439 = vmatprep.subr.mxu0 0.0
    %4440 = vmatpush2.msra.mxu0 0.0
    %4441 = vmatprep.subr.mxu0 0.0
    %4442 = vmatpush2.msra.mxu0 0.0
    %4443 = vmatprep.subr.mxu0 0.0
    %4444 = vmatpush2.msra.mxu0 0.0
    %4445 = vmatprep.subr.mxu0 0.0
    %4446 = vmatpush2.msra.mxu0 0.0
    %4447 = vmatprep.subr.mxu0 0.0
    %4448 = vmatpush2.msra.mxu0 0.0
    %4449 = vmatprep.subr.mxu0 0.0
    %4450 = vmatpush2.msra.mxu0 0.0
    %4451 = vmatprep.subr.mxu0 0.0
    %4452 = vmatpush2.msra.mxu0 0.0
    %4453 = vmatprep.subr.mxu0 0.0
    %4454 = vmatpush2.msra.mxu0 0.0
    %4455 = vmatprep.subr.mxu0 0.0
    %4456 = vmatpush2.msra.mxu0 0.0
    %4457 = vmatprep.mubr.f32.mxu0 0.0
    %v4458 = vand.u32 %v1384, 4294901760
    %v4459 = vsub.f32 %v1384, %v4458
    %v4460 = vand.u32 %v4459, 4294901760
    %4461 = vmatmul.mubr.f32.gmra.mxu0 %v4460
    %v4462 = vpop.f32.mrf.mxu0
    %v4463 = vadd.f32 %v4382, %v4462
    %v4464 = vpop.f32.mrf.mxu0
    %4465 = vmatprep.mubr.f32.mxu0 0.0
    %v4466 = vand.u32 %v1387, 4294901760
    %v4467 = vsub.f32 %v1387, %v4466
    %v4468 = vand.u32 %v4467, 4294901760
    %4469 = vmatmul.mubr.f32.gmra.mxu0 %v4468
    %v4470 = vpop.f32.mrf.mxu0
    %v4471 = vadd.f32 %v4389, %v4470
    %v4472 = vpop.f32.mrf.mxu0
    %4473 = vdwg.mxu0
    %4474 = vmatprep.subr.mxu0 0.0
    %4475 = vmatpush1.msra.mxu0 0.0
    %4476 = vmatprep.subr.mxu0 0.0
    %4477 = vmatpush1.msra.mxu0 0.0
    %4478 = vmatprep.subr.mxu0 0.0
    %4479 = vmatpush1.msra.mxu0 0.0
    %4480 = vmatprep.subr.mxu0 0.0
    %4481 = vmatpush1.msra.mxu0 0.0
    %4482 = vmatprep.subr.mxu0 0.0
    %4483 = vmatpush1.msra.mxu0 0.0
    %4484 = vmatprep.subr.mxu0 0.0
    %4485 = vmatpush1.msra.mxu0 0.0
    %4486 = vmatprep.subr.mxu0 0.0
    %4487 = vmatpush1.msra.mxu0 0.0
    %4488 = vmatprep.subr.mxu0 0.0
    %4489 = vmatpush1.msra.mxu0 0.0
    %4490 = vmatprep.subr.mxu0 0.0
    %4491 = vmatpush1.msra.mxu0 0.0
    %4492 = vmatprep.subr.mxu0 0.0
    %4493 = vmatpush1.msra.mxu0 0.0
    %4494 = vmatprep.subr.mxu0 0.0
    %4495 = vmatpush1.msra.mxu0 0.0
    %4496 = vmatprep.subr.mxu0 0.0
    %4497 = vmatpush1.msra.mxu0 0.0
    %4498 = vmatprep.subr.mxu0 0.0
    %4499 = vmatpush1.msra.mxu0 0.0
    %4500 = vmatprep.subr.mxu0 0.0
    %4501 = vmatpush1.msra.mxu0 0.0
    %4502 = vmatprep.subr.mxu0 0.0
    %4503 = vmatpush1.msra.mxu0 0.0
    %4504 = vmatprep.subr.mxu0 0.0
    %v4505 = vand.u32 %v1381, 4294901760
    %v4506 = vsub.f32 %v1381, %v4505
    %v4507 = vand.u32 %v4506, 4294901760
    %4508 = vmatpush1.msra.mxu0 %v4507
    %4509 = vmatprep.subr.mxu0 0.0
    %4510 = vmatpush2.msra.mxu0 0.0
    %4511 = vmatprep.subr.mxu0 0.0
    %4512 = vmatpush2.msra.mxu0 0.0
    %4513 = vmatprep.subr.mxu0 0.0
    %4514 = vmatpush2.msra.mxu0 0.0
    %4515 = vmatprep.subr.mxu0 0.0
    %4516 = vmatpush2.msra.mxu0 0.0
    %4517 = vmatprep.subr.mxu0 0.0
    %4518 = vmatpush2.msra.mxu0 0.0
    %4519 = vmatprep.subr.mxu0 0.0
    %4520 = vmatpush2.msra.mxu0 0.0
    %4521 = vmatprep.subr.mxu0 0.0
    %4522 = vmatpush2.msra.mxu0 0.0
    %4523 = vmatprep.subr.mxu0 0.0
    %4524 = vmatpush2.msra.mxu0 0.0
    %4525 = vmatprep.subr.mxu0 0.0
    %4526 = vmatpush2.msra.mxu0 0.0
    %4527 = vmatprep.subr.mxu0 0.0
    %4528 = vmatpush2.msra.mxu0 0.0
    %4529 = vmatprep.subr.mxu0 0.0
    %4530 = vmatpush2.msra.mxu0 0.0
    %4531 = vmatprep.subr.mxu0 0.0
    %4532 = vmatpush2.msra.mxu0 0.0
    %4533 = vmatprep.subr.mxu0 0.0
    %4534 = vmatpush2.msra.mxu0 0.0
    %4535 = vmatprep.subr.mxu0 0.0
    %4536 = vmatpush2.msra.mxu0 0.0
    %4537 = vmatprep.subr.mxu0 0.0
    %4538 = vmatpush2.msra.mxu0 0.0
    %4539 = vmatprep.subr.mxu0 0.0
    %4540 = vmatpush2.msra.mxu0 0.0
    %4541 = vmatprep.mubr.f32.mxu0 0.0
    %v4542 = vand.u32 %v1384, 4294901760
    %4543 = vmatmul.mubr.f32.gmra.mxu0 %v4542
    %v4544 = vpop.f32.mrf.mxu0
    %v4545 = vadd.f32 %v4463, %v4544
    %v4546 = vpop.f32.mrf.mxu0
    %4547 = vmatprep.mubr.f32.mxu0 0.0
    %v4548 = vand.u32 %v1387, 4294901760
    %4549 = vmatmul.mubr.f32.gmra.mxu0 %v4548
    %v4550 = vpop.f32.mrf.mxu0
    %v4551 = vadd.f32 %v4471, %v4550
    %v4552 = vpop.f32.mrf.mxu0
    %4553 = vdwg.mxu0
    %4554 = vmatprep.subr.mxu0 0.0
    %4555 = vmatpush1.msra.mxu0 0.0
    %4556 = vmatprep.subr.mxu0 0.0
    %4557 = vmatpush1.msra.mxu0 0.0
    %4558 = vmatprep.subr.mxu0 0.0
    %4559 = vmatpush1.msra.mxu0 0.0
    %4560 = vmatprep.subr.mxu0 0.0
    %4561 = vmatpush1.msra.mxu0 0.0
    %4562 = vmatprep.subr.mxu0 0.0
    %4563 = vmatpush1.msra.mxu0 0.0
    %4564 = vmatprep.subr.mxu0 0.0
    %4565 = vmatpush1.msra.mxu0 0.0
    %4566 = vmatprep.subr.mxu0 0.0
    %4567 = vmatpush1.msra.mxu0 0.0
    %4568 = vmatprep.subr.mxu0 0.0
    %4569 = vmatpush1.msra.mxu0 0.0
    %4570 = vmatprep.subr.mxu0 0.0
    %4571 = vmatpush1.msra.mxu0 0.0
    %4572 = vmatprep.subr.mxu0 0.0
    %4573 = vmatpush1.msra.mxu0 0.0
    %4574 = vmatprep.subr.mxu0 0.0
    %4575 = vmatpush1.msra.mxu0 0.0
    %4576 = vmatprep.subr.mxu0 0.0
    %4577 = vmatpush1.msra.mxu0 0.0
    %4578 = vmatprep.subr.mxu0 0.0
    %4579 = vmatpush1.msra.mxu0 0.0
    %4580 = vmatprep.subr.mxu0 0.0
    %4581 = vmatpush1.msra.mxu0 0.0
    %4582 = vmatprep.subr.mxu0 0.0
    %4583 = vmatpush1.msra.mxu0 0.0
    %4584 = vmatprep.subr.mxu0 0.0
    %v4585 = vand.u32 %v1381, 4294901760
    %4586 = vmatpush1.msra.mxu0 %v4585
    %4587 = vmatprep.subr.mxu0 0.0
    %4588 = vmatpush2.msra.mxu0 0.0
    %4589 = vmatprep.subr.mxu0 0.0
    %4590 = vmatpush2.msra.mxu0 0.0
    %4591 = vmatprep.subr.mxu0 0.0
    %4592 = vmatpush2.msra.mxu0 0.0
    %4593 = vmatprep.subr.mxu0 0.0
    %4594 = vmatpush2.msra.mxu0 0.0
    %4595 = vmatprep.subr.mxu0 0.0
    %4596 = vmatpush2.msra.mxu0 0.0
    %4597 = vmatprep.subr.mxu0 0.0
    %4598 = vmatpush2.msra.mxu0 0.0
    %4599 = vmatprep.subr.mxu0 0.0
    %4600 = vmatpush2.msra.mxu0 0.0
    %4601 = vmatprep.subr.mxu0 0.0
    %4602 = vmatpush2.msra.mxu0 0.0
    %4603 = vmatprep.subr.mxu0 0.0
    %4604 = vmatpush2.msra.mxu0 0.0
    %4605 = vmatprep.subr.mxu0 0.0
    %4606 = vmatpush2.msra.mxu0 0.0
    %4607 = vmatprep.subr.mxu0 0.0
    %4608 = vmatpush2.msra.mxu0 0.0
    %4609 = vmatprep.subr.mxu0 0.0
    %4610 = vmatpush2.msra.mxu0 0.0
    %4611 = vmatprep.subr.mxu0 0.0
    %4612 = vmatpush2.msra.mxu0 0.0
    %4613 = vmatprep.subr.mxu0 0.0
    %4614 = vmatpush2.msra.mxu0 0.0
    %4615 = vmatprep.subr.mxu0 0.0
    %4616 = vmatpush2.msra.mxu0 0.0
    %4617 = vmatprep.subr.mxu0 0.0
    %4618 = vmatpush2.msra.mxu0 0.0
    %4619 = vmatprep.mubr.f32.mxu0 0.0
    %v4620 = vand.u32 %v1384, 4294901760
    %4621 = vmatmul.mubr.f32.gmra.mxu0 %v4620
    %v4622 = vpop.f32.mrf.mxu0
    %v4623 = vadd.f32 %v4545, %v4622
    %v4624 = vpop.f32.mrf.mxu0
    %4625 = vmatprep.mubr.f32.mxu0 0.0
    %v4626 = vand.u32 %v1387, 4294901760
    %4627 = vmatmul.mubr.f32.gmra.mxu0 %v4626
    %v4628 = vpop.f32.mrf.mxu0
    %v4629 = vadd.f32 %v4551, %v4628
    %v4630 = vpop.f32.mrf.mxu0
    %4631 = vdwg.mxu0
    %v4632 = vld [vmem:[%s6] sm:$0xff]
    %v4633 = vld [vmem:[%s6 + $0x8] sm:$0xff]
    %v4634 = vld [vmem:[%s6 + $0x10] sm:$0xff]
    %v4635 = vld [vmem:[%s6 + $0x18] sm:$0xff]
    %v4636 = vld [vmem:[%s7] sm:$0x1]
    %v4638 = vlaneseq
    %v4639 = vshrl.u32 %v4638, 7
    %v4640 = vsub.s32 0, %v4639
    %v4641 = vrot.slane %v4636, %v4640
    %v4644 = vsel %vm43, %v4623, 0
    %v4647 = vsel %vm43, %v4629, 0
    %4649 = vmatprep.subr.mxu0 0.0
    %4650 = vmatpush1.msra.mxu0 0.0
    %4651 = vmatprep.subr.mxu0 0.0
    %4652 = vmatpush1.msra.mxu0 0.0
    %4653 = vmatprep.subr.mxu0 0.0
    %4654 = vmatpush1.msra.mxu0 0.0
    %4655 = vmatprep.subr.mxu0 0.0
    %4656 = vmatpush1.msra.mxu0 0.0
    %4657 = vmatprep.subr.mxu0 0.0
    %4658 = vmatpush1.msra.mxu0 0.0
    %4659 = vmatprep.subr.mxu0 0.0
    %4660 = vmatpush1.msra.mxu0 0.0
    %4661 = vmatprep.subr.mxu0 0.0
    %4662 = vmatpush1.msra.mxu0 0.0
    %4663 = vmatprep.subr.mxu0 0.0
    %4664 = vmatpush1.msra.mxu0 0.0
    %4665 = vmatprep.subr.mxu0 0.0
    %4666 = vmatpush1.msra.mxu0 0.0
    %4667 = vmatprep.subr.mxu0 0.0
    %4668 = vmatpush1.msra.mxu0 0.0
    %4669 = vmatprep.subr.mxu0 0.0
    %4670 = vmatpush1.msra.mxu0 0.0
    %4671 = vmatprep.subr.mxu0 0.0
    %4672 = vmatpush1.msra.mxu0 0.0
    %4673 = vmatprep.subr.mxu0 0.0
    %v4674 = vand.u32 %v4635, 4294901760
    %4675 = vmatpush1.msra.mxu0 %v4674
    %4676 = vmatprep.subr.mxu0 0.0
    %v4677 = vand.u32 %v4634, 4294901760
    %4678 = vmatpush1.msra.mxu0 %v4677
    %4679 = vmatprep.subr.mxu0 0.0
    %v4680 = vand.u32 %v4633, 4294901760
    %4681 = vmatpush1.msra.mxu0 %v4680
    %4682 = vmatprep.subr.mxu0 0.0
    %v4683 = vand.u32 %v4632, 4294901760
    %4684 = vmatpush1.msra.mxu0 %v4683
    %4685 = vmatprep.subr.mxu0 0.0
    %4686 = vmatpush2.msra.mxu0 0.0
    %4687 = vmatprep.subr.mxu0 0.0
    %4688 = vmatpush2.msra.mxu0 0.0
    %4689 = vmatprep.subr.mxu0 0.0
    %4690 = vmatpush2.msra.mxu0 0.0
    %4691 = vmatprep.subr.mxu0 0.0
    %4692 = vmatpush2.msra.mxu0 0.0
    %4693 = vmatprep.subr.mxu0 0.0
    %4694 = vmatpush2.msra.mxu0 0.0
    %4695 = vmatprep.subr.mxu0 0.0
    %4696 = vmatpush2.msra.mxu0 0.0
    %4697 = vmatprep.subr.mxu0 0.0
    %4698 = vmatpush2.msra.mxu0 0.0
    %4699 = vmatprep.subr.mxu0 0.0
    %4700 = vmatpush2.msra.mxu0 0.0
    %4701 = vmatprep.subr.mxu0 0.0
    %4702 = vmatpush2.msra.mxu0 0.0
    %4703 = vmatprep.subr.mxu0 0.0
    %4704 = vmatpush2.msra.mxu0 0.0
    %4705 = vmatprep.subr.mxu0 0.0
    %4706 = vmatpush2.msra.mxu0 0.0
    %4707 = vmatprep.subr.mxu0 0.0
    %4708 = vmatpush2.msra.mxu0 0.0
    %4709 = vmatprep.subr.mxu0 0.0
    %4710 = vmatpush2.msra.mxu0 0.0
    %4711 = vmatprep.subr.mxu0 0.0
    %4712 = vmatpush2.msra.mxu0 0.0
    %4713 = vmatprep.subr.mxu0 0.0
    %4714 = vmatpush2.msra.mxu0 0.0
    %4715 = vmatprep.subr.mxu0 0.0
    %4716 = vmatpush2.msra.mxu0 0.0
    %4717 = vmatprep.mubr.f32.mxu0 0.0
    %v4718 = vand.u32 %v4644, 4294901760
    %v4719 = vsub.f32 %v4644, %v4718
    %v4720 = vand.u32 %v4719, 4294901760
    %v4721 = vsub.f32 %v4719, %v4720
    %v4722 = vand.u32 %v4721, 4294901760
    %4723 = vmatmul.mubr.f32.gmra.mxu0 %v4722
    %v4724 = vpop.f32.mrf.mxu0
    %v4725 = vadd.f32 %v4641, %v4724
    %v4726 = vpop.f32.mrf.mxu0
    %4727 = vmatprep.mubr.f32.mxu0 0.0
    %v4728 = vand.u32 %v4647, 4294901760
    %v4729 = vsub.f32 %v4647, %v4728
    %v4730 = vand.u32 %v4729, 4294901760
    %v4731 = vsub.f32 %v4729, %v4730
    %v4732 = vand.u32 %v4731, 4294901760
    %4733 = vmatmul.mubr.f32.gmra.mxu0 %v4732
    %v4734 = vpop.f32.mrf.mxu0
    %v4735 = vadd.f32 %v4641, %v4734
    %v4736 = vpop.f32.mrf.mxu0
    %4737 = vdwg.mxu0
    %4738 = vmatprep.subr.mxu0 0.0
    %4739 = vmatpush1.msra.mxu0 0.0
    %4740 = vmatprep.subr.mxu0 0.0
    %4741 = vmatpush1.msra.mxu0 0.0
    %4742 = vmatprep.subr.mxu0 0.0
    %4743 = vmatpush1.msra.mxu0 0.0
    %4744 = vmatprep.subr.mxu0 0.0
    %4745 = vmatpush1.msra.mxu0 0.0
    %4746 = vmatprep.subr.mxu0 0.0
    %4747 = vmatpush1.msra.mxu0 0.0
    %4748 = vmatprep.subr.mxu0 0.0
    %4749 = vmatpush1.msra.mxu0 0.0
    %4750 = vmatprep.subr.mxu0 0.0
    %4751 = vmatpush1.msra.mxu0 0.0
    %4752 = vmatprep.subr.mxu0 0.0
    %4753 = vmatpush1.msra.mxu0 0.0
    %4754 = vmatprep.subr.mxu0 0.0
    %4755 = vmatpush1.msra.mxu0 0.0
    %4756 = vmatprep.subr.mxu0 0.0
    %4757 = vmatpush1.msra.mxu0 0.0
    %4758 = vmatprep.subr.mxu0 0.0
    %4759 = vmatpush1.msra.mxu0 0.0
    %4760 = vmatprep.subr.mxu0 0.0
    %4761 = vmatpush1.msra.mxu0 0.0
    %4762 = vmatprep.subr.mxu0 0.0
    %v4763 = vand.u32 %v4635, 4294901760
    %v4764 = vsub.f32 %v4635, %v4763
    %v4765 = vand.u32 %v4764, 4294901760
    %v4766 = vsub.f32 %v4764, %v4765
    %v4767 = vand.u32 %v4766, 4294901760
    %4768 = vmatpush1.msra.mxu0 %v4767
    %4769 = vmatprep.subr.mxu0 0.0
    %v4770 = vand.u32 %v4634, 4294901760
    %v4771 = vsub.f32 %v4634, %v4770
    %v4772 = vand.u32 %v4771, 4294901760
    %v4773 = vsub.f32 %v4771, %v4772
    %v4774 = vand.u32 %v4773, 4294901760
    %4775 = vmatpush1.msra.mxu0 %v4774
    %4776 = vmatprep.subr.mxu0 0.0
    %v4777 = vand.u32 %v4633, 4294901760
    %v4778 = vsub.f32 %v4633, %v4777
    %v4779 = vand.u32 %v4778, 4294901760
    %v4780 = vsub.f32 %v4778, %v4779
    %v4781 = vand.u32 %v4780, 4294901760
    %4782 = vmatpush1.msra.mxu0 %v4781
    %4783 = vmatprep.subr.mxu0 0.0
    %v4784 = vand.u32 %v4632, 4294901760
    %v4785 = vsub.f32 %v4632, %v4784
    %v4786 = vand.u32 %v4785, 4294901760
    %v4787 = vsub.f32 %v4785, %v4786
    %v4788 = vand.u32 %v4787, 4294901760
    %4789 = vmatpush1.msra.mxu0 %v4788
    %4790 = vmatprep.subr.mxu0 0.0
    %4791 = vmatpush2.msra.mxu0 0.0
    %4792 = vmatprep.subr.mxu0 0.0
    %4793 = vmatpush2.msra.mxu0 0.0
    %4794 = vmatprep.subr.mxu0 0.0
    %4795 = vmatpush2.msra.mxu0 0.0
    %4796 = vmatprep.subr.mxu0 0.0
    %4797 = vmatpush2.msra.mxu0 0.0
    %4798 = vmatprep.subr.mxu0 0.0
    %4799 = vmatpush2.msra.mxu0 0.0
    %4800 = vmatprep.subr.mxu0 0.0
    %4801 = vmatpush2.msra.mxu0 0.0
    %4802 = vmatprep.subr.mxu0 0.0
    %4803 = vmatpush2.msra.mxu0 0.0
    %4804 = vmatprep.subr.mxu0 0.0
    %4805 = vmatpush2.msra.mxu0 0.0
    %4806 = vmatprep.subr.mxu0 0.0
    %4807 = vmatpush2.msra.mxu0 0.0
    %4808 = vmatprep.subr.mxu0 0.0
    %4809 = vmatpush2.msra.mxu0 0.0
    %4810 = vmatprep.subr.mxu0 0.0
    %4811 = vmatpush2.msra.mxu0 0.0
    %4812 = vmatprep.subr.mxu0 0.0
    %4813 = vmatpush2.msra.mxu0 0.0
    %4814 = vmatprep.subr.mxu0 0.0
    %4815 = vmatpush2.msra.mxu0 0.0
    %4816 = vmatprep.subr.mxu0 0.0
    %4817 = vmatpush2.msra.mxu0 0.0
    %4818 = vmatprep.subr.mxu0 0.0
    %4819 = vmatpush2.msra.mxu0 0.0
    %4820 = vmatprep.subr.mxu0 0.0
    %4821 = vmatpush2.msra.mxu0 0.0
    %4822 = vmatprep.mubr.f32.mxu0 0.0
    %v4823 = vand.u32 %v4644, 4294901760
    %4824 = vmatmul.mubr.f32.gmra.mxu0 %v4823
    %v4825 = vpop.f32.mrf.mxu0
    %v4826 = vadd.f32 %v4725, %v4825
    %v4827 = vpop.f32.mrf.mxu0
    %4828 = vmatprep.mubr.f32.mxu0 0.0
    %v4829 = vand.u32 %v4647, 4294901760
    %4830 = vmatmul.mubr.f32.gmra.mxu0 %v4829
    %v4831 = vpop.f32.mrf.mxu0
    %v4832 = vadd.f32 %v4735, %v4831
    %v4833 = vpop.f32.mrf.mxu0
    %4834 = vdwg.mxu0
    %4835 = vmatprep.subr.mxu0 0.0
    %4836 = vmatpush1.msra.mxu0 0.0
    %4837 = vmatprep.subr.mxu0 0.0
    %4838 = vmatpush1.msra.mxu0 0.0
    %4839 = vmatprep.subr.mxu0 0.0
    %4840 = vmatpush1.msra.mxu0 0.0
    %4841 = vmatprep.subr.mxu0 0.0
    %4842 = vmatpush1.msra.mxu0 0.0
    %4843 = vmatprep.subr.mxu0 0.0
    %4844 = vmatpush1.msra.mxu0 0.0
    %4845 = vmatprep.subr.mxu0 0.0
    %4846 = vmatpush1.msra.mxu0 0.0
    %4847 = vmatprep.subr.mxu0 0.0
    %4848 = vmatpush1.msra.mxu0 0.0
    %4849 = vmatprep.subr.mxu0 0.0
    %4850 = vmatpush1.msra.mxu0 0.0
    %4851 = vmatprep.subr.mxu0 0.0
    %4852 = vmatpush1.msra.mxu0 0.0
    %4853 = vmatprep.subr.mxu0 0.0
    %4854 = vmatpush1.msra.mxu0 0.0
    %4855 = vmatprep.subr.mxu0 0.0
    %4856 = vmatpush1.msra.mxu0 0.0
    %4857 = vmatprep.subr.mxu0 0.0
    %4858 = vmatpush1.msra.mxu0 0.0
    %4859 = vmatprep.subr.mxu0 0.0
    %v4860 = vand.u32 %v4635, 4294901760
    %v4861 = vsub.f32 %v4635, %v4860
    %4862 = vmatpush1.msra.mxu0 %v4861
    %4863 = vmatprep.subr.mxu0 0.0
    %v4864 = vand.u32 %v4634, 4294901760
    %v4865 = vsub.f32 %v4634, %v4864
    %4866 = vmatpush1.msra.mxu0 %v4865
    %4867 = vmatprep.subr.mxu0 0.0
    %v4868 = vand.u32 %v4633, 4294901760
    %v4869 = vsub.f32 %v4633, %v4868
    %4870 = vmatpush1.msra.mxu0 %v4869
    %4871 = vmatprep.subr.mxu0 0.0
    %v4872 = vand.u32 %v4632, 4294901760
    %v4873 = vsub.f32 %v4632, %v4872
    %4874 = vmatpush1.msra.mxu0 %v4873
    %4875 = vmatprep.subr.mxu0 0.0
    %4876 = vmatpush2.msra.mxu0 0.0
    %4877 = vmatprep.subr.mxu0 0.0
    %4878 = vmatpush2.msra.mxu0 0.0
    %4879 = vmatprep.subr.mxu0 0.0
    %4880 = vmatpush2.msra.mxu0 0.0
    %4881 = vmatprep.subr.mxu0 0.0
    %4882 = vmatpush2.msra.mxu0 0.0
    %4883 = vmatprep.subr.mxu0 0.0
    %4884 = vmatpush2.msra.mxu0 0.0
    %4885 = vmatprep.subr.mxu0 0.0
    %4886 = vmatpush2.msra.mxu0 0.0
    %4887 = vmatprep.subr.mxu0 0.0
    %4888 = vmatpush2.msra.mxu0 0.0
    %4889 = vmatprep.subr.mxu0 0.0
    %4890 = vmatpush2.msra.mxu0 0.0
    %4891 = vmatprep.subr.mxu0 0.0
    %4892 = vmatpush2.msra.mxu0 0.0
    %4893 = vmatprep.subr.mxu0 0.0
    %4894 = vmatpush2.msra.mxu0 0.0
    %4895 = vmatprep.subr.mxu0 0.0
    %4896 = vmatpush2.msra.mxu0 0.0
    %4897 = vmatprep.subr.mxu0 0.0
    %4898 = vmatpush2.msra.mxu0 0.0
    %4899 = vmatprep.subr.mxu0 0.0
    %4900 = vmatpush2.msra.mxu0 0.0
    %4901 = vmatprep.subr.mxu0 0.0
    %4902 = vmatpush2.msra.mxu0 0.0
    %4903 = vmatprep.subr.mxu0 0.0
    %4904 = vmatpush2.msra.mxu0 0.0
    %4905 = vmatprep.subr.mxu0 0.0
    %4906 = vmatpush2.msra.mxu0 0.0
    %4907 = vmatprep.mubr.f32.mxu0 0.0
    %v4908 = vand.u32 %v4644, 4294901760
    %v4909 = vsub.f32 %v4644, %v4908
    %4910 = vmatmul.mubr.f32.gmra.mxu0 %v4909
    %v4911 = vpop.f32.mrf.mxu0
    %v4912 = vadd.f32 %v4826, %v4911
    %v4913 = vpop.f32.mrf.mxu0
    %4914 = vmatprep.mubr.f32.mxu0 0.0
    %v4915 = vand.u32 %v4647, 4294901760
    %v4916 = vsub.f32 %v4647, %v4915
    %4917 = vmatmul.mubr.f32.gmra.mxu0 %v4916
    %v4918 = vpop.f32.mrf.mxu0
    %v4919 = vadd.f32 %v4832, %v4918
    %v4920 = vpop.f32.mrf.mxu0
    %4921 = vdwg.mxu0
    %4922 = vmatprep.subr.mxu0 0.0
    %4923 = vmatpush1.msra.mxu0 0.0
    %4924 = vmatprep.subr.mxu0 0.0
    %4925 = vmatpush1.msra.mxu0 0.0
    %4926 = vmatprep.subr.mxu0 0.0
    %4927 = vmatpush1.msra.mxu0 0.0
    %4928 = vmatprep.subr.mxu0 0.0
    %4929 = vmatpush1.msra.mxu0 0.0
    %4930 = vmatprep.subr.mxu0 0.0
    %4931 = vmatpush1.msra.mxu0 0.0
    %4932 = vmatprep.subr.mxu0 0.0
    %4933 = vmatpush1.msra.mxu0 0.0
    %4934 = vmatprep.subr.mxu0 0.0
    %4935 = vmatpush1.msra.mxu0 0.0
    %4936 = vmatprep.subr.mxu0 0.0
    %4937 = vmatpush1.msra.mxu0 0.0
    %4938 = vmatprep.subr.mxu0 0.0
    %4939 = vmatpush1.msra.mxu0 0.0
    %4940 = vmatprep.subr.mxu0 0.0
    %4941 = vmatpush1.msra.mxu0 0.0
    %4942 = vmatprep.subr.mxu0 0.0
    %4943 = vmatpush1.msra.mxu0 0.0
    %4944 = vmatprep.subr.mxu0 0.0
    %4945 = vmatpush1.msra.mxu0 0.0
    %4946 = vmatprep.subr.mxu0 0.0
    %v4947 = vand.u32 %v4635, 4294901760
    %4948 = vmatpush1.msra.mxu0 %v4947
    %4949 = vmatprep.subr.mxu0 0.0
    %v4950 = vand.u32 %v4634, 4294901760
    %4951 = vmatpush1.msra.mxu0 %v4950
    %4952 = vmatprep.subr.mxu0 0.0
    %v4953 = vand.u32 %v4633, 4294901760
    %4954 = vmatpush1.msra.mxu0 %v4953
    %4955 = vmatprep.subr.mxu0 0.0
    %v4956 = vand.u32 %v4632, 4294901760
    %4957 = vmatpush1.msra.mxu0 %v4956
    %4958 = vmatprep.subr.mxu0 0.0
    %4959 = vmatpush2.msra.mxu0 0.0
    %4960 = vmatprep.subr.mxu0 0.0
    %4961 = vmatpush2.msra.mxu0 0.0
    %4962 = vmatprep.subr.mxu0 0.0
    %4963 = vmatpush2.msra.mxu0 0.0
    %4964 = vmatprep.subr.mxu0 0.0
    %4965 = vmatpush2.msra.mxu0 0.0
    %4966 = vmatprep.subr.mxu0 0.0
    %4967 = vmatpush2.msra.mxu0 0.0
    %4968 = vmatprep.subr.mxu0 0.0
    %4969 = vmatpush2.msra.mxu0 0.0
    %4970 = vmatprep.subr.mxu0 0.0
    %4971 = vmatpush2.msra.mxu0 0.0
    %4972 = vmatprep.subr.mxu0 0.0
    %4973 = vmatpush2.msra.mxu0 0.0
    %4974 = vmatprep.subr.mxu0 0.0
    %4975 = vmatpush2.msra.mxu0 0.0
    %4976 = vmatprep.subr.mxu0 0.0
    %4977 = vmatpush2.msra.mxu0 0.0
    %4978 = vmatprep.subr.mxu0 0.0
    %4979 = vmatpush2.msra.mxu0 0.0
    %4980 = vmatprep.subr.mxu0 0.0
    %4981 = vmatpush2.msra.mxu0 0.0
    %4982 = vmatprep.subr.mxu0 0.0
    %4983 = vmatpush2.msra.mxu0 0.0
    %4984 = vmatprep.subr.mxu0 0.0
    %4985 = vmatpush2.msra.mxu0 0.0
    %4986 = vmatprep.subr.mxu0 0.0
    %4987 = vmatpush2.msra.mxu0 0.0
    %4988 = vmatprep.subr.mxu0 0.0
    %4989 = vmatpush2.msra.mxu0 0.0
    %4990 = vmatprep.mubr.f32.mxu0 0.0
    %v4991 = vand.u32 %v4644, 4294901760
    %v4992 = vsub.f32 %v4644, %v4991
    %v4993 = vand.u32 %v4992, 4294901760
    %4994 = vmatmul.mubr.f32.gmra.mxu0 %v4993
    %v4995 = vpop.f32.mrf.mxu0
    %v4996 = vadd.f32 %v4912, %v4995
    %v4997 = vpop.f32.mrf.mxu0
    %4998 = vmatprep.mubr.f32.mxu0 0.0
    %v4999 = vand.u32 %v4647, 4294901760
    %v5000 = vsub.f32 %v4647, %v4999
    %v5001 = vand.u32 %v5000, 4294901760
    %5002 = vmatmul.mubr.f32.gmra.mxu0 %v5001
    %v5003 = vpop.f32.mrf.mxu0
    %v5004 = vadd.f32 %v4919, %v5003
    %v5005 = vpop.f32.mrf.mxu0
    %5006 = vdwg.mxu0
    %5007 = vmatprep.subr.mxu0 0.0
    %5008 = vmatpush1.msra.mxu0 0.0
    %5009 = vmatprep.subr.mxu0 0.0
    %5010 = vmatpush1.msra.mxu0 0.0
    %5011 = vmatprep.subr.mxu0 0.0
    %5012 = vmatpush1.msra.mxu0 0.0
    %5013 = vmatprep.subr.mxu0 0.0
    %5014 = vmatpush1.msra.mxu0 0.0
    %5015 = vmatprep.subr.mxu0 0.0
    %5016 = vmatpush1.msra.mxu0 0.0
    %5017 = vmatprep.subr.mxu0 0.0
    %5018 = vmatpush1.msra.mxu0 0.0
    %5019 = vmatprep.subr.mxu0 0.0
    %5020 = vmatpush1.msra.mxu0 0.0
    %5021 = vmatprep.subr.mxu0 0.0
    %5022 = vmatpush1.msra.mxu0 0.0
    %5023 = vmatprep.subr.mxu0 0.0
    %5024 = vmatpush1.msra.mxu0 0.0
    %5025 = vmatprep.subr.mxu0 0.0
    %5026 = vmatpush1.msra.mxu0 0.0
    %5027 = vmatprep.subr.mxu0 0.0
    %5028 = vmatpush1.msra.mxu0 0.0
    %5029 = vmatprep.subr.mxu0 0.0
    %5030 = vmatpush1.msra.mxu0 0.0
    %5031 = vmatprep.subr.mxu0 0.0
    %v5032 = vand.u32 %v4635, 4294901760
    %v5033 = vsub.f32 %v4635, %v5032
    %v5034 = vand.u32 %v5033, 4294901760
    %5035 = vmatpush1.msra.mxu0 %v5034
    %5036 = vmatprep.subr.mxu0 0.0
    %v5037 = vand.u32 %v4634, 4294901760
    %v5038 = vsub.f32 %v4634, %v5037
    %v5039 = vand.u32 %v5038, 4294901760
    %5040 = vmatpush1.msra.mxu0 %v5039
    %5041 = vmatprep.subr.mxu0 0.0
    %v5042 = vand.u32 %v4633, 4294901760
    %v5043 = vsub.f32 %v4633, %v5042
    %v5044 = vand.u32 %v5043, 4294901760
    %5045 = vmatpush1.msra.mxu0 %v5044
    %5046 = vmatprep.subr.mxu0 0.0
    %v5047 = vand.u32 %v4632, 4294901760
    %v5048 = vsub.f32 %v4632, %v5047
    %v5049 = vand.u32 %v5048, 4294901760
    %5050 = vmatpush1.msra.mxu0 %v5049
    %5051 = vmatprep.subr.mxu0 0.0
    %5052 = vmatpush2.msra.mxu0 0.0
    %5053 = vmatprep.subr.mxu0 0.0
    %5054 = vmatpush2.msra.mxu0 0.0
    %5055 = vmatprep.subr.mxu0 0.0
    %5056 = vmatpush2.msra.mxu0 0.0
    %5057 = vmatprep.subr.mxu0 0.0
    %5058 = vmatpush2.msra.mxu0 0.0
    %5059 = vmatprep.subr.mxu0 0.0
    %5060 = vmatpush2.msra.mxu0 0.0
    %5061 = vmatprep.subr.mxu0 0.0
    %5062 = vmatpush2.msra.mxu0 0.0
    %5063 = vmatprep.subr.mxu0 0.0
    %5064 = vmatpush2.msra.mxu0 0.0
    %5065 = vmatprep.subr.mxu0 0.0
    %5066 = vmatpush2.msra.mxu0 0.0
    %5067 = vmatprep.subr.mxu0 0.0
    %5068 = vmatpush2.msra.mxu0 0.0
    %5069 = vmatprep.subr.mxu0 0.0
    %5070 = vmatpush2.msra.mxu0 0.0
    %5071 = vmatprep.subr.mxu0 0.0
    %5072 = vmatpush2.msra.mxu0 0.0
    %5073 = vmatprep.subr.mxu0 0.0
    %5074 = vmatpush2.msra.mxu0 0.0
    %5075 = vmatprep.subr.mxu0 0.0
    %5076 = vmatpush2.msra.mxu0 0.0
    %5077 = vmatprep.subr.mxu0 0.0
    %5078 = vmatpush2.msra.mxu0 0.0
    %5079 = vmatprep.subr.mxu0 0.0
    %5080 = vmatpush2.msra.mxu0 0.0
    %5081 = vmatprep.subr.mxu0 0.0
    %5082 = vmatpush2.msra.mxu0 0.0
    %5083 = vmatprep.mubr.f32.mxu0 0.0
    %v5084 = vand.u32 %v4644, 4294901760
    %5085 = vmatmul.mubr.f32.gmra.mxu0 %v5084
    %v5086 = vpop.f32.mrf.mxu0
    %v5087 = vadd.f32 %v4996, %v5086
    %v5088 = vpop.f32.mrf.mxu0
    %5089 = vmatprep.mubr.f32.mxu0 0.0
    %v5090 = vand.u32 %v4647, 4294901760
    %5091 = vmatmul.mubr.f32.gmra.mxu0 %v5090
    %v5092 = vpop.f32.mrf.mxu0
    %v5093 = vadd.f32 %v5004, %v5092
    %v5094 = vpop.f32.mrf.mxu0
    %5095 = vdwg.mxu0
    %5096 = vmatprep.subr.mxu0 0.0
    %5097 = vmatpush1.msra.mxu0 0.0
    %5098 = vmatprep.subr.mxu0 0.0
    %5099 = vmatpush1.msra.mxu0 0.0
    %5100 = vmatprep.subr.mxu0 0.0
    %5101 = vmatpush1.msra.mxu0 0.0
    %5102 = vmatprep.subr.mxu0 0.0
    %5103 = vmatpush1.msra.mxu0 0.0
    %5104 = vmatprep.subr.mxu0 0.0
    %5105 = vmatpush1.msra.mxu0 0.0
    %5106 = vmatprep.subr.mxu0 0.0
    %5107 = vmatpush1.msra.mxu0 0.0
    %5108 = vmatprep.subr.mxu0 0.0
    %5109 = vmatpush1.msra.mxu0 0.0
    %5110 = vmatprep.subr.mxu0 0.0
    %5111 = vmatpush1.msra.mxu0 0.0
    %5112 = vmatprep.subr.mxu0 0.0
    %5113 = vmatpush1.msra.mxu0 0.0
    %5114 = vmatprep.subr.mxu0 0.0
    %5115 = vmatpush1.msra.mxu0 0.0
    %5116 = vmatprep.subr.mxu0 0.0
    %5117 = vmatpush1.msra.mxu0 0.0
    %5118 = vmatprep.subr.mxu0 0.0
    %5119 = vmatpush1.msra.mxu0 0.0
    %5120 = vmatprep.subr.mxu0 0.0
    %v5121 = vand.u32 %v4635, 4294901760
    %5122 = vmatpush1.msra.mxu0 %v5121
    %5123 = vmatprep.subr.mxu0 0.0
    %v5124 = vand.u32 %v4634, 4294901760
    %5125 = vmatpush1.msra.mxu0 %v5124
    %5126 = vmatprep.subr.mxu0 0.0
    %v5127 = vand.u32 %v4633, 4294901760
    %5128 = vmatpush1.msra.mxu0 %v5127
    %5129 = vmatprep.subr.mxu0 0.0
    %v5130 = vand.u32 %v4632, 4294901760
    %5131 = vmatpush1.msra.mxu0 %v5130
    %5132 = vmatprep.subr.mxu0 0.0
    %5133 = vmatpush2.msra.mxu0 0.0
    %5134 = vmatprep.subr.mxu0 0.0
    %5135 = vmatpush2.msra.mxu0 0.0
    %5136 = vmatprep.subr.mxu0 0.0
    %5137 = vmatpush2.msra.mxu0 0.0
    %5138 = vmatprep.subr.mxu0 0.0
    %5139 = vmatpush2.msra.mxu0 0.0
    %5140 = vmatprep.subr.mxu0 0.0
    %5141 = vmatpush2.msra.mxu0 0.0
    %5142 = vmatprep.subr.mxu0 0.0
    %5143 = vmatpush2.msra.mxu0 0.0
    %5144 = vmatprep.subr.mxu0 0.0
    %5145 = vmatpush2.msra.mxu0 0.0
    %5146 = vmatprep.subr.mxu0 0.0
    %5147 = vmatpush2.msra.mxu0 0.0
    %5148 = vmatprep.subr.mxu0 0.0
    %5149 = vmatpush2.msra.mxu0 0.0
    %5150 = vmatprep.subr.mxu0 0.0
    %5151 = vmatpush2.msra.mxu0 0.0
    %5152 = vmatprep.subr.mxu0 0.0
    %5153 = vmatpush2.msra.mxu0 0.0
    %5154 = vmatprep.subr.mxu0 0.0
    %5155 = vmatpush2.msra.mxu0 0.0
    %5156 = vmatprep.subr.mxu0 0.0
    %5157 = vmatpush2.msra.mxu0 0.0
    %5158 = vmatprep.subr.mxu0 0.0
    %5159 = vmatpush2.msra.mxu0 0.0
    %5160 = vmatprep.subr.mxu0 0.0
    %5161 = vmatpush2.msra.mxu0 0.0
    %5162 = vmatprep.subr.mxu0 0.0
    %5163 = vmatpush2.msra.mxu0 0.0
    %5164 = vmatprep.mubr.f32.mxu0 0.0
    %v5165 = vand.u32 %v4644, 4294901760
    %5166 = vmatmul.mubr.f32.gmra.mxu0 %v5165
    %v5167 = vpop.f32.mrf.mxu0
    %v5168 = vadd.f32 %v5087, %v5167
    %v5169 = vpop.f32.mrf.mxu0
    %5170 = vmatprep.mubr.f32.mxu0 0.0
    %v5171 = vand.u32 %v4647, 4294901760
    %5172 = vmatmul.mubr.f32.gmra.mxu0 %v5171
    %v5173 = vpop.f32.mrf.mxu0
    %v5174 = vadd.f32 %v5093, %v5173
    %v5175 = vpop.f32.mrf.mxu0
    %5176 = vdwg.mxu0
    %v5177 = vtanh.pop %v5168
    %v5178 = vtanh.pop %v5174
    %5179 = vst [vmem:[#allocation4] sm:$0xff] %v5177
    %5180 = vst [vmem:[#allocation4 + $0x8] sm:$0xff] %v5178
    // Predicated region
    $region41: #{tpu_custom_call.1} parent=1 // pred_check
      _
    $region42: #{tpu_custom_call.1} parent=1 // pred_check_branch
      %5182 = sbr.rel (0) target = $region44
    $region43: #{tpu_custom_call.1} parent=1 // pred_region
      %s5184 = ssub.s32 256, 256
      %5185 = vsyncadd [#allocation5], %s5184
      %s5186 = sshll.u32 [#allocation4], 4
      %s5187 = int_to_ptr.vmem [resolvable:$true] %s5186
      %5192 = dma.vmem_to_hbm [thread:$0]  %s5187, 256, %s8, [#allocation5], 128, 128, 8
    $region44: #{tpu_custom_call.1} parent=1 // pred_fallthru
      _
    // Predicated region
    $region45: #{tpu_custom_call.1} parent=1 // pred_check
      _
    $region46: #{tpu_custom_call.1} parent=1 // pred_check_branch
      %5194 = sbr.rel (0) target = $region48
    $region47: #{tpu_custom_call.1} parent=1 // pred_region
      %5195 = dma.done [#allocation5], 256
    $region48: #{tpu_custom_call.1} parent=1 // pred_fallthru
      _
    %5196 = vsyncpa [#allocation5], 1

</llo_original>
